<compile_context>
chip_gen: v6e
topology: v6e:2x2x1
jax: 0.10.0
libtpu: 0.0.40
codegen_flags: <defaults>
</compile_context>

<pallas_src>
import functools

import numpy as np
import jax
import jax.numpy as jnp
from jax.experimental import pallas as pl
from jax.experimental.pallas import tpu as pltpu


# ----------------------------------------------------------------------------
# In-kernel helpers
# ----------------------------------------------------------------------------
def _erf_approx(x):
    # Abramowitz & Stegun 7.1.26 rational approximation, |error| < 1.5e-7.
    a1, a2, a3, a4, a5 = 0.254829592, -0.284496736, 1.421413741, -1.453152027, 1.061405429
    p = 0.3275911
    sgn = jnp.where(x >= 0.0, 1.0, -1.0)
    ax = jnp.abs(x)
    t = 1.0 / (1.0 + p * ax)
    poly = ((((a5 * t + a4) * t + a3) * t + a2) * t + a1) * t
    return sgn * (1.0 - poly * jnp.exp(-ax * ax))


def _im2col_conv3x3(get_tap, w_ref, b_ref, H, W):
    """3x3 conv (padding=1) as ONE im2col matmul on the MXU.

    get_tap(dh, dw) -> the (H, W, Cin) shifted window of the zero-padded input.
    w_ref: (9*Cin, Cout) bf16 (BN already folded), b_ref: (1, Cout) f32 (folded bias).
    Returns (H*W, Cout) f32.
    """
    taps = []
    for dh in range(3):
        for dw in range(3):
            t = get_tap(dh, dw)
            taps.append(t.reshape(H * W, t.shape[-1]))
    patches = jnp.concatenate(taps, axis=-1).astype(jnp.bfloat16)        # (H*W, 9*Cin)
    acc = jnp.dot(patches, w_ref[...], preferred_element_type=jnp.float32)
    return acc + b_ref[0]


def _attention_tail(x, attn_refs, num_heads):
    """x + MHA(x,x,x); x + FF(LN(x)) with exact-erf GELU.  x: (S, C) f32."""
    (wqkv_ref, bqkv_ref, wo_ref, bo_ref, g_ln_ref, b_ln_ref,
     wf1_ref, bf1_ref, wf2_ref, bf2_ref) = attn_refs
    S, C = x.shape
    D = C // num_heads
    scale = 1.0 / float(D) ** 0.5

    # ---- multi-head self attention (head-batched, bf16 MXU operands) ----
    qkv = jnp.dot(x.astype(jnp.bfloat16), wqkv_ref[...],
                  preferred_element_type=jnp.float32) + bqkv_ref[0]      # (S, 3C)
    q = qkv[:, 0 * C:1 * C] * scale
    k = qkv[:, 1 * C:2 * C]
    v = qkv[:, 2 * C:3 * C]
    qh = jnp.stack([q[:, h * D:(h + 1) * D] for h in range(num_heads)], axis=0).astype(jnp.bfloat16)
    kh = jnp.stack([k[:, h * D:(h + 1) * D] for h in range(num_heads)], axis=0).astype(jnp.bfloat16)
    vh = jnp.stack([v[:, h * D:(h + 1) * D] for h in range(num_heads)], axis=0).astype(jnp.bfloat16)

    scores = jnp.einsum("hqd,hkd->hqk", qh, kh,
                        preferred_element_type=jnp.float32)              # (heads, S, S)
    scores = scores - jnp.max(scores, axis=-1, keepdims=True)
    e = jnp.exp(scores)
    probs = e * pl.reciprocal(jnp.sum(e, axis=-1, keepdims=True), approx=True)
    oh = jnp.einsum("hqk,hkd->hqd", probs.astype(jnp.bfloat16), vh,
                    preferred_element_type=jnp.float32)                  # (heads, S, D)

    # One (S, C) @ (C, C) output projection on the concatenated heads.
    attn = jnp.concatenate([oh[h] for h in range(num_heads)], axis=-1).astype(jnp.bfloat16)
    x = x + jnp.dot(attn, wo_ref[...], preferred_element_type=jnp.float32) + bo_ref[0]

    # ---- ff_self: LayerNorm -> Linear -> GELU(exact) -> Linear, residual ----
    mu = jnp.mean(x, axis=-1, keepdims=True)
    var = jnp.mean((x - mu) ** 2, axis=-1, keepdims=True)
    h_ln = (x - mu) * jax.lax.rsqrt(var + 1e-5) * g_ln_ref[0] + b_ln_ref[0]
    h1 = jnp.dot(h_ln.astype(jnp.bfloat16), wf1_ref[...],
                 preferred_element_type=jnp.float32) + bf1_ref[0]
    h1 = 0.5 * h1 * (1.0 + _erf_approx(h1 * 0.7071067811865476))
    h2 = jnp.dot(h1.astype(jnp.bfloat16), wf2_ref[...],
                 preferred_element_type=jnp.float32) + bf2_ref[0]
    return x + h2


# ----------------------------------------------------------------------------
# Fused kernel: one batch element per grid step ("parallel" -> megacore on v7x)
# ----------------------------------------------------------------------------
def _fused_kernel(xpad_ref, w1_ref, b1_ref, w2_ref, b2_ref, *rest,
                  num_heads, use_attention, use_downsample):
    idx = 0
    if use_downsample:
        wd_ref, bd_ref = rest[idx], rest[idx + 1]
        idx += 2
    if use_attention:
        attn_refs = rest[idx:idx + 10]
        idx += 10
    out_ref, pad1_ref = rest[idx], rest[idx + 1]

    Hp, Wp, Cin = xpad_ref.shape[1], xpad_ref.shape[2], xpad_ref.shape[3]
    H, W = Hp - 2, Wp - 2
    Cout = out_ref.shape[1]

    # ---- conv1 (BN1 folded into w1/b1) + ReLU ----
    out1 = jnp.maximum(
        _im2col_conv3x3(lambda dh, dw: xpad_ref[0, dh:dh + H, dw:dw + W, :],
                        w1_ref, b1_ref, H, W),
        0.0)                                                             # (H*W, Cout) f32

    # ---- conv2 halo: zero-padded copy of out1 in VMEM scratch ----
    # NOTE: re-zeroed every grid step on purpose — the batch axis is "parallel"
    # (megacore sharding), so a zero-once-at-program_id==0 init would leave the other
    # core's private scratch border uninitialized.
    pad1_ref[...] = jnp.zeros_like(pad1_ref)
    pad1_ref[1:H + 1, 1:W + 1, :] = out1.reshape(H, W, Cout)
    out2 = _im2col_conv3x3(lambda dh, dw: pad1_ref[dh:dh + H, dw:dw + W, :],
                           w2_ref, b2_ref, H, W)                         # BN2 folded, no ReLU yet

    # ---- residual: 1x1 downsample conv (Cin != Cout) or identity (Cin == Cout) ----
    x_c = xpad_ref[0, 1:H + 1, 1:W + 1, :].reshape(H * W, Cin)
    if use_downsample:
        res = jnp.dot(x_c.astype(jnp.bfloat16), wd_ref[...],
                      preferred_element_type=jnp.float32) + bd_ref[0]
    else:
        res = x_c                                                        # identity residual

    out = jnp.maximum(out2 + res, 0.0)                                   # (H*W, Cout) f32

    # ---- optional AttentionBlock, fused (no HBM round-trip of the activation) ----
    if use_attention:
        out = _attention_tail(out, attn_refs, num_heads)

    # Lane-dense store: one in-kernel transpose (H*W, Cout) -> (Cout, H*W) so the output
    # store uses full-width (H*W >= 128) lanes instead of Cout(=16)/128-lane masked stores,
    # and the wrapper returns NCHW with a plain reshape (no XLA transpose).
    out_ref[0] = out.T.astype(out_ref.dtype)


# ----------------------------------------------------------------------------
# Wrapper: layout glue, BN folding, bf16 staging, pallas_call plumbing
# ----------------------------------------------------------------------------
@functools.partial(jax.jit, static_argnames=("use_attention", "num_heads"))
def residual_block_2d(x_nchw, params, *, use_attention=False, num_heads=8):
    N, Cin, H, W = x_nchw.shape
    Cout = params["w1"].shape[-1]
    use_downsample = (Cin != Cout)
    if use_attention:
        assert Cout % num_heads == 0, "channels must be divisible by num_heads"

    # Layout glue for the PyTorch NCHW contract + 1-pixel halo pad.
    x_nhwc = jnp.transpose(x_nchw, (0, 2, 3, 1)).astype(jnp.float32)
    xpad = jnp.pad(x_nhwc, ((0, 0), (1, 1), (1, 1), (0, 0)))

    # Fold inference-mode BatchNorm into the conv weights/biases, reshape the 3x3 kernels
    # into im2col (9*Cin, Cout) matrices, and stage all MXU operands as bf16.
    w1m = (params["w1"] * params["s1"][0]).reshape(9 * Cin, Cout).astype(jnp.bfloat16)
    b1f = (params["b1"] * params["s1"] + params["t1"]).astype(jnp.float32)
    w2m = (params["w2"] * params["s2"][0]).reshape(9 * Cout, Cout).astype(jnp.bfloat16)
    b2f = (params["b2"] * params["s2"] + params["t2"]).astype(jnp.float32)

    weight_args = [w1m, b1f, w2m, b2f]
    if use_downsample:
        weight_args += [params["wd"].astype(jnp.bfloat16), params["bd"].astype(jnp.float32)]
    if use_attention:
        weight_args += [
            params["wqkv"].astype(jnp.bfloat16), params["bqkv"].astype(jnp.float32),
            params["wo"].astype(jnp.bfloat16), params["bo"].astype(jnp.float32),
            params["g_ln"].astype(jnp.float32), params["b_ln"].astype(jnp.float32),
            params["wf1"].astype(jnp.bfloat16), params["bf1"].astype(jnp.float32),
            params["wf2"].astype(jnp.bfloat16), params["bf2"].astype(jnp.float32),
        ]

    def _full_spec(a):
        nd = a.ndim
        return pl.BlockSpec(a.shape, lambda n, nd=nd: (0,) * nd)

    in_specs = [pl.BlockSpec((1, H + 2, W + 2, Cin), lambda n: (n, 0, 0, 0))]
    in_specs += [_full_spec(a) for a in weight_args]

    out = pl.pallas_call(
        functools.partial(_fused_kernel, num_heads=num_heads,
                          use_attention=use_attention, use_downsample=use_downsample),
        out_shape=jax.ShapeDtypeStruct((N, Cout, H * W), jnp.float32),
        grid_spec=pltpu.PrefetchScalarGridSpec(
            num_scalar_prefetch=0,
            grid=(N,),
            in_specs=in_specs,
            out_specs=pl.BlockSpec((1, Cout, H * W), lambda n: (n, 0, 0)),
            scratch_shapes=[pltpu.VMEM((H + 2, W + 2, Cout), jnp.float32)],
        ),
        compiler_params=pltpu.CompilerParams(
            dimension_semantics=("parallel",),         # batch elems independent -> megacore
            vmem_limit_bytes=32 * 1024 * 1024,
        ),
    )(xpad, *weight_args)

    # Output is already channel-major: just reshape to NCHW (no transpose needed).
    return out.reshape(N, Cout, H, W)


# ----------------------------------------------------------------------------
# Deterministic parameter initialization (synthetic, not a checkpoint load)
# ----------------------------------------------------------------------------
def init_params(key, in_channels, out_channels, eps=1e-5):
    C = out_channels
    ks = jax.random.split(key, 26)

    def nrm(k, shape, scale=0.1):
        return scale * jax.random.normal(k, shape, jnp.float32)

    p = {}
    # conv1 / conv2 weights in HWIO layout (+ biases)
    p["w1"] = nrm(ks[0], (3, 3, in_channels, C))
    p["b1"] = nrm(ks[1], (1, C))
    p["w2"] = nrm(ks[2], (3, 3, C, C))
    p["b2"] = nrm(ks[3], (1, C))
    # BatchNorm (inference): fold (gamma, beta, running_mean, running_var) -> scale/shift
    g1 = 1.0 + 0.1 * jax.random.normal(ks[4], (1, C), jnp.float32)
    be1 = nrm(ks[5], (1, C))
    m1 = nrm(ks[6], (1, C))
    v1 = jax.random.uniform(ks[7], (1, C), jnp.float32, 0.5, 1.5)
    p["s1"] = g1 / jnp.sqrt(v1 + eps)
    p["t1"] = be1 - m1 * p["s1"]
    g2 = 1.0 + 0.1 * jax.random.normal(ks[8], (1, C), jnp.float32)
    be2 = nrm(ks[9], (1, C))
    m2 = nrm(ks[10], (1, C))
    v2 = jax.random.uniform(ks[11], (1, C), jnp.float32, 0.5, 1.5)
    p["s2"] = g2 / jnp.sqrt(v2 + eps)
    p["t2"] = be2 - m2 * p["s2"]
    # 1x1 downsample conv (only used when in_channels != out_channels)
    p["wd"] = nrm(ks[12], (in_channels, C))
    p["bd"] = nrm(ks[13], (1, C))
    # AttentionBlock: MHA in/out projections (stored pre-transposed: x @ W)
    p["wqkv"] = nrm(ks[14], (C, 3 * C))
    p["bqkv"] = nrm(ks[15], (1, 3 * C))
    p["wo"] = nrm(ks[16], (C, C))
    p["bo"] = nrm(ks[17], (1, C))
    # ff_self: LayerNorm + Linear + GELU + Linear
    p["g_ln"] = 1.0 + 0.1 * jax.random.normal(ks[18], (1, C), jnp.float32)
    p["b_ln"] = nrm(ks[19], (1, C))
    p["wf1"] = nrm(ks[20], (C, C))
    p["bf1"] = nrm(ks[21], (1, C))
    p["wf2"] = nrm(ks[22], (C, C))
    p["bf2"] = nrm(ks[23], (1, C))
    return p


# ----------------------------------------------------------------------------
# Pure-JAX f32 reference (mirrors the PyTorch forward) for correctness checking
# ----------------------------------------------------------------------------
def reference(x_nchw, p, *, use_attention=False, num_heads=8):
    N, Cin, Hh, Ww = x_nchw.shape
    Cout = p["w1"].shape[-1]
    x = jnp.transpose(x_nchw, (0, 2, 3, 1)).astype(jnp.float32)   # NHWC

    def conv3x3(x, w, b):
        y = jax.lax.conv_general_dilated(x, w, (1, 1), "SAME",
                                         dimension_numbers=("NHWC", "HWIO", "NHWC"))
        return y + b

    out = jnp.maximum(conv3x3(x, p["w1"], p["b1"][0]) * p["s1"][0] + p["t1"][0], 0.0)
    out = conv3x3(out, p["w2"], p["b2"][0]) * p["s2"][0] + p["t2"][0]
    if Cin != Cout:
        residual = jnp.einsum("nhwc,cd->nhwd", x, p["wd"]) + p["bd"][0]
    else:
        residual = x
    out = jnp.maximum(out + residual, 0.0)

    if use_attention:
        N, H, W, C = out.shape
        D = C // num_heads
        s = out.reshape(N, H * W, C)
        qkv = s @ p["wqkv"] + p["bqkv"][0]
        q, k, v = qkv[..., :C], qkv[..., C:2 * C], qkv[..., 2 * C:]
        qh = q.reshape(N, -1, num_heads, D).transpose(0, 2, 1, 3)
        kh = k.reshape(N, -1, num_heads, D).transpose(0, 2, 1, 3)
        vh = v.reshape(N, -1, num_heads, D).transpose(0, 2, 1, 3)
        att = jax.nn.softmax(jnp.einsum("nhqd,nhkd->nhqk", qh, kh) / jnp.sqrt(jnp.float32(D)), axis=-1)
        o = jnp.einsum("nhqk,nhkd->nhqd", att, vh).transpose(0, 2, 1, 3).reshape(N, -1, C)
        s = s + o @ p["wo"] + p["bo"][0]
        mu = s.mean(-1, keepdims=True)
        var = ((s - mu) ** 2).mean(-1, keepdims=True)
        h = (s - mu) / jnp.sqrt(var + 1e-5) * p["g_ln"][0] + p["b_ln"][0]
        h = h @ p["wf1"] + p["bf1"][0]
        h = 0.5 * h * (1.0 + jax.scipy.special.erf(h / jnp.sqrt(2.0)))     # exact GELU
        s = s + h @ p["wf2"] + p["bf2"][0]
        out = s.reshape(N, H, W, C)

    return jnp.transpose(out, (0, 3, 1, 2))


if __name__ == "__main__":
    key = jax.random.PRNGKey(0)
    kx, kp, kx2, kp2 = jax.random.split(key, 4)

    # --- Cin != Cout: downsample residual, with and without attention ---
    N, Cin, Cout, H, W = 2, 4, 16, 16, 16          # Cout divisible by num_heads=8
    x = jax.random.normal(kx, (N, Cin, H, W), jnp.float32)
    params = init_params(kp, Cin, Cout)

    out_plain = residual_block_2d(x, params, use_attention=False)
    out_attn = residual_block_2d(x, params, use_attention=True)

    # --- Cin == Cout: identity residual (downsample=None in the PyTorch module) ---
    x2 = jax.random.normal(kx2, (N, Cout, H, W), jnp.float32)
    params2 = init_params(kp2, Cout, Cout)
    out_ident = residual_block_2d(x2, params2, use_attention=False)

    jax.block_until_ready((out_plain, out_attn, out_ident))

    ref_plain = reference(x, params, use_attention=False)
    ref_attn = reference(x, params, use_attention=True)
    ref_ident = reference(x2, params2, use_attention=False)

    assert out_plain.shape == (N, Cout, H, W)
    assert out_attn.shape == (N, Cout, H, W)
    assert out_ident.shape == (N, Cout, H, W)
    # Kernel uses bf16 MXU operands (f32 accumulate) vs. the pure-f32 reference,
    # so tolerance is set for bf16-level operand rounding.
    np.testing.assert_allclose(np.asarray(out_plain), np.asarray(ref_plain), rtol=3e-2, atol=3e-2)
    np.testing.assert_allclose(np.asarray(out_attn), np.asarray(ref_attn), rtol=3e-2, atol=3e-2)
    np.testing.assert_allclose(np.asarray(out_ident), np.asarray(ref_ident), rtol=3e-2, atol=3e-2)

    print("KERNEL_OK")
</pallas_src>

<mosaic_0001>
module attributes {stable_mosaic.version = 11 : i64} {
  func.func @_fused_kernel(%arg0: i32, %arg1: memref<1x18x18x4xf32, #tpu.memory_space<vmem>>, %arg2: memref<36x16xbf16, #tpu.memory_space<vmem>>, %arg3: memref<1x16xf32, #tpu.memory_space<vmem>>, %arg4: memref<144x16xbf16, #tpu.memory_space<vmem>>, %arg5: memref<1x16xf32, #tpu.memory_space<vmem>>, %arg6: memref<4x16xbf16, #tpu.memory_space<vmem>>, %arg7: memref<1x16xf32, #tpu.memory_space<vmem>>, %arg8: memref<1x16x256xf32, #tpu.memory_space<vmem>>, %arg9: memref<18x18x16xf32, #tpu.memory_space<vmem>>) attributes {dimension_semantics = [#tpu.dimension_semantics<parallel>], iteration_bounds = array<i64: 2>, scalar_prefetch = 0 : i64, scratch_operands = 1 : i64, tpu.core_type = #tpu.core_type<tc>, window_params = [{transform_indices = @transform_0, window_bounds = array<i64: 1, 18, 18, 4>}, {pipeline_mode = #tpu.pipeline_mode<synchronous>, transform_indices = @transform_1, window_bounds = array<i64: 36, 16>}, {pipeline_mode = #tpu.pipeline_mode<synchronous>, transform_indices = @transform_2, window_bounds = array<i64: 1, 16>}, {pipeline_mode = #tpu.pipeline_mode<synchronous>, transform_indices = @transform_3, window_bounds = array<i64: 144, 16>}, {pipeline_mode = #tpu.pipeline_mode<synchronous>, transform_indices = @transform_4, window_bounds = array<i64: 1, 16>}, {pipeline_mode = #tpu.pipeline_mode<synchronous>, transform_indices = @transform_5, window_bounds = array<i64: 4, 16>}, {pipeline_mode = #tpu.pipeline_mode<synchronous>, transform_indices = @transform_6, window_bounds = array<i64: 1, 16>}, {transform_indices = @transform_7, window_bounds = array<i64: 1, 16, 256>}]} {
    %c0 = arith.constant 0 : index
    %c0_0 = arith.constant 0 : index
    %c0_1 = arith.constant 0 : index
    %c0_2 = arith.constant 0 : index
    %0 = vector.load %arg1[%c0, %c0_0, %c0_1, %c0_2] : memref<1x18x18x4xf32, #tpu.memory_space<vmem>>, vector<1x16x16x4xf32>
    %1 = vector.shape_cast %0 : vector<1x16x16x4xf32> to vector<16x16x4xf32>
    %2 = vector.shape_cast %1 : vector<16x16x4xf32> to vector<256x4xf32>
    %c0_3 = arith.constant 0 : index
    %c0_4 = arith.constant 0 : index
    %c1 = arith.constant 1 : index
    %c0_5 = arith.constant 0 : index
    %3 = vector.load %arg1[%c0_3, %c0_4, %c1, %c0_5] : memref<1x18x18x4xf32, #tpu.memory_space<vmem>>, vector<1x16x16x4xf32>
    %4 = vector.shape_cast %3 : vector<1x16x16x4xf32> to vector<16x16x4xf32>
    %5 = vector.shape_cast %4 : vector<16x16x4xf32> to vector<256x4xf32>
    %c0_6 = arith.constant 0 : index
    %c0_7 = arith.constant 0 : index
    %c2 = arith.constant 2 : index
    %c0_8 = arith.constant 0 : index
    %6 = vector.load %arg1[%c0_6, %c0_7, %c2, %c0_8] : memref<1x18x18x4xf32, #tpu.memory_space<vmem>>, vector<1x16x16x4xf32>
    %7 = vector.shape_cast %6 : vector<1x16x16x4xf32> to vector<16x16x4xf32>
    %8 = vector.shape_cast %7 : vector<16x16x4xf32> to vector<256x4xf32>
    %c0_9 = arith.constant 0 : index
    %c1_10 = arith.constant 1 : index
    %c0_11 = arith.constant 0 : index
    %c0_12 = arith.constant 0 : index
    %9 = vector.load %arg1[%c0_9, %c1_10, %c0_11, %c0_12] : memref<1x18x18x4xf32, #tpu.memory_space<vmem>>, vector<1x16x16x4xf32>
    %10 = vector.shape_cast %9 : vector<1x16x16x4xf32> to vector<16x16x4xf32>
    %11 = vector.shape_cast %10 : vector<16x16x4xf32> to vector<256x4xf32>
    %c0_13 = arith.constant 0 : index
    %c1_14 = arith.constant 1 : index
    %c1_15 = arith.constant 1 : index
    %c0_16 = arith.constant 0 : index
    %12 = vector.load %arg1[%c0_13, %c1_14, %c1_15, %c0_16] : memref<1x18x18x4xf32, #tpu.memory_space<vmem>>, vector<1x16x16x4xf32>
    %13 = vector.shape_cast %12 : vector<1x16x16x4xf32> to vector<16x16x4xf32>
    %14 = vector.shape_cast %13 : vector<16x16x4xf32> to vector<256x4xf32>
    %c0_17 = arith.constant 0 : index
    %c1_18 = arith.constant 1 : index
    %c2_19 = arith.constant 2 : index
    %c0_20 = arith.constant 0 : index
    %15 = vector.load %arg1[%c0_17, %c1_18, %c2_19, %c0_20] : memref<1x18x18x4xf32, #tpu.memory_space<vmem>>, vector<1x16x16x4xf32>
    %16 = vector.shape_cast %15 : vector<1x16x16x4xf32> to vector<16x16x4xf32>
    %17 = vector.shape_cast %16 : vector<16x16x4xf32> to vector<256x4xf32>
    %c0_21 = arith.constant 0 : index
    %c2_22 = arith.constant 2 : index
    %c0_23 = arith.constant 0 : index
    %c0_24 = arith.constant 0 : index
    %18 = vector.load %arg1[%c0_21, %c2_22, %c0_23, %c0_24] : memref<1x18x18x4xf32, #tpu.memory_space<vmem>>, vector<1x16x16x4xf32>
    %19 = vector.shape_cast %18 : vector<1x16x16x4xf32> to vector<16x16x4xf32>
    %20 = vector.shape_cast %19 : vector<16x16x4xf32> to vector<256x4xf32>
    %c0_25 = arith.constant 0 : index
    %c2_26 = arith.constant 2 : index
    %c1_27 = arith.constant 1 : index
    %c0_28 = arith.constant 0 : index
    %21 = vector.load %arg1[%c0_25, %c2_26, %c1_27, %c0_28] : memref<1x18x18x4xf32, #tpu.memory_space<vmem>>, vector<1x16x16x4xf32>
    %22 = vector.shape_cast %21 : vector<1x16x16x4xf32> to vector<16x16x4xf32>
    %23 = vector.shape_cast %22 : vector<16x16x4xf32> to vector<256x4xf32>
    %c0_29 = arith.constant 0 : index
    %c2_30 = arith.constant 2 : index
    %c2_31 = arith.constant 2 : index
    %c0_32 = arith.constant 0 : index
    %24 = vector.load %arg1[%c0_29, %c2_30, %c2_31, %c0_32] : memref<1x18x18x4xf32, #tpu.memory_space<vmem>>, vector<1x16x16x4xf32>
    %25 = vector.shape_cast %24 : vector<1x16x16x4xf32> to vector<16x16x4xf32>
    %26 = vector.shape_cast %25 : vector<16x16x4xf32> to vector<256x4xf32>
    %27 = tpu.concatenate %2, %5, %8, %11, %14, %17, %20, %23, %26 in 1 : vector<256x4xf32>, vector<256x4xf32>, vector<256x4xf32>, vector<256x4xf32>, vector<256x4xf32>, vector<256x4xf32>, vector<256x4xf32>, vector<256x4xf32>, vector<256x4xf32> -> vector<256x36xf32>
    %28 = arith.truncf %27 : vector<256x36xf32> to vector<256x36xbf16>
    %c0_33 = arith.constant 0 : index
    %c0_34 = arith.constant 0 : index
    %29 = vector.load %arg2[%c0_33, %c0_34] : memref<36x16xbf16, #tpu.memory_space<vmem>>, vector<36x16xbf16>
    %cst = arith.constant dense<0.000000e+00> : vector<256x16xf32>
    %30 = tpu.matmul %28, %29, %cst {dimension_numbers = #tpu.dot_dimension_numbers<[1], [0], [0], [1], [0, 0, 1, 1], [], []>} : vector<256x36xbf16>, vector<36x16xbf16>, vector<256x16xf32> -> vector<256x16xf32>
    %c0_35 = arith.constant 0 : index
    %c0_36 = arith.constant 0 : index
    %31 = vector.load %arg3[%c0_35, %c0_36] : memref<1x16xf32, #tpu.memory_space<vmem>>, vector<1x16xf32>
    %32 = vector.shape_cast %31 : vector<1x16xf32> to vector<16xf32>
    %33 = vector.shape_cast %32 : vector<16xf32> to vector<1x16xf32>
    %34 = vector.broadcast %33 : vector<1x16xf32> to vector<256x16xf32>
    %35 = arith.addf %30, %34 : vector<256x16xf32>
    %cst_37 = arith.constant 0.000000e+00 : f32
    %36 = vector.broadcast %cst_37 : f32 to vector<256x16xf32>
    %37 = arith.maximumf %35, %36 : vector<256x16xf32>
    %cst_38 = arith.constant 0.000000e+00 : f32
    %38 = vector.broadcast %cst_38 : f32 to vector<18x18x16xf32>
    %c0_39 = arith.constant 0 : index
    %c0_40 = arith.constant 0 : index
    %c0_41 = arith.constant 0 : index
    %39 = vector.load %arg9[%c0_39, %c0_40, %c0_41] : memref<18x18x16xf32, #tpu.memory_space<vmem>>, vector<18x18x16xf32>
    tpu.vector_store %arg9[%c0_39, %c0_40, %c0_41], %38 {strides = array<i32>} : memref<18x18x16xf32, #tpu.memory_space<vmem>>, vector<18x18x16xf32>,
    %40 = vector.shape_cast %37 : vector<256x16xf32> to vector<16x16x16xf32>
    %c1_42 = arith.constant 1 : index
    %c1_43 = arith.constant 1 : index
    %c0_44 = arith.constant 0 : index
    %41 = vector.load %arg9[%c1_42, %c1_43, %c0_44] : memref<18x18x16xf32, #tpu.memory_space<vmem>>, vector<16x16x16xf32>
    tpu.vector_store %arg9[%c1_42, %c1_43, %c0_44], %40 {strides = array<i32>} : memref<18x18x16xf32, #tpu.memory_space<vmem>>, vector<16x16x16xf32>,
    %c0_45 = arith.constant 0 : index
    %c0_46 = arith.constant 0 : index
    %c0_47 = arith.constant 0 : index
    %42 = vector.load %arg9[%c0_45, %c0_46, %c0_47] : memref<18x18x16xf32, #tpu.memory_space<vmem>>, vector<16x16x16xf32>
    %43 = vector.shape_cast %42 : vector<16x16x16xf32> to vector<256x16xf32>
    %c0_48 = arith.constant 0 : index
    %c1_49 = arith.constant 1 : index
    %c0_50 = arith.constant 0 : index
    %44 = vector.load %arg9[%c0_48, %c1_49, %c0_50] : memref<18x18x16xf32, #tpu.memory_space<vmem>>, vector<16x16x16xf32>
    %45 = vector.shape_cast %44 : vector<16x16x16xf32> to vector<256x16xf32>
    %c0_51 = arith.constant 0 : index
    %c2_52 = arith.constant 2 : index
    %c0_53 = arith.constant 0 : index
    %46 = vector.load %arg9[%c0_51, %c2_52, %c0_53] : memref<18x18x16xf32, #tpu.memory_space<vmem>>, vector<16x16x16xf32>
    %47 = vector.shape_cast %46 : vector<16x16x16xf32> to vector<256x16xf32>
    %c1_54 = arith.constant 1 : index
    %c0_55 = arith.constant 0 : index
    %c0_56 = arith.constant 0 : index
    %48 = vector.load %arg9[%c1_54, %c0_55, %c0_56] : memref<18x18x16xf32, #tpu.memory_space<vmem>>, vector<16x16x16xf32>
    %49 = vector.shape_cast %48 : vector<16x16x16xf32> to vector<256x16xf32>
    %c1_57 = arith.constant 1 : index
    %c1_58 = arith.constant 1 : index
    %c0_59 = arith.constant 0 : index
    %50 = vector.load %arg9[%c1_57, %c1_58, %c0_59] : memref<18x18x16xf32, #tpu.memory_space<vmem>>, vector<16x16x16xf32>
    %51 = vector.shape_cast %50 : vector<16x16x16xf32> to vector<256x16xf32>
    %c1_60 = arith.constant 1 : index
    %c2_61 = arith.constant 2 : index
    %c0_62 = arith.constant 0 : index
    %52 = vector.load %arg9[%c1_60, %c2_61, %c0_62] : memref<18x18x16xf32, #tpu.memory_space<vmem>>, vector<16x16x16xf32>
    %53 = vector.shape_cast %52 : vector<16x16x16xf32> to vector<256x16xf32>
    %c2_63 = arith.constant 2 : index
    %c0_64 = arith.constant 0 : index
    %c0_65 = arith.constant 0 : index
    %54 = vector.load %arg9[%c2_63, %c0_64, %c0_65] : memref<18x18x16xf32, #tpu.memory_space<vmem>>, vector<16x16x16xf32>
    %55 = vector.shape_cast %54 : vector<16x16x16xf32> to vector<256x16xf32>
    %c2_66 = arith.constant 2 : index
    %c1_67 = arith.constant 1 : index
    %c0_68 = arith.constant 0 : index
    %56 = vector.load %arg9[%c2_66, %c1_67, %c0_68] : memref<18x18x16xf32, #tpu.memory_space<vmem>>, vector<16x16x16xf32>
    %57 = vector.shape_cast %56 : vector<16x16x16xf32> to vector<256x16xf32>
    %c2_69 = arith.constant 2 : index
    %c2_70 = arith.constant 2 : index
    %c0_71 = arith.constant 0 : index
    %58 = vector.load %arg9[%c2_69, %c2_70, %c0_71] : memref<18x18x16xf32, #tpu.memory_space<vmem>>, vector<16x16x16xf32>
    %59 = vector.shape_cast %58 : vector<16x16x16xf32> to vector<256x16xf32>
    %60 = tpu.concatenate %43, %45, %47, %49, %51, %53, %55, %57, %59 in 1 : vector<256x16xf32>, vector<256x16xf32>, vector<256x16xf32>, vector<256x16xf32>, vector<256x16xf32>, vector<256x16xf32>, vector<256x16xf32>, vector<256x16xf32>, vector<256x16xf32> -> vector<256x144xf32>
    %61 = arith.truncf %60 : vector<256x144xf32> to vector<256x144xbf16>
    %c0_72 = arith.constant 0 : index
    %c0_73 = arith.constant 0 : index
    %62 = vector.load %arg4[%c0_72, %c0_73] : memref<144x16xbf16, #tpu.memory_space<vmem>>, vector<144x16xbf16>
    %cst_74 = arith.constant dense<0.000000e+00> : vector<256x16xf32>
    %63 = tpu.matmul %61, %62, %cst_74 {dimension_numbers = #tpu.dot_dimension_numbers<[1], [0], [0], [1], [0, 0, 1, 1], [], []>} : vector<256x144xbf16>, vector<144x16xbf16>, vector<256x16xf32> -> vector<256x16xf32>
    %c0_75 = arith.constant 0 : index
    %c0_76 = arith.constant 0 : index
    %64 = vector.load %arg5[%c0_75, %c0_76] : memref<1x16xf32, #tpu.memory_space<vmem>>, vector<1x16xf32>
    %65 = vector.shape_cast %64 : vector<1x16xf32> to vector<16xf32>
    %66 = vector.shape_cast %65 : vector<16xf32> to vector<1x16xf32>
    %67 = vector.broadcast %66 : vector<1x16xf32> to vector<256x16xf32>
    %68 = arith.addf %63, %67 : vector<256x16xf32>
    %c0_77 = arith.constant 0 : index
    %c1_78 = arith.constant 1 : index
    %c1_79 = arith.constant 1 : index
    %c0_80 = arith.constant 0 : index
    %69 = vector.load %arg1[%c0_77, %c1_78, %c1_79, %c0_80] : memref<1x18x18x4xf32, #tpu.memory_space<vmem>>, vector<1x16x16x4xf32>
    %70 = vector.shape_cast %69 : vector<1x16x16x4xf32> to vector<16x16x4xf32>
    %71 = vector.shape_cast %70 : vector<16x16x4xf32> to vector<256x4xf32>
    %72 = arith.truncf %71 : vector<256x4xf32> to vector<256x4xbf16>
    %c0_81 = arith.constant 0 : index
    %c0_82 = arith.constant 0 : index
    %73 = vector.load %arg6[%c0_81, %c0_82] : memref<4x16xbf16, #tpu.memory_space<vmem>>, vector<4x16xbf16>
    %cst_83 = arith.constant dense<0.000000e+00> : vector<256x16xf32>
    %74 = tpu.matmul %72, %73, %cst_83 {dimension_numbers = #tpu.dot_dimension_numbers<[1], [0], [0], [1], [0, 0, 1, 1], [], []>} : vector<256x4xbf16>, vector<4x16xbf16>, vector<256x16xf32> -> vector<256x16xf32>
    %c0_84 = arith.constant 0 : index
    %c0_85 = arith.constant 0 : index
    %75 = vector.load %arg7[%c0_84, %c0_85] : memref<1x16xf32, #tpu.memory_space<vmem>>, vector<1x16xf32>
    %76 = vector.shape_cast %75 : vector<1x16xf32> to vector<16xf32>
    %77 = vector.shape_cast %76 : vector<16xf32> to vector<1x16xf32>
    %78 = vector.broadcast %77 : vector<1x16xf32> to vector<256x16xf32>
    %79 = arith.addf %74, %78 : vector<256x16xf32>
    %80 = arith.addf %68, %79 : vector<256x16xf32>
    %cst_86 = arith.constant 0.000000e+00 : f32
    %81 = vector.broadcast %cst_86 : f32 to vector<256x16xf32>
    %82 = arith.maximumf %80, %81 : vector<256x16xf32>
    %83 = tpu.transpose %82, [1, 0] : vector<256x16xf32> -> vector<16x256xf32>
    %c0_87 = arith.constant 0 : index
    %c0_88 = arith.constant 0 : index
    %c0_89 = arith.constant 0 : index
    %84 = vector.load %arg8[%c0_87, %c0_88, %c0_89] : memref<1x16x256xf32, #tpu.memory_space<vmem>>, vector<1x16x256xf32>
    %85 = vector.shape_cast %84 : vector<1x16x256xf32> to vector<16x256xf32>
    %86 = vector.shape_cast %83 : vector<16x256xf32> to vector<1x16x256xf32>
    tpu.vector_store %arg8[%c0_87, %c0_88, %c0_89], %86 {strides = array<i32>} : memref<1x16x256xf32, #tpu.memory_space<vmem>>, vector<1x16x256xf32>,
    return
  }
  func.func @transform_0(%arg0: i32) -> (i32, i32, i32, i32) {
    %c0_i32 = arith.constant 0 : i32
    %c0_i32_0 = arith.constant 0 : i32
    %c0_i32_1 = arith.constant 0 : i32
    %c0_i32_2 = arith.constant 0 : i32
    return %arg0, %c0_i32, %c0_i32_0, %c0_i32_1 : i32, i32, i32, i32
  }
  func.func @transform_1(%arg0: i32) -> (i32, i32) {
    %c0_i32 = arith.constant 0 : i32
    %c0_i32_0 = arith.constant 0 : i32
    %c0_i32_1 = arith.constant 0 : i32
    return %c0_i32, %c0_i32_0 : i32, i32
  }
  func.func @transform_2(%arg0: i32) -> (i32, i32) {
    %c0_i32 = arith.constant 0 : i32
    %c0_i32_0 = arith.constant 0 : i32
    %c0_i32_1 = arith.constant 0 : i32
    return %c0_i32, %c0_i32_0 : i32, i32
  }
  func.func @transform_3(%arg0: i32) -> (i32, i32) {
    %c0_i32 = arith.constant 0 : i32
    %c0_i32_0 = arith.constant 0 : i32
    %c0_i32_1 = arith.constant 0 : i32
    return %c0_i32, %c0_i32_0 : i32, i32
  }
  func.func @transform_4(%arg0: i32) -> (i32, i32) {
    %c0_i32 = arith.constant 0 : i32
    %c0_i32_0 = arith.constant 0 : i32
    %c0_i32_1 = arith.constant 0 : i32
    return %c0_i32, %c0_i32_0 : i32, i32
  }
  func.func @transform_5(%arg0: i32) -> (i32, i32) {
    %c0_i32 = arith.constant 0 : i32
    %c0_i32_0 = arith.constant 0 : i32
    %c0_i32_1 = arith.constant 0 : i32
    return %c0_i32, %c0_i32_0 : i32, i32
  }
  func.func @transform_6(%arg0: i32) -> (i32, i32) {
    %c0_i32 = arith.constant 0 : i32
    %c0_i32_0 = arith.constant 0 : i32
    %c0_i32_1 = arith.constant 0 : i32
    return %c0_i32, %c0_i32_0 : i32, i32
  }
  func.func @transform_7(%arg0: i32) -> (i32, i32, i32) {
    %c0_i32 = arith.constant 0 : i32
    %c0_i32_0 = arith.constant 0 : i32
    %c0_i32_1 = arith.constant 0 : i32
    return %arg0, %c0_i32, %c0_i32_0 : i32, i32, i32
  }
}

</mosaic_0001>

<llo_original>
// kernel: residual_block_2d.1
$region0: #{residual_block_2d.1}
  #allocation0 [shape = 'u32[]', space=smem, size = 0x4, offset = 0x4, fixed_abs, tag = 'smem constant byte address 0x4 - core index']
  #allocation1 [shape = 'u32[144,128]{1,0:T(1,128)}', space=vmem, size = 0x12000, scoped, tag = 'internal scratch']
  #allocation2 [shape = 'f32[18,18,16]{2,1,0:T(8,128)}', space=vmem, size = 0x36000, scoped, tag = 'scratch operand']
  %s0 = inlined_call_operand.vmem [shape: f32[2,18,18,4], index: 0, kind: input, shape index: {}]
  %s1 = inlined_call_operand.vmem [shape: bf16[36,16], index: 1, kind: input, shape index: {}]
  %s2 = inlined_call_operand.vmem [shape: f32[1,16], index: 2, kind: input, shape index: {}]
  %s3 = inlined_call_operand.vmem [shape: bf16[144,16], index: 3, kind: input, shape index: {}]
  %s4 = inlined_call_operand.vmem [shape: f32[1,16], index: 4, kind: input, shape index: {}]
  %s5 = inlined_call_operand.vmem [shape: bf16[4,16], index: 5, kind: input, shape index: {}]
  %s6 = inlined_call_operand.vmem [shape: f32[1,16], index: 6, kind: input, shape index: {}]
  %s7 = inlined_call_operand.vmem [shape: f32[2,16,256], index: 7, kind: output, shape index: {}]
  %s8 = sld [smem:[#allocation0]]
  $region61: #{residual_block_2d.1} parent=0
    _
  %s10 = ssub.s32 1, %s8
  %s11 = scalar_select 0, %s10, %s8
  loop: start=0, step=1, limit=4
  $region2: #{residual_block_2d.1} parent=0 // loop_pre_header
    _
  $region3: #{residual_block_2d.1} parent=0 // loop_header
    %s13 = sphi 0, %s17
    %p14 = scmp.ge.s32.totalorder %s13, 4
    %s23 = sphi 0, %s25
    %s26 = sphi 0, %s23
    %s27 = sphi 0, %s26
    %s43 = sphi 0, %s27
    %s47 = sphi 0, %s47
    %s49 = sphi 0, %s47
    %s50 = sphi 0, %s49
    %s64 = sphi 0, %s50
    %s68 = sphi 0, %s68
    %s70 = sphi 0, %s68
    %s71 = sphi 0, %s70
    %s85 = sphi 0, %s71
    %s89 = sphi 0, %s89
    %s91 = sphi 0, %s89
    %s92 = sphi 0, %s91
    %s106 = sphi 0, %s92
    %s110 = sphi 0, %s110
    %s112 = sphi 0, %s110
    %s113 = sphi 0, %s112
    %s127 = sphi 0, %s113
    %s131 = sphi 0, %s131
    %s133 = sphi 0, %s131
    %s134 = sphi 0, %s133
    %s148 = sphi 0, %s134
    %s152 = sphi 0, %s152
    %s154 = sphi 0, %s152
    %s155 = sphi 0, %s154
    %s169 = sphi 0, %s155
    %s175 = sphi 0, %s177
    %s178 = sphi 0, %s175
    %s179 = sphi 0, %s178
    %s195 = sphi 0, %s179
  $region4: #{residual_block_2d.1} parent=0 // loop_header_branch
    %16 = sbr.rel (%p14) target = $region8
  $region5: #{residual_block_2d.1} parent=0 // loop_body
    %s18 = ssub.s32 %s13, 1
    %s19 = ssub.s32 %s13, 2
    %s20 = sadd.s32 %s13, 1
    %s21 = ssub.s32 %s13, %s20
    %p22 = scmp.eq.s32.totalorder %s21, 0
    %s24 = sadd.s32 %s23, 1
    %s25 = scalar_select %p22, %s23, %s24
    %p28 = pneg %p22
    %p29 = scmp.eq.s32.totalorder %s13, 1
    %p30 = por %p28, %p29
    %p31 = scmp.ne.s32.totalorder %s23, %s26
    %p32 = scmp.eq.s32.totalorder %s13, 0
    %p33 = por %p31, %p32
    %p34 = scmp.ne.s32.totalorder %s23, %s26
    %p35 = scmp.eq.s32.totalorder %s18, 1
    %p36 = por %p34, %p35
    %p37 = scmp.ne.s32.totalorder %s26, %s27
    %p38 = scmp.eq.s32.totalorder %s18, 0
    %p39 = por %p37, %p38
    %p40 = scmp.ne.s32.totalorder %s26, %s27
    %p41 = scmp.eq.s32.totalorder %s19, 1
    %p42 = por %p40, %p41
    %p44 = scmp.ne.s32.totalorder %s27, %s43
    %p45 = scmp.eq.s32.totalorder %s19, 0
    %p46 = por %p44, %p45
    %s48 = sadd.s32 %s47, 1
    %p51 = scmp.eq.s32.totalorder %s13, 1
    %p52 = scmp.ne.s32.totalorder %s47, %s49
    %p53 = scmp.eq.s32.totalorder %s13, 0
    %p54 = por %p52, %p53
    %p55 = scmp.ne.s32.totalorder %s47, %s49
    %p56 = scmp.eq.s32.totalorder %s18, 1
    %p57 = por %p55, %p56
    %p58 = scmp.ne.s32.totalorder %s49, %s50
    %p59 = scmp.eq.s32.totalorder %s18, 0
    %p60 = por %p58, %p59
    %p61 = scmp.ne.s32.totalorder %s49, %s50
    %p62 = scmp.eq.s32.totalorder %s19, 1
    %p63 = por %p61, %p62
    %p65 = scmp.ne.s32.totalorder %s50, %s64
    %p66 = scmp.eq.s32.totalorder %s19, 0
    %p67 = por %p65, %p66
    %s69 = sadd.s32 %s68, 1
    %p72 = scmp.eq.s32.totalorder %s13, 1
    %p73 = scmp.ne.s32.totalorder %s68, %s70
    %p74 = scmp.eq.s32.totalorder %s13, 0
    %p75 = por %p73, %p74
    %p76 = scmp.ne.s32.totalorder %s68, %s70
    %p77 = scmp.eq.s32.totalorder %s18, 1
    %p78 = por %p76, %p77
    %p79 = scmp.ne.s32.totalorder %s70, %s71
    %p80 = scmp.eq.s32.totalorder %s18, 0
    %p81 = por %p79, %p80
    %p82 = scmp.ne.s32.totalorder %s70, %s71
    %p83 = scmp.eq.s32.totalorder %s19, 1
    %p84 = por %p82, %p83
    %p86 = scmp.ne.s32.totalorder %s71, %s85
    %p87 = scmp.eq.s32.totalorder %s19, 0
    %p88 = por %p86, %p87
    %s90 = sadd.s32 %s89, 1
    %p93 = scmp.eq.s32.totalorder %s13, 1
    %p94 = scmp.ne.s32.totalorder %s89, %s91
    %p95 = scmp.eq.s32.totalorder %s13, 0
    %p96 = por %p94, %p95
    %p97 = scmp.ne.s32.totalorder %s89, %s91
    %p98 = scmp.eq.s32.totalorder %s18, 1
    %p99 = por %p97, %p98
    %p100 = scmp.ne.s32.totalorder %s91, %s92
    %p101 = scmp.eq.s32.totalorder %s18, 0
    %p102 = por %p100, %p101
    %p103 = scmp.ne.s32.totalorder %s91, %s92
    %p104 = scmp.eq.s32.totalorder %s19, 1
    %p105 = por %p103, %p104
    %p107 = scmp.ne.s32.totalorder %s92, %s106
    %p108 = scmp.eq.s32.totalorder %s19, 0
    %p109 = por %p107, %p108
    %s111 = sadd.s32 %s110, 1
    %p114 = scmp.eq.s32.totalorder %s13, 1
    %p115 = scmp.ne.s32.totalorder %s110, %s112
    %p116 = scmp.eq.s32.totalorder %s13, 0
    %p117 = por %p115, %p116
    %p118 = scmp.ne.s32.totalorder %s110, %s112
    %p119 = scmp.eq.s32.totalorder %s18, 1
    %p120 = por %p118, %p119
    %p121 = scmp.ne.s32.totalorder %s112, %s113
    %p122 = scmp.eq.s32.totalorder %s18, 0
    %p123 = por %p121, %p122
    %p124 = scmp.ne.s32.totalorder %s112, %s113
    %p125 = scmp.eq.s32.totalorder %s19, 1
    %p126 = por %p124, %p125
    %p128 = scmp.ne.s32.totalorder %s113, %s127
    %p129 = scmp.eq.s32.totalorder %s19, 0
    %p130 = por %p128, %p129
    %s132 = sadd.s32 %s131, 1
    %p135 = scmp.eq.s32.totalorder %s13, 1
    %p136 = scmp.ne.s32.totalorder %s131, %s133
    %p137 = scmp.eq.s32.totalorder %s13, 0
    %p138 = por %p136, %p137
    %p139 = scmp.ne.s32.totalorder %s131, %s133
    %p140 = scmp.eq.s32.totalorder %s18, 1
    %p141 = por %p139, %p140
    %p142 = scmp.ne.s32.totalorder %s133, %s134
    %p143 = scmp.eq.s32.totalorder %s18, 0
    %p144 = por %p142, %p143
    %p145 = scmp.ne.s32.totalorder %s133, %s134
    %p146 = scmp.eq.s32.totalorder %s19, 1
    %p147 = por %p145, %p146
    %p149 = scmp.ne.s32.totalorder %s134, %s148
    %p150 = scmp.eq.s32.totalorder %s19, 0
    %p151 = por %p149, %p150
    %s153 = sadd.s32 %s152, 1
    %p156 = scmp.eq.s32.totalorder %s13, 1
    %p157 = scmp.ne.s32.totalorder %s152, %s154
    %p158 = scmp.eq.s32.totalorder %s13, 0
    %p159 = por %p157, %p158
    %p160 = scmp.ne.s32.totalorder %s152, %s154
    %p161 = scmp.eq.s32.totalorder %s18, 1
    %p162 = por %p160, %p161
    %p163 = scmp.ne.s32.totalorder %s154, %s155
    %p164 = scmp.eq.s32.totalorder %s18, 0
    %p165 = por %p163, %p164
    %p166 = scmp.ne.s32.totalorder %s154, %s155
    %p167 = scmp.eq.s32.totalorder %s19, 1
    %p168 = por %p166, %p167
    %p170 = scmp.ne.s32.totalorder %s155, %s169
    %p171 = scmp.eq.s32.totalorder %s19, 0
    %p172 = por %p170, %p171
    %s173 = ssub.s32 %s13, %s20
    %p174 = scmp.eq.s32.totalorder %s173, 0
    %s176 = sadd.s32 %s175, 1
    %s177 = scalar_select %p174, %s175, %s176
    %p180 = pneg %p174
    %p181 = scmp.eq.s32.totalorder %s13, 1
    %p182 = por %p180, %p181
    %p183 = scmp.ne.s32.totalorder %s175, %s178
    %p184 = scmp.eq.s32.totalorder %s13, 0
    %p185 = por %p183, %p184
    %p186 = scmp.ne.s32.totalorder %s175, %s178
    %p187 = scmp.eq.s32.totalorder %s18, 1
    %p188 = por %p186, %p187
    %p189 = scmp.ne.s32.totalorder %s178, %s179
    %p190 = scmp.eq.s32.totalorder %s18, 0
    %p191 = por %p189, %p190
    %p192 = scmp.ne.s32.totalorder %s178, %s179
    %p193 = scmp.eq.s32.totalorder %s19, 1
    %p194 = por %p192, %p193
    %p196 = scmp.ne.s32.totalorder %s179, %s195
    %p197 = scmp.eq.s32.totalorder %s19, 0
    %p198 = por %p196, %p197
    %p199 = scmp.le.s32.totalorder 1, %s13
    %p200 = scmp.lt.s32.totalorder %s13, 3
    %p201 = pnand %p199, %p200
    %p202 = pneg %p201
    // Predicated region
    $region9: #{residual_block_2d.1} parent=5 // pred_check
      _
    $region10: #{residual_block_2d.1} parent=5 // pred_check_branch
      %204 = sbr.rel (%p201) target = $region12
    $region11: #{residual_block_2d.1} parent=5 // pred_region
      %s205 = ssub.s32 %s13, 1
      // Predicated region
      $region13: #{residual_block_2d.1} parent=11 // pred_check
        %p206 = pneg %p60
      $region14: #{residual_block_2d.1} parent=11 // pred_check_branch
        %208 = sbr.rel (%p206) target = $region16
      $region15: #{residual_block_2d.1} parent=11 // pred_region
        _
      $region16: #{residual_block_2d.1} parent=11 // pred_fallthru
        _
      // Predicated region
      $region17: #{residual_block_2d.1} parent=11 // pred_check
        %p209 = pneg %p81
      $region18: #{residual_block_2d.1} parent=11 // pred_check_branch
        %211 = sbr.rel (%p209) target = $region20
      $region19: #{residual_block_2d.1} parent=11 // pred_region
        _
      $region20: #{residual_block_2d.1} parent=11 // pred_fallthru
        _
      // Predicated region
      $region21: #{residual_block_2d.1} parent=11 // pred_check
        %p212 = pneg %p102
      $region22: #{residual_block_2d.1} parent=11 // pred_check_branch
        %214 = sbr.rel (%p212) target = $region24
      $region23: #{residual_block_2d.1} parent=11 // pred_region
        _
      $region24: #{residual_block_2d.1} parent=11 // pred_fallthru
        _
      // Predicated region
      $region25: #{residual_block_2d.1} parent=11 // pred_check
        %p215 = pneg %p123
      $region26: #{residual_block_2d.1} parent=11 // pred_check_branch
        %217 = sbr.rel (%p215) target = $region28
      $region27: #{residual_block_2d.1} parent=11 // pred_region
        _
      $region28: #{residual_block_2d.1} parent=11 // pred_fallthru
        _
      // Predicated region
      $region29: #{residual_block_2d.1} parent=11 // pred_check
        %p218 = pneg %p144
      $region30: #{residual_block_2d.1} parent=11 // pred_check_branch
        %220 = sbr.rel (%p218) target = $region32
      $region31: #{residual_block_2d.1} parent=11 // pred_region
        _
      $region32: #{residual_block_2d.1} parent=11 // pred_fallthru
        _
      // Predicated region
      $region33: #{residual_block_2d.1} parent=11 // pred_check
        %p221 = pneg %p165
      $region34: #{residual_block_2d.1} parent=11 // pred_check_branch
        %223 = sbr.rel (%p221) target = $region36
      $region35: #{residual_block_2d.1} parent=11 // pred_region
        _
      $region36: #{residual_block_2d.1} parent=11 // pred_fallthru
        _
    $region12: #{residual_block_2d.1} parent=5 // pred_fallthru
      _
    %p224 = scmp.lt.s32.totalorder %s13, 2
    // Predicated region
    $region37: #{residual_block_2d.1} parent=5 // pred_check
      %p225 = pneg %p224
    $region38: #{residual_block_2d.1} parent=5 // pred_check_branch
      %227 = sbr.rel (%p225) target = $region40
    $region39: #{residual_block_2d.1} parent=5 // pred_region
      // Predicated region
      $region41: #{residual_block_2d.1} parent=39 // pred_check
        %p228 = pneg %p33
      $region42: #{residual_block_2d.1} parent=39 // pred_check_branch
        %230 = sbr.rel (%p228) target = $region44
      $region43: #{residual_block_2d.1} parent=39 // pred_region
        %p231 = scmp.lt.s32.totalorder %s13, 1
        %s232 = scalar_select %p231, %s13, 1
        %s233 = smul.addr %s232, 54
        %s234 = smul.addr %s233, 8
        %s235 = scalar_lea.vmem %s0, %s234
      $region44: #{residual_block_2d.1} parent=39 // pred_fallthru
        _
    $region40: #{residual_block_2d.1} parent=5 // pred_fallthru
      _
    %p236 = scmp.le.s32.totalorder 1, %s13
    %p237 = scmp.lt.s32.totalorder %s13, 3
    %p238 = pnand %p236, %p237
    %p239 = pneg %p238
    // Predicated region
    $region45: #{residual_block_2d.1} parent=5 // pred_check
      _
    $region46: #{residual_block_2d.1} parent=5 // pred_check_branch
      %241 = sbr.rel (%p238) target = $region48
    $region47: #{residual_block_2d.1} parent=5 // pred_region
      %s242 = ssub.s32 %s13, 1
      %p243 = scmp.lt.s32.totalorder %s18, 1
      %s244 = scalar_select %p243, %s18, 1
      %s245 = smul.addr %s244, 54
      %s246 = smul.addr %s245, 8
      %s247 = scalar_lea.vmem %s0, %s246
      %p248 = pneg %p39
      %p249 = pneg %p36
      %p250 = pneg %p60
      %p251 = pneg %p57
      %p252 = pneg %p81
      %p253 = pneg %p78
      %p254 = pneg %p102
      %p255 = pneg %p99
      %p256 = pneg %p123
      %p257 = pneg %p120
      %p258 = pneg %p144
      %p259 = pneg %p141
      %p260 = pneg %p165
      %p261 = pneg %p162
      %p262 = pneg %p191
      %p263 = pneg %p188
      %p264 = scmp.lt.s32.totalorder %s18, 1
      %s265 = scalar_select %p264, %s18, 1
      %s266 = smul.addr %s265, 4
      %s267 = smul.addr %s266, 8
      %s268 = scalar_lea.vmem %s7, %s267
      %p269 = scmp.lt.s32.totalorder %s18, 1
      %s270 = scalar_select %p269, %s18, 1
      %s271 = smul.addr %s270, 54
      %s272 = smul.addr %s271, 8
      %s273 = scalar_lea.vmem %s0, %s272
      %p274 = scmp.lt.s32.totalorder %s18, 1
      %s275 = scalar_select %p274, %s18, 1
      %s276 = smul.addr %s275, 4
      %s277 = smul.addr %s276, 8
      %s278 = scalar_lea.vmem %s7, %s277
      %v280 = vld [vmem:[%s273] sm:$0xff]
      %v281 = vld [vmem:[%s273 + $0x8] sm:$0xff]
      %v282 = vld [vmem:[%s273 + $0x18] sm:$0xff]
      %v283 = vld [vmem:[%s273 + $0x20] sm:$0xff]
      %v284 = vld [vmem:[%s273 + $0x30] sm:$0xff]
      %v285 = vld [vmem:[%s273 + $0x38] sm:$0xff]
      %v286 = vld [vmem:[%s273 + $0x48] sm:$0xff]
      %v287 = vld [vmem:[%s273 + $0x50] sm:$0xff]
      %v288 = vld [vmem:[%s273 + $0x60] sm:$0xff]
      %v289 = vld [vmem:[%s273 + $0x68] sm:$0xff]
      %v290 = vld [vmem:[%s273 + $0x78] sm:$0xff]
      %v291 = vld [vmem:[%s273 + $0x80] sm:$0xff]
      %v292 = vld [vmem:[%s273 + $0x90] sm:$0xff]
      %v293 = vld [vmem:[%s273 + $0x98] sm:$0xff]
      %v294 = vld [vmem:[%s273 + $0xa8] sm:$0xff]
      %v295 = vld [vmem:[%s273 + $0xb0] sm:$0xff]
      %v296 = vld [vmem:[%s273 + $0xc0] sm:$0xff]
      %v297 = vld [vmem:[%s273 + $0xc8] sm:$0xff]
      %v298 = vld [vmem:[%s273 + $0xd8] sm:$0xff]
      %v299 = vld [vmem:[%s273 + $0xe0] sm:$0xff]
      %v300 = vld [vmem:[%s273 + $0xf0] sm:$0xff]
      %v301 = vld [vmem:[%s273 + $0xf8] sm:$0xff]
      %v302 = vld [vmem:[%s273 + $0x108] sm:$0xff]
      %v303 = vld [vmem:[%s273 + $0x110] sm:$0xff]
      %v304 = vld [vmem:[%s273 + $0x120] sm:$0xff]
      %v305 = vld [vmem:[%s273 + $0x128] sm:$0xff]
      %v306 = vld [vmem:[%s273 + $0x138] sm:$0xff]
      %v307 = vld [vmem:[%s273 + $0x140] sm:$0xff]
      %v308 = vld [vmem:[%s273 + $0x150] sm:$0xff]
      %v309 = vld [vmem:[%s273 + $0x158] sm:$0xff]
      %v310 = vld [vmem:[%s273 + $0x168] sm:$0xff]
      %v311 = vld [vmem:[%s273 + $0x170] sm:$0xff]
      %v312 = vld [vmem:[%s273 + $0x1] sm:$0xff]
      %v313 = vld [vmem:[%s273 + $0x9] sm:$0xff]
      %v314 = vld [vmem:[%s273 + $0x19] sm:$0xff]
      %v315 = vld [vmem:[%s273 + $0x21] sm:$0xff]
      %v316 = vld [vmem:[%s273 + $0x31] sm:$0xff]
      %v317 = vld [vmem:[%s273 + $0x39] sm:$0xff]
      %v318 = vld [vmem:[%s273 + $0x49] sm:$0xff]
      %v319 = vld [vmem:[%s273 + $0x51] sm:$0xff]
      %v320 = vld [vmem:[%s273 + $0x61] sm:$0xff]
      %v321 = vld [vmem:[%s273 + $0x69] sm:$0xff]
      %v322 = vld [vmem:[%s273 + $0x79] sm:$0xff]
      %v323 = vld [vmem:[%s273 + $0x81] sm:$0xff]
      %v324 = vld [vmem:[%s273 + $0x91] sm:$0xff]
      %v325 = vld [vmem:[%s273 + $0x99] sm:$0xff]
      %v326 = vld [vmem:[%s273 + $0xa9] sm:$0xff]
      %v327 = vld [vmem:[%s273 + $0xb1] sm:$0xff]
      %v328 = vld [vmem:[%s273 + $0xc1] sm:$0xff]
      %v329 = vld [vmem:[%s273 + $0xc9] sm:$0xff]
      %v330 = vld [vmem:[%s273 + $0xd9] sm:$0xff]
      %v331 = vld [vmem:[%s273 + $0xe1] sm:$0xff]
      %v332 = vld [vmem:[%s273 + $0xf1] sm:$0xff]
      %v333 = vld [vmem:[%s273 + $0xf9] sm:$0xff]
      %v334 = vld [vmem:[%s273 + $0x109] sm:$0xff]
      %v335 = vld [vmem:[%s273 + $0x111] sm:$0xff]
      %v336 = vld [vmem:[%s273 + $0x121] sm:$0xff]
      %v337 = vld [vmem:[%s273 + $0x129] sm:$0xff]
      %v338 = vld [vmem:[%s273 + $0x139] sm:$0xff]
      %v339 = vld [vmem:[%s273 + $0x141] sm:$0xff]
      %v340 = vld [vmem:[%s273 + $0x151] sm:$0xff]
      %v341 = vld [vmem:[%s273 + $0x159] sm:$0xff]
      %v342 = vld [vmem:[%s273 + $0x169] sm:$0xff]
      %v343 = vld [vmem:[%s273 + $0x171] sm:$0xff]
      %v344 = vld [vmem:[%s273 + $0x2] sm:$0xff]
      %v345 = vld [vmem:[%s273 + $0xa] sm:$0xff]
      %v346 = vld [vmem:[%s273 + $0x1a] sm:$0xff]
      %v347 = vld [vmem:[%s273 + $0x22] sm:$0xff]
      %v348 = vld [vmem:[%s273 + $0x32] sm:$0xff]
      %v349 = vld [vmem:[%s273 + $0x3a] sm:$0xff]
      %v350 = vld [vmem:[%s273 + $0x4a] sm:$0xff]
      %v351 = vld [vmem:[%s273 + $0x52] sm:$0xff]
      %v352 = vld [vmem:[%s273 + $0x62] sm:$0xff]
      %v353 = vld [vmem:[%s273 + $0x6a] sm:$0xff]
      %v354 = vld [vmem:[%s273 + $0x7a] sm:$0xff]
      %v355 = vld [vmem:[%s273 + $0x82] sm:$0xff]
      %v356 = vld [vmem:[%s273 + $0x92] sm:$0xff]
      %v357 = vld [vmem:[%s273 + $0x9a] sm:$0xff]
      %v358 = vld [vmem:[%s273 + $0xaa] sm:$0xff]
      %v359 = vld [vmem:[%s273 + $0xb2] sm:$0xff]
      %v360 = vld [vmem:[%s273 + $0xc2] sm:$0xff]
      %v361 = vld [vmem:[%s273 + $0xca] sm:$0xff]
      %v362 = vld [vmem:[%s273 + $0xda] sm:$0xff]
      %v363 = vld [vmem:[%s273 + $0xe2] sm:$0xff]
      %v364 = vld [vmem:[%s273 + $0xf2] sm:$0xff]
      %v365 = vld [vmem:[%s273 + $0xfa] sm:$0xff]
      %v366 = vld [vmem:[%s273 + $0x10a] sm:$0xff]
      %v367 = vld [vmem:[%s273 + $0x112] sm:$0xff]
      %v368 = vld [vmem:[%s273 + $0x122] sm:$0xff]
      %v369 = vld [vmem:[%s273 + $0x12a] sm:$0xff]
      %v370 = vld [vmem:[%s273 + $0x13a] sm:$0xff]
      %v371 = vld [vmem:[%s273 + $0x142] sm:$0xff]
      %v372 = vld [vmem:[%s273 + $0x152] sm:$0xff]
      %v373 = vld [vmem:[%s273 + $0x15a] sm:$0xff]
      %v374 = vld [vmem:[%s273 + $0x16a] sm:$0xff]
      %v375 = vld [vmem:[%s273 + $0x172] sm:$0xff]
      %s376 = scalar_lea.vmem %s273, 24
      %v377 = vld [vmem:[%s376] sm:$0xff]
      %v378 = vld [vmem:[%s376 + $0x8] sm:$0xff]
      %v379 = vld [vmem:[%s376 + $0x18] sm:$0xff]
      %v380 = vld [vmem:[%s376 + $0x20] sm:$0xff]
      %v381 = vld [vmem:[%s376 + $0x30] sm:$0xff]
      %v382 = vld [vmem:[%s376 + $0x38] sm:$0xff]
      %v383 = vld [vmem:[%s376 + $0x48] sm:$0xff]
      %v384 = vld [vmem:[%s376 + $0x50] sm:$0xff]
      %v385 = vld [vmem:[%s376 + $0x60] sm:$0xff]
      %v386 = vld [vmem:[%s376 + $0x68] sm:$0xff]
      %v387 = vld [vmem:[%s376 + $0x78] sm:$0xff]
      %v388 = vld [vmem:[%s376 + $0x80] sm:$0xff]
      %v389 = vld [vmem:[%s376 + $0x90] sm:$0xff]
      %v390 = vld [vmem:[%s376 + $0x98] sm:$0xff]
      %v391 = vld [vmem:[%s376 + $0xa8] sm:$0xff]
      %v392 = vld [vmem:[%s376 + $0xb0] sm:$0xff]
      %v393 = vld [vmem:[%s376 + $0xc0] sm:$0xff]
      %v394 = vld [vmem:[%s376 + $0xc8] sm:$0xff]
      %v395 = vld [vmem:[%s376 + $0xd8] sm:$0xff]
      %v396 = vld [vmem:[%s376 + $0xe0] sm:$0xff]
      %v397 = vld [vmem:[%s376 + $0xf0] sm:$0xff]
      %v398 = vld [vmem:[%s376 + $0xf8] sm:$0xff]
      %v399 = vld [vmem:[%s376 + $0x108] sm:$0xff]
      %v400 = vld [vmem:[%s376 + $0x110] sm:$0xff]
      %v401 = vld [vmem:[%s376 + $0x120] sm:$0xff]
      %v402 = vld [vmem:[%s376 + $0x128] sm:$0xff]
      %v403 = vld [vmem:[%s376 + $0x138] sm:$0xff]
      %v404 = vld [vmem:[%s376 + $0x140] sm:$0xff]
      %v405 = vld [vmem:[%s376 + $0x150] sm:$0xff]
      %v406 = vld [vmem:[%s376 + $0x158] sm:$0xff]
      %v407 = vld [vmem:[%s376 + $0x168] sm:$0xff]
      %v408 = vld [vmem:[%s376 + $0x170] sm:$0xff]
      %v409 = vld [vmem:[%s376 + $0x1] sm:$0xff]
      %v410 = vld [vmem:[%s376 + $0x9] sm:$0xff]
      %v411 = vld [vmem:[%s376 + $0x19] sm:$0xff]
      %v412 = vld [vmem:[%s376 + $0x21] sm:$0xff]
      %v413 = vld [vmem:[%s376 + $0x31] sm:$0xff]
      %v414 = vld [vmem:[%s376 + $0x39] sm:$0xff]
      %v415 = vld [vmem:[%s376 + $0x49] sm:$0xff]
      %v416 = vld [vmem:[%s376 + $0x51] sm:$0xff]
      %v417 = vld [vmem:[%s376 + $0x61] sm:$0xff]
      %v418 = vld [vmem:[%s376 + $0x69] sm:$0xff]
      %v419 = vld [vmem:[%s376 + $0x79] sm:$0xff]
      %v420 = vld [vmem:[%s376 + $0x81] sm:$0xff]
      %v421 = vld [vmem:[%s376 + $0x91] sm:$0xff]
      %v422 = vld [vmem:[%s376 + $0x99] sm:$0xff]
      %v423 = vld [vmem:[%s376 + $0xa9] sm:$0xff]
      %v424 = vld [vmem:[%s376 + $0xb1] sm:$0xff]
      %v425 = vld [vmem:[%s376 + $0xc1] sm:$0xff]
      %v426 = vld [vmem:[%s376 + $0xc9] sm:$0xff]
      %v427 = vld [vmem:[%s376 + $0xd9] sm:$0xff]
      %v428 = vld [vmem:[%s376 + $0xe1] sm:$0xff]
      %v429 = vld [vmem:[%s376 + $0xf1] sm:$0xff]
      %v430 = vld [vmem:[%s376 + $0xf9] sm:$0xff]
      %v431 = vld [vmem:[%s376 + $0x109] sm:$0xff]
      %v432 = vld [vmem:[%s376 + $0x111] sm:$0xff]
      %v433 = vld [vmem:[%s376 + $0x121] sm:$0xff]
      %v434 = vld [vmem:[%s376 + $0x129] sm:$0xff]
      %v435 = vld [vmem:[%s376 + $0x139] sm:$0xff]
      %v436 = vld [vmem:[%s376 + $0x141] sm:$0xff]
      %v437 = vld [vmem:[%s376 + $0x151] sm:$0xff]
      %v438 = vld [vmem:[%s376 + $0x159] sm:$0xff]
      %v439 = vld [vmem:[%s376 + $0x169] sm:$0xff]
      %v440 = vld [vmem:[%s376 + $0x171] sm:$0xff]
      %v441 = vld [vmem:[%s376 + $0x2] sm:$0xff]
      %v442 = vld [vmem:[%s376 + $0xa] sm:$0xff]
      %v443 = vld [vmem:[%s376 + $0x1a] sm:$0xff]
      %v444 = vld [vmem:[%s376 + $0x22] sm:$0xff]
      %v445 = vld [vmem:[%s376 + $0x32] sm:$0xff]
      %v446 = vld [vmem:[%s376 + $0x3a] sm:$0xff]
      %v447 = vld [vmem:[%s376 + $0x4a] sm:$0xff]
      %v448 = vld [vmem:[%s376 + $0x52] sm:$0xff]
      %v449 = vld [vmem:[%s376 + $0x62] sm:$0xff]
      %v450 = vld [vmem:[%s376 + $0x6a] sm:$0xff]
      %v451 = vld [vmem:[%s376 + $0x7a] sm:$0xff]
      %v452 = vld [vmem:[%s376 + $0x82] sm:$0xff]
      %v453 = vld [vmem:[%s376 + $0x92] sm:$0xff]
      %v454 = vld [vmem:[%s376 + $0x9a] sm:$0xff]
      %v455 = vld [vmem:[%s376 + $0xaa] sm:$0xff]
      %v456 = vld [vmem:[%s376 + $0xb2] sm:$0xff]
      %v457 = vld [vmem:[%s376 + $0xc2] sm:$0xff]
      %v458 = vld [vmem:[%s376 + $0xca] sm:$0xff]
      %v459 = vld [vmem:[%s376 + $0xda] sm:$0xff]
      %v460 = vld [vmem:[%s376 + $0xe2] sm:$0xff]
      %v461 = vld [vmem:[%s376 + $0xf2] sm:$0xff]
      %v462 = vld [vmem:[%s376 + $0xfa] sm:$0xff]
      %v463 = vld [vmem:[%s376 + $0x10a] sm:$0xff]
      %v464 = vld [vmem:[%s376 + $0x112] sm:$0xff]
      %v465 = vld [vmem:[%s376 + $0x122] sm:$0xff]
      %v466 = vld [vmem:[%s376 + $0x12a] sm:$0xff]
      %v467 = vld [vmem:[%s376 + $0x13a] sm:$0xff]
      %v468 = vld [vmem:[%s376 + $0x142] sm:$0xff]
      %v469 = vld [vmem:[%s376 + $0x152] sm:$0xff]
      %v470 = vld [vmem:[%s376 + $0x15a] sm:$0xff]
      %v471 = vld [vmem:[%s376 + $0x16a] sm:$0xff]
      %v472 = vld [vmem:[%s376 + $0x172] sm:$0xff]
      %s473 = scalar_lea.vmem %s273, 48
      %v474 = vld [vmem:[%s473] sm:$0xff]
      %v475 = vld [vmem:[%s473 + $0x8] sm:$0xff]
      %v476 = vld [vmem:[%s473 + $0x18] sm:$0xff]
      %v477 = vld [vmem:[%s473 + $0x20] sm:$0xff]
      %v478 = vld [vmem:[%s473 + $0x30] sm:$0xff]
      %v479 = vld [vmem:[%s473 + $0x38] sm:$0xff]
      %v480 = vld [vmem:[%s473 + $0x48] sm:$0xff]
      %v481 = vld [vmem:[%s473 + $0x50] sm:$0xff]
      %v482 = vld [vmem:[%s473 + $0x60] sm:$0xff]
      %v483 = vld [vmem:[%s473 + $0x68] sm:$0xff]
      %v484 = vld [vmem:[%s473 + $0x78] sm:$0xff]
      %v485 = vld [vmem:[%s473 + $0x80] sm:$0xff]
      %v486 = vld [vmem:[%s473 + $0x90] sm:$0xff]
      %v487 = vld [vmem:[%s473 + $0x98] sm:$0xff]
      %v488 = vld [vmem:[%s473 + $0xa8] sm:$0xff]
      %v489 = vld [vmem:[%s473 + $0xb0] sm:$0xff]
      %v490 = vld [vmem:[%s473 + $0xc0] sm:$0xff]
      %v491 = vld [vmem:[%s473 + $0xc8] sm:$0xff]
      %v492 = vld [vmem:[%s473 + $0xd8] sm:$0xff]
      %v493 = vld [vmem:[%s473 + $0xe0] sm:$0xff]
      %v494 = vld [vmem:[%s473 + $0xf0] sm:$0xff]
      %v495 = vld [vmem:[%s473 + $0xf8] sm:$0xff]
      %v496 = vld [vmem:[%s473 + $0x108] sm:$0xff]
      %v497 = vld [vmem:[%s473 + $0x110] sm:$0xff]
      %v498 = vld [vmem:[%s473 + $0x120] sm:$0xff]
      %v499 = vld [vmem:[%s473 + $0x128] sm:$0xff]
      %v500 = vld [vmem:[%s473 + $0x138] sm:$0xff]
      %v501 = vld [vmem:[%s473 + $0x140] sm:$0xff]
      %v502 = vld [vmem:[%s473 + $0x150] sm:$0xff]
      %v503 = vld [vmem:[%s473 + $0x158] sm:$0xff]
      %v504 = vld [vmem:[%s473 + $0x168] sm:$0xff]
      %v505 = vld [vmem:[%s473 + $0x170] sm:$0xff]
      %v506 = vld [vmem:[%s473 + $0x1] sm:$0xff]
      %v507 = vld [vmem:[%s473 + $0x9] sm:$0xff]
      %v508 = vld [vmem:[%s473 + $0x19] sm:$0xff]
      %v509 = vld [vmem:[%s473 + $0x21] sm:$0xff]
      %v510 = vld [vmem:[%s473 + $0x31] sm:$0xff]
      %v511 = vld [vmem:[%s473 + $0x39] sm:$0xff]
      %v512 = vld [vmem:[%s473 + $0x49] sm:$0xff]
      %v513 = vld [vmem:[%s473 + $0x51] sm:$0xff]
      %v514 = vld [vmem:[%s473 + $0x61] sm:$0xff]
      %v515 = vld [vmem:[%s473 + $0x69] sm:$0xff]
      %v516 = vld [vmem:[%s473 + $0x79] sm:$0xff]
      %v517 = vld [vmem:[%s473 + $0x81] sm:$0xff]
      %v518 = vld [vmem:[%s473 + $0x91] sm:$0xff]
      %v519 = vld [vmem:[%s473 + $0x99] sm:$0xff]
      %v520 = vld [vmem:[%s473 + $0xa9] sm:$0xff]
      %v521 = vld [vmem:[%s473 + $0xb1] sm:$0xff]
      %v522 = vld [vmem:[%s473 + $0xc1] sm:$0xff]
      %v523 = vld [vmem:[%s473 + $0xc9] sm:$0xff]
      %v524 = vld [vmem:[%s473 + $0xd9] sm:$0xff]
      %v525 = vld [vmem:[%s473 + $0xe1] sm:$0xff]
      %v526 = vld [vmem:[%s473 + $0xf1] sm:$0xff]
      %v527 = vld [vmem:[%s473 + $0xf9] sm:$0xff]
      %v528 = vld [vmem:[%s473 + $0x109] sm:$0xff]
      %v529 = vld [vmem:[%s473 + $0x111] sm:$0xff]
      %v530 = vld [vmem:[%s473 + $0x121] sm:$0xff]
      %v531 = vld [vmem:[%s473 + $0x129] sm:$0xff]
      %v532 = vld [vmem:[%s473 + $0x139] sm:$0xff]
      %v533 = vld [vmem:[%s473 + $0x141] sm:$0xff]
      %v534 = vld [vmem:[%s473 + $0x151] sm:$0xff]
      %v535 = vld [vmem:[%s473 + $0x159] sm:$0xff]
      %v536 = vld [vmem:[%s473 + $0x169] sm:$0xff]
      %v537 = vld [vmem:[%s473 + $0x171] sm:$0xff]
      %v538 = vld [vmem:[%s473 + $0x2] sm:$0xff]
      %v539 = vld [vmem:[%s473 + $0xa] sm:$0xff]
      %v540 = vld [vmem:[%s473 + $0x1a] sm:$0xff]
      %v541 = vld [vmem:[%s473 + $0x22] sm:$0xff]
      %v542 = vld [vmem:[%s473 + $0x32] sm:$0xff]
      %v543 = vld [vmem:[%s473 + $0x3a] sm:$0xff]
      %v544 = vld [vmem:[%s473 + $0x4a] sm:$0xff]
      %v545 = vld [vmem:[%s473 + $0x52] sm:$0xff]
      %v546 = vld [vmem:[%s473 + $0x62] sm:$0xff]
      %v547 = vld [vmem:[%s473 + $0x6a] sm:$0xff]
      %v548 = vld [vmem:[%s473 + $0x7a] sm:$0xff]
      %v549 = vld [vmem:[%s473 + $0x82] sm:$0xff]
      %v550 = vld [vmem:[%s473 + $0x92] sm:$0xff]
      %v551 = vld [vmem:[%s473 + $0x9a] sm:$0xff]
      %v552 = vld [vmem:[%s473 + $0xaa] sm:$0xff]
      %v553 = vld [vmem:[%s473 + $0xb2] sm:$0xff]
      %v554 = vld [vmem:[%s473 + $0xc2] sm:$0xff]
      %v555 = vld [vmem:[%s473 + $0xca] sm:$0xff]
      %v556 = vld [vmem:[%s473 + $0xda] sm:$0xff]
      %v557 = vld [vmem:[%s473 + $0xe2] sm:$0xff]
      %v558 = vld [vmem:[%s473 + $0xf2] sm:$0xff]
      %v559 = vld [vmem:[%s473 + $0xfa] sm:$0xff]
      %v560 = vld [vmem:[%s473 + $0x10a] sm:$0xff]
      %v561 = vld [vmem:[%s473 + $0x112] sm:$0xff]
      %v562 = vld [vmem:[%s473 + $0x122] sm:$0xff]
      %v563 = vld [vmem:[%s473 + $0x12a] sm:$0xff]
      %v564 = vld [vmem:[%s473 + $0x13a] sm:$0xff]
      %v565 = vld [vmem:[%s473 + $0x142] sm:$0xff]
      %v566 = vld [vmem:[%s473 + $0x152] sm:$0xff]
      %v567 = vld [vmem:[%s473 + $0x15a] sm:$0xff]
      %v568 = vld [vmem:[%s473 + $0x16a] sm:$0xff]
      %v569 = vld [vmem:[%s473 + $0x172] sm:$0xff]
      %602 = vrot.lane.b32.xlu0 %v312, 4
      %v603 = vpop.permute.xlu0 %602
      %604 = vrot.lane.b32.xlu0 %v313, 4
      %v605 = vpop.permute.xlu0 %604
      %606 = vrot.lane.b32.xlu0 %v314, 4
      %v607 = vpop.permute.xlu0 %606
      %608 = vrot.lane.b32.xlu0 %v315, 4
      %v609 = vpop.permute.xlu0 %608
      %610 = vrot.lane.b32.xlu0 %v316, 4
      %v611 = vpop.permute.xlu0 %610
      %612 = vrot.lane.b32.xlu0 %v317, 4
      %v613 = vpop.permute.xlu0 %612
      %614 = vrot.lane.b32.xlu0 %v318, 4
      %v615 = vpop.permute.xlu0 %614
      %616 = vrot.lane.b32.xlu0 %v319, 4
      %v617 = vpop.permute.xlu0 %616
      %618 = vrot.lane.b32.xlu0 %v320, 4
      %v619 = vpop.permute.xlu0 %618
      %620 = vrot.lane.b32.xlu0 %v321, 4
      %v621 = vpop.permute.xlu0 %620
      %622 = vrot.lane.b32.xlu0 %v322, 4
      %v623 = vpop.permute.xlu0 %622
      %624 = vrot.lane.b32.xlu0 %v323, 4
      %v625 = vpop.permute.xlu0 %624
      %626 = vrot.lane.b32.xlu0 %v324, 4
      %v627 = vpop.permute.xlu0 %626
      %628 = vrot.lane.b32.xlu0 %v325, 4
      %v629 = vpop.permute.xlu0 %628
      %630 = vrot.lane.b32.xlu0 %v326, 4
      %v631 = vpop.permute.xlu0 %630
      %632 = vrot.lane.b32.xlu0 %v327, 4
      %v633 = vpop.permute.xlu0 %632
      %634 = vrot.lane.b32.xlu0 %v328, 4
      %v635 = vpop.permute.xlu0 %634
      %636 = vrot.lane.b32.xlu0 %v329, 4
      %v637 = vpop.permute.xlu0 %636
      %638 = vrot.lane.b32.xlu0 %v330, 4
      %v639 = vpop.permute.xlu0 %638
      %640 = vrot.lane.b32.xlu0 %v331, 4
      %v641 = vpop.permute.xlu0 %640
      %642 = vrot.lane.b32.xlu0 %v332, 4
      %v643 = vpop.permute.xlu0 %642
      %644 = vrot.lane.b32.xlu0 %v333, 4
      %v645 = vpop.permute.xlu0 %644
      %646 = vrot.lane.b32.xlu0 %v334, 4
      %v647 = vpop.permute.xlu0 %646
      %648 = vrot.lane.b32.xlu0 %v335, 4
      %v649 = vpop.permute.xlu0 %648
      %650 = vrot.lane.b32.xlu0 %v336, 4
      %v651 = vpop.permute.xlu0 %650
      %652 = vrot.lane.b32.xlu0 %v337, 4
      %v653 = vpop.permute.xlu0 %652
      %654 = vrot.lane.b32.xlu0 %v338, 4
      %v655 = vpop.permute.xlu0 %654
      %656 = vrot.lane.b32.xlu0 %v339, 4
      %v657 = vpop.permute.xlu0 %656
      %658 = vrot.lane.b32.xlu0 %v340, 4
      %v659 = vpop.permute.xlu0 %658
      %660 = vrot.lane.b32.xlu0 %v341, 4
      %v661 = vpop.permute.xlu0 %660
      %662 = vrot.lane.b32.xlu0 %v342, 4
      %v663 = vpop.permute.xlu0 %662
      %664 = vrot.lane.b32.xlu0 %v343, 4
      %v665 = vpop.permute.xlu0 %664
      %730 = vrot.lane.b32.xlu0 %v344, 8
      %v731 = vpop.permute.xlu0 %730
      %732 = vrot.lane.b32.xlu0 %v345, 8
      %v733 = vpop.permute.xlu0 %732
      %734 = vrot.lane.b32.xlu0 %v346, 8
      %v735 = vpop.permute.xlu0 %734
      %736 = vrot.lane.b32.xlu0 %v347, 8
      %v737 = vpop.permute.xlu0 %736
      %738 = vrot.lane.b32.xlu0 %v348, 8
      %v739 = vpop.permute.xlu0 %738
      %740 = vrot.lane.b32.xlu0 %v349, 8
      %v741 = vpop.permute.xlu0 %740
      %742 = vrot.lane.b32.xlu0 %v350, 8
      %v743 = vpop.permute.xlu0 %742
      %744 = vrot.lane.b32.xlu0 %v351, 8
      %v745 = vpop.permute.xlu0 %744
      %746 = vrot.lane.b32.xlu0 %v352, 8
      %v747 = vpop.permute.xlu0 %746
      %748 = vrot.lane.b32.xlu0 %v353, 8
      %v749 = vpop.permute.xlu0 %748
      %750 = vrot.lane.b32.xlu0 %v354, 8
      %v751 = vpop.permute.xlu0 %750
      %752 = vrot.lane.b32.xlu0 %v355, 8
      %v753 = vpop.permute.xlu0 %752
      %754 = vrot.lane.b32.xlu0 %v356, 8
      %v755 = vpop.permute.xlu0 %754
      %756 = vrot.lane.b32.xlu0 %v357, 8
      %v757 = vpop.permute.xlu0 %756
      %758 = vrot.lane.b32.xlu0 %v358, 8
      %v759 = vpop.permute.xlu0 %758
      %760 = vrot.lane.b32.xlu0 %v359, 8
      %v761 = vpop.permute.xlu0 %760
      %762 = vrot.lane.b32.xlu0 %v360, 8
      %v763 = vpop.permute.xlu0 %762
      %764 = vrot.lane.b32.xlu0 %v361, 8
      %v765 = vpop.permute.xlu0 %764
      %766 = vrot.lane.b32.xlu0 %v362, 8
      %v767 = vpop.permute.xlu0 %766
      %768 = vrot.lane.b32.xlu0 %v363, 8
      %v769 = vpop.permute.xlu0 %768
      %770 = vrot.lane.b32.xlu0 %v364, 8
      %v771 = vpop.permute.xlu0 %770
      %772 = vrot.lane.b32.xlu0 %v365, 8
      %v773 = vpop.permute.xlu0 %772
      %774 = vrot.lane.b32.xlu0 %v366, 8
      %v775 = vpop.permute.xlu0 %774
      %776 = vrot.lane.b32.xlu0 %v367, 8
      %v777 = vpop.permute.xlu0 %776
      %778 = vrot.lane.b32.xlu0 %v368, 8
      %v779 = vpop.permute.xlu0 %778
      %780 = vrot.lane.b32.xlu0 %v369, 8
      %v781 = vpop.permute.xlu0 %780
      %782 = vrot.lane.b32.xlu0 %v370, 8
      %v783 = vpop.permute.xlu0 %782
      %784 = vrot.lane.b32.xlu0 %v371, 8
      %v785 = vpop.permute.xlu0 %784
      %786 = vrot.lane.b32.xlu0 %v372, 8
      %v787 = vpop.permute.xlu0 %786
      %788 = vrot.lane.b32.xlu0 %v373, 8
      %v789 = vpop.permute.xlu0 %788
      %790 = vrot.lane.b32.xlu0 %v374, 8
      %v791 = vpop.permute.xlu0 %790
      %792 = vrot.lane.b32.xlu0 %v375, 8
      %v793 = vpop.permute.xlu0 %792
      %858 = vrot.lane.b32.xlu0 %v377, 12
      %v859 = vpop.permute.xlu0 %858
      %860 = vrot.lane.b32.xlu0 %v378, 12
      %v861 = vpop.permute.xlu0 %860
      %862 = vrot.lane.b32.xlu0 %v379, 12
      %v863 = vpop.permute.xlu0 %862
      %864 = vrot.lane.b32.xlu0 %v380, 12
      %v865 = vpop.permute.xlu0 %864
      %866 = vrot.lane.b32.xlu0 %v381, 12
      %v867 = vpop.permute.xlu0 %866
      %868 = vrot.lane.b32.xlu0 %v382, 12
      %v869 = vpop.permute.xlu0 %868
      %870 = vrot.lane.b32.xlu0 %v383, 12
      %v871 = vpop.permute.xlu0 %870
      %872 = vrot.lane.b32.xlu0 %v384, 12
      %v873 = vpop.permute.xlu0 %872
      %874 = vrot.lane.b32.xlu0 %v385, 12
      %v875 = vpop.permute.xlu0 %874
      %876 = vrot.lane.b32.xlu0 %v386, 12
      %v877 = vpop.permute.xlu0 %876
      %878 = vrot.lane.b32.xlu0 %v387, 12
      %v879 = vpop.permute.xlu0 %878
      %880 = vrot.lane.b32.xlu0 %v388, 12
      %v881 = vpop.permute.xlu0 %880
      %882 = vrot.lane.b32.xlu0 %v389, 12
      %v883 = vpop.permute.xlu0 %882
      %884 = vrot.lane.b32.xlu0 %v390, 12
      %v885 = vpop.permute.xlu0 %884
      %886 = vrot.lane.b32.xlu0 %v391, 12
      %v887 = vpop.permute.xlu0 %886
      %888 = vrot.lane.b32.xlu0 %v392, 12
      %v889 = vpop.permute.xlu0 %888
      %890 = vrot.lane.b32.xlu0 %v393, 12
      %v891 = vpop.permute.xlu0 %890
      %892 = vrot.lane.b32.xlu0 %v394, 12
      %v893 = vpop.permute.xlu0 %892
      %894 = vrot.lane.b32.xlu0 %v395, 12
      %v895 = vpop.permute.xlu0 %894
      %896 = vrot.lane.b32.xlu0 %v396, 12
      %v897 = vpop.permute.xlu0 %896
      %898 = vrot.lane.b32.xlu0 %v397, 12
      %v899 = vpop.permute.xlu0 %898
      %900 = vrot.lane.b32.xlu0 %v398, 12
      %v901 = vpop.permute.xlu0 %900
      %902 = vrot.lane.b32.xlu0 %v399, 12
      %v903 = vpop.permute.xlu0 %902
      %904 = vrot.lane.b32.xlu0 %v400, 12
      %v905 = vpop.permute.xlu0 %904
      %906 = vrot.lane.b32.xlu0 %v401, 12
      %v907 = vpop.permute.xlu0 %906
      %908 = vrot.lane.b32.xlu0 %v402, 12
      %v909 = vpop.permute.xlu0 %908
      %910 = vrot.lane.b32.xlu0 %v403, 12
      %v911 = vpop.permute.xlu0 %910
      %912 = vrot.lane.b32.xlu0 %v404, 12
      %v913 = vpop.permute.xlu0 %912
      %914 = vrot.lane.b32.xlu0 %v405, 12
      %v915 = vpop.permute.xlu0 %914
      %916 = vrot.lane.b32.xlu0 %v406, 12
      %v917 = vpop.permute.xlu0 %916
      %918 = vrot.lane.b32.xlu0 %v407, 12
      %v919 = vpop.permute.xlu0 %918
      %920 = vrot.lane.b32.xlu0 %v408, 12
      %v921 = vpop.permute.xlu0 %920
      %986 = vrot.lane.b32.xlu0 %v409, 16
      %v987 = vpop.permute.xlu0 %986
      %988 = vrot.lane.b32.xlu0 %v410, 16
      %v989 = vpop.permute.xlu0 %988
      %990 = vrot.lane.b32.xlu0 %v411, 16
      %v991 = vpop.permute.xlu0 %990
      %992 = vrot.lane.b32.xlu0 %v412, 16
      %v993 = vpop.permute.xlu0 %992
      %994 = vrot.lane.b32.xlu0 %v413, 16
      %v995 = vpop.permute.xlu0 %994
      %996 = vrot.lane.b32.xlu0 %v414, 16
      %v997 = vpop.permute.xlu0 %996
      %998 = vrot.lane.b32.xlu0 %v415, 16
      %v999 = vpop.permute.xlu0 %998
      %1000 = vrot.lane.b32.xlu0 %v416, 16
      %v1001 = vpop.permute.xlu0 %1000
      %1002 = vrot.lane.b32.xlu0 %v417, 16
      %v1003 = vpop.permute.xlu0 %1002
      %1004 = vrot.lane.b32.xlu0 %v418, 16
      %v1005 = vpop.permute.xlu0 %1004
      %1006 = vrot.lane.b32.xlu0 %v419, 16
      %v1007 = vpop.permute.xlu0 %1006
      %1008 = vrot.lane.b32.xlu0 %v420, 16
      %v1009 = vpop.permute.xlu0 %1008
      %1010 = vrot.lane.b32.xlu0 %v421, 16
      %v1011 = vpop.permute.xlu0 %1010
      %1012 = vrot.lane.b32.xlu0 %v422, 16
      %v1013 = vpop.permute.xlu0 %1012
      %1014 = vrot.lane.b32.xlu0 %v423, 16
      %v1015 = vpop.permute.xlu0 %1014
      %1016 = vrot.lane.b32.xlu0 %v424, 16
      %v1017 = vpop.permute.xlu0 %1016
      %1018 = vrot.lane.b32.xlu0 %v425, 16
      %v1019 = vpop.permute.xlu0 %1018
      %1020 = vrot.lane.b32.xlu0 %v426, 16
      %v1021 = vpop.permute.xlu0 %1020
      %1022 = vrot.lane.b32.xlu0 %v427, 16
      %v1023 = vpop.permute.xlu0 %1022
      %1024 = vrot.lane.b32.xlu0 %v428, 16
      %v1025 = vpop.permute.xlu0 %1024
      %1026 = vrot.lane.b32.xlu0 %v429, 16
      %v1027 = vpop.permute.xlu0 %1026
      %1028 = vrot.lane.b32.xlu0 %v430, 16
      %v1029 = vpop.permute.xlu0 %1028
      %1030 = vrot.lane.b32.xlu0 %v431, 16
      %v1031 = vpop.permute.xlu0 %1030
      %1032 = vrot.lane.b32.xlu0 %v432, 16
      %v1033 = vpop.permute.xlu0 %1032
      %1034 = vrot.lane.b32.xlu0 %v433, 16
      %v1035 = vpop.permute.xlu0 %1034
      %1036 = vrot.lane.b32.xlu0 %v434, 16
      %v1037 = vpop.permute.xlu0 %1036
      %1038 = vrot.lane.b32.xlu0 %v435, 16
      %v1039 = vpop.permute.xlu0 %1038
      %1040 = vrot.lane.b32.xlu0 %v436, 16
      %v1041 = vpop.permute.xlu0 %1040
      %1042 = vrot.lane.b32.xlu0 %v437, 16
      %v1043 = vpop.permute.xlu0 %1042
      %1044 = vrot.lane.b32.xlu0 %v438, 16
      %v1045 = vpop.permute.xlu0 %1044
      %1046 = vrot.lane.b32.xlu0 %v439, 16
      %v1047 = vpop.permute.xlu0 %1046
      %1048 = vrot.lane.b32.xlu0 %v440, 16
      %v1049 = vpop.permute.xlu0 %1048
      %1114 = vrot.lane.b32.xlu0 %v441, 20
      %v1115 = vpop.permute.xlu0 %1114
      %1116 = vrot.lane.b32.xlu0 %v442, 20
      %v1117 = vpop.permute.xlu0 %1116
      %1118 = vrot.lane.b32.xlu0 %v443, 20
      %v1119 = vpop.permute.xlu0 %1118
      %1120 = vrot.lane.b32.xlu0 %v444, 20
      %v1121 = vpop.permute.xlu0 %1120
      %1122 = vrot.lane.b32.xlu0 %v445, 20
      %v1123 = vpop.permute.xlu0 %1122
      %1124 = vrot.lane.b32.xlu0 %v446, 20
      %v1125 = vpop.permute.xlu0 %1124
      %1126 = vrot.lane.b32.xlu0 %v447, 20
      %v1127 = vpop.permute.xlu0 %1126
      %1128 = vrot.lane.b32.xlu0 %v448, 20
      %v1129 = vpop.permute.xlu0 %1128
      %1130 = vrot.lane.b32.xlu0 %v449, 20
      %v1131 = vpop.permute.xlu0 %1130
      %1132 = vrot.lane.b32.xlu0 %v450, 20
      %v1133 = vpop.permute.xlu0 %1132
      %1134 = vrot.lane.b32.xlu0 %v451, 20
      %v1135 = vpop.permute.xlu0 %1134
      %1136 = vrot.lane.b32.xlu0 %v452, 20
      %v1137 = vpop.permute.xlu0 %1136
      %1138 = vrot.lane.b32.xlu0 %v453, 20
      %v1139 = vpop.permute.xlu0 %1138
      %1140 = vrot.lane.b32.xlu0 %v454, 20
      %v1141 = vpop.permute.xlu0 %1140
      %1142 = vrot.lane.b32.xlu0 %v455, 20
      %v1143 = vpop.permute.xlu0 %1142
      %1144 = vrot.lane.b32.xlu0 %v456, 20
      %v1145 = vpop.permute.xlu0 %1144
      %1146 = vrot.lane.b32.xlu0 %v457, 20
      %v1147 = vpop.permute.xlu0 %1146
      %1148 = vrot.lane.b32.xlu0 %v458, 20
      %v1149 = vpop.permute.xlu0 %1148
      %1150 = vrot.lane.b32.xlu0 %v459, 20
      %v1151 = vpop.permute.xlu0 %1150
      %1152 = vrot.lane.b32.xlu0 %v460, 20
      %v1153 = vpop.permute.xlu0 %1152
      %1154 = vrot.lane.b32.xlu0 %v461, 20
      %v1155 = vpop.permute.xlu0 %1154
      %1156 = vrot.lane.b32.xlu0 %v462, 20
      %v1157 = vpop.permute.xlu0 %1156
      %1158 = vrot.lane.b32.xlu0 %v463, 20
      %v1159 = vpop.permute.xlu0 %1158
      %1160 = vrot.lane.b32.xlu0 %v464, 20
      %v1161 = vpop.permute.xlu0 %1160
      %1162 = vrot.lane.b32.xlu0 %v465, 20
      %v1163 = vpop.permute.xlu0 %1162
      %1164 = vrot.lane.b32.xlu0 %v466, 20
      %v1165 = vpop.permute.xlu0 %1164
      %1166 = vrot.lane.b32.xlu0 %v467, 20
      %v1167 = vpop.permute.xlu0 %1166
      %1168 = vrot.lane.b32.xlu0 %v468, 20
      %v1169 = vpop.permute.xlu0 %1168
      %1170 = vrot.lane.b32.xlu0 %v469, 20
      %v1171 = vpop.permute.xlu0 %1170
      %1172 = vrot.lane.b32.xlu0 %v470, 20
      %v1173 = vpop.permute.xlu0 %1172
      %1174 = vrot.lane.b32.xlu0 %v471, 20
      %v1175 = vpop.permute.xlu0 %1174
      %1176 = vrot.lane.b32.xlu0 %v472, 20
      %v1177 = vpop.permute.xlu0 %1176
      %1242 = vrot.lane.b32.xlu0 %v474, 24
      %v1243 = vpop.permute.xlu0 %1242
      %1244 = vrot.lane.b32.xlu0 %v475, 24
      %v1245 = vpop.permute.xlu0 %1244
      %1246 = vrot.lane.b32.xlu0 %v476, 24
      %v1247 = vpop.permute.xlu0 %1246
      %1248 = vrot.lane.b32.xlu0 %v477, 24
      %v1249 = vpop.permute.xlu0 %1248
      %1250 = vrot.lane.b32.xlu0 %v478, 24
      %v1251 = vpop.permute.xlu0 %1250
      %1252 = vrot.lane.b32.xlu0 %v479, 24
      %v1253 = vpop.permute.xlu0 %1252
      %1254 = vrot.lane.b32.xlu0 %v480, 24
      %v1255 = vpop.permute.xlu0 %1254
      %1256 = vrot.lane.b32.xlu0 %v481, 24
      %v1257 = vpop.permute.xlu0 %1256
      %1258 = vrot.lane.b32.xlu0 %v482, 24
      %v1259 = vpop.permute.xlu0 %1258
      %1260 = vrot.lane.b32.xlu0 %v483, 24
      %v1261 = vpop.permute.xlu0 %1260
      %1262 = vrot.lane.b32.xlu0 %v484, 24
      %v1263 = vpop.permute.xlu0 %1262
      %1264 = vrot.lane.b32.xlu0 %v485, 24
      %v1265 = vpop.permute.xlu0 %1264
      %1266 = vrot.lane.b32.xlu0 %v486, 24
      %v1267 = vpop.permute.xlu0 %1266
      %1268 = vrot.lane.b32.xlu0 %v487, 24
      %v1269 = vpop.permute.xlu0 %1268
      %1270 = vrot.lane.b32.xlu0 %v488, 24
      %v1271 = vpop.permute.xlu0 %1270
      %1272 = vrot.lane.b32.xlu0 %v489, 24
      %v1273 = vpop.permute.xlu0 %1272
      %1274 = vrot.lane.b32.xlu0 %v490, 24
      %v1275 = vpop.permute.xlu0 %1274
      %1276 = vrot.lane.b32.xlu0 %v491, 24
      %v1277 = vpop.permute.xlu0 %1276
      %1278 = vrot.lane.b32.xlu0 %v492, 24
      %v1279 = vpop.permute.xlu0 %1278
      %1280 = vrot.lane.b32.xlu0 %v493, 24
      %v1281 = vpop.permute.xlu0 %1280
      %1282 = vrot.lane.b32.xlu0 %v494, 24
      %v1283 = vpop.permute.xlu0 %1282
      %1284 = vrot.lane.b32.xlu0 %v495, 24
      %v1285 = vpop.permute.xlu0 %1284
      %1286 = vrot.lane.b32.xlu0 %v496, 24
      %v1287 = vpop.permute.xlu0 %1286
      %1288 = vrot.lane.b32.xlu0 %v497, 24
      %v1289 = vpop.permute.xlu0 %1288
      %1290 = vrot.lane.b32.xlu0 %v498, 24
      %v1291 = vpop.permute.xlu0 %1290
      %1292 = vrot.lane.b32.xlu0 %v499, 24
      %v1293 = vpop.permute.xlu0 %1292
      %1294 = vrot.lane.b32.xlu0 %v500, 24
      %v1295 = vpop.permute.xlu0 %1294
      %1296 = vrot.lane.b32.xlu0 %v501, 24
      %v1297 = vpop.permute.xlu0 %1296
      %1298 = vrot.lane.b32.xlu0 %v502, 24
      %v1299 = vpop.permute.xlu0 %1298
      %1300 = vrot.lane.b32.xlu0 %v503, 24
      %v1301 = vpop.permute.xlu0 %1300
      %1302 = vrot.lane.b32.xlu0 %v504, 24
      %v1303 = vpop.permute.xlu0 %1302
      %1304 = vrot.lane.b32.xlu0 %v505, 24
      %v1305 = vpop.permute.xlu0 %1304
      %1370 = vrot.lane.b32.xlu0 %v506, 28
      %v1371 = vpop.permute.xlu0 %1370
      %1372 = vrot.lane.b32.xlu0 %v507, 28
      %v1373 = vpop.permute.xlu0 %1372
      %1374 = vrot.lane.b32.xlu0 %v508, 28
      %v1375 = vpop.permute.xlu0 %1374
      %1376 = vrot.lane.b32.xlu0 %v509, 28
      %v1377 = vpop.permute.xlu0 %1376
      %1378 = vrot.lane.b32.xlu0 %v510, 28
      %v1379 = vpop.permute.xlu0 %1378
      %1380 = vrot.lane.b32.xlu0 %v511, 28
      %v1381 = vpop.permute.xlu0 %1380
      %1382 = vrot.lane.b32.xlu0 %v512, 28
      %v1383 = vpop.permute.xlu0 %1382
      %1384 = vrot.lane.b32.xlu0 %v513, 28
      %v1385 = vpop.permute.xlu0 %1384
      %1386 = vrot.lane.b32.xlu0 %v514, 28
      %v1387 = vpop.permute.xlu0 %1386
      %1388 = vrot.lane.b32.xlu0 %v515, 28
      %v1389 = vpop.permute.xlu0 %1388
      %1390 = vrot.lane.b32.xlu0 %v516, 28
      %v1391 = vpop.permute.xlu0 %1390
      %1392 = vrot.lane.b32.xlu0 %v517, 28
      %v1393 = vpop.permute.xlu0 %1392
      %1394 = vrot.lane.b32.xlu0 %v518, 28
      %v1395 = vpop.permute.xlu0 %1394
      %1396 = vrot.lane.b32.xlu0 %v519, 28
      %v1397 = vpop.permute.xlu0 %1396
      %1398 = vrot.lane.b32.xlu0 %v520, 28
      %v1399 = vpop.permute.xlu0 %1398
      %1400 = vrot.lane.b32.xlu0 %v521, 28
      %v1401 = vpop.permute.xlu0 %1400
      %1402 = vrot.lane.b32.xlu0 %v522, 28
      %v1403 = vpop.permute.xlu0 %1402
      %1404 = vrot.lane.b32.xlu0 %v523, 28
      %v1405 = vpop.permute.xlu0 %1404
      %1406 = vrot.lane.b32.xlu0 %v524, 28
      %v1407 = vpop.permute.xlu0 %1406
      %1408 = vrot.lane.b32.xlu0 %v525, 28
      %v1409 = vpop.permute.xlu0 %1408
      %1410 = vrot.lane.b32.xlu0 %v526, 28
      %v1411 = vpop.permute.xlu0 %1410
      %1412 = vrot.lane.b32.xlu0 %v527, 28
      %v1413 = vpop.permute.xlu0 %1412
      %1414 = vrot.lane.b32.xlu0 %v528, 28
      %v1415 = vpop.permute.xlu0 %1414
      %1416 = vrot.lane.b32.xlu0 %v529, 28
      %v1417 = vpop.permute.xlu0 %1416
      %1418 = vrot.lane.b32.xlu0 %v530, 28
      %v1419 = vpop.permute.xlu0 %1418
      %1420 = vrot.lane.b32.xlu0 %v531, 28
      %v1421 = vpop.permute.xlu0 %1420
      %1422 = vrot.lane.b32.xlu0 %v532, 28
      %v1423 = vpop.permute.xlu0 %1422
      %1424 = vrot.lane.b32.xlu0 %v533, 28
      %v1425 = vpop.permute.xlu0 %1424
      %1426 = vrot.lane.b32.xlu0 %v534, 28
      %v1427 = vpop.permute.xlu0 %1426
      %1428 = vrot.lane.b32.xlu0 %v535, 28
      %v1429 = vpop.permute.xlu0 %1428
      %1430 = vrot.lane.b32.xlu0 %v536, 28
      %v1431 = vpop.permute.xlu0 %1430
      %1432 = vrot.lane.b32.xlu0 %v537, 28
      %v1433 = vpop.permute.xlu0 %1432
      %1498 = vrot.lane.b32.xlu0 %v538, 32
      %v1499 = vpop.permute.xlu0 %1498
      %1500 = vrot.lane.b32.xlu0 %v539, 32
      %v1501 = vpop.permute.xlu0 %1500
      %1502 = vrot.lane.b32.xlu0 %v540, 32
      %v1503 = vpop.permute.xlu0 %1502
      %1504 = vrot.lane.b32.xlu0 %v541, 32
      %v1505 = vpop.permute.xlu0 %1504
      %1506 = vrot.lane.b32.xlu0 %v542, 32
      %v1507 = vpop.permute.xlu0 %1506
      %1508 = vrot.lane.b32.xlu0 %v543, 32
      %v1509 = vpop.permute.xlu0 %1508
      %1510 = vrot.lane.b32.xlu0 %v544, 32
      %v1511 = vpop.permute.xlu0 %1510
      %1512 = vrot.lane.b32.xlu0 %v545, 32
      %v1513 = vpop.permute.xlu0 %1512
      %1514 = vrot.lane.b32.xlu0 %v546, 32
      %v1515 = vpop.permute.xlu0 %1514
      %1516 = vrot.lane.b32.xlu0 %v547, 32
      %v1517 = vpop.permute.xlu0 %1516
      %1518 = vrot.lane.b32.xlu0 %v548, 32
      %v1519 = vpop.permute.xlu0 %1518
      %1520 = vrot.lane.b32.xlu0 %v549, 32
      %v1521 = vpop.permute.xlu0 %1520
      %1522 = vrot.lane.b32.xlu0 %v550, 32
      %v1523 = vpop.permute.xlu0 %1522
      %1524 = vrot.lane.b32.xlu0 %v551, 32
      %v1525 = vpop.permute.xlu0 %1524
      %1526 = vrot.lane.b32.xlu0 %v552, 32
      %v1527 = vpop.permute.xlu0 %1526
      %1528 = vrot.lane.b32.xlu0 %v553, 32
      %v1529 = vpop.permute.xlu0 %1528
      %1530 = vrot.lane.b32.xlu0 %v554, 32
      %v1531 = vpop.permute.xlu0 %1530
      %1532 = vrot.lane.b32.xlu0 %v555, 32
      %v1533 = vpop.permute.xlu0 %1532
      %1534 = vrot.lane.b32.xlu0 %v556, 32
      %v1535 = vpop.permute.xlu0 %1534
      %1536 = vrot.lane.b32.xlu0 %v557, 32
      %v1537 = vpop.permute.xlu0 %1536
      %1538 = vrot.lane.b32.xlu0 %v558, 32
      %v1539 = vpop.permute.xlu0 %1538
      %1540 = vrot.lane.b32.xlu0 %v559, 32
      %v1541 = vpop.permute.xlu0 %1540
      %1542 = vrot.lane.b32.xlu0 %v560, 32
      %v1543 = vpop.permute.xlu0 %1542
      %1544 = vrot.lane.b32.xlu0 %v561, 32
      %v1545 = vpop.permute.xlu0 %1544
      %1546 = vrot.lane.b32.xlu0 %v562, 32
      %v1547 = vpop.permute.xlu0 %1546
      %1548 = vrot.lane.b32.xlu0 %v563, 32
      %v1549 = vpop.permute.xlu0 %1548
      %1550 = vrot.lane.b32.xlu0 %v564, 32
      %v1551 = vpop.permute.xlu0 %1550
      %1552 = vrot.lane.b32.xlu0 %v565, 32
      %v1553 = vpop.permute.xlu0 %1552
      %1554 = vrot.lane.b32.xlu0 %v566, 32
      %v1555 = vpop.permute.xlu0 %1554
      %1556 = vrot.lane.b32.xlu0 %v567, 32
      %v1557 = vpop.permute.xlu0 %1556
      %1558 = vrot.lane.b32.xlu0 %v568, 32
      %v1559 = vpop.permute.xlu0 %1558
      %1560 = vrot.lane.b32.xlu0 %v569, 32
      %v1561 = vpop.permute.xlu0 %1560
      %vm1594 = vcmask 31744
      %v1595 = vsel %vm1594, %v280, %v603
      %v1596 = vsel %vm1594, %v281, %v605
      %v1597 = vsel %vm1594, %v282, %v607
      %v1598 = vsel %vm1594, %v283, %v609
      %v1599 = vsel %vm1594, %v284, %v611
      %v1600 = vsel %vm1594, %v285, %v613
      %v1601 = vsel %vm1594, %v286, %v615
      %v1602 = vsel %vm1594, %v287, %v617
      %v1603 = vsel %vm1594, %v288, %v619
      %v1604 = vsel %vm1594, %v289, %v621
      %v1605 = vsel %vm1594, %v290, %v623
      %v1606 = vsel %vm1594, %v291, %v625
      %v1607 = vsel %vm1594, %v292, %v627
      %v1608 = vsel %vm1594, %v293, %v629
      %v1609 = vsel %vm1594, %v294, %v631
      %v1610 = vsel %vm1594, %v295, %v633
      %v1611 = vsel %vm1594, %v296, %v635
      %v1612 = vsel %vm1594, %v297, %v637
      %v1613 = vsel %vm1594, %v298, %v639
      %v1614 = vsel %vm1594, %v299, %v641
      %v1615 = vsel %vm1594, %v300, %v643
      %v1616 = vsel %vm1594, %v301, %v645
      %v1617 = vsel %vm1594, %v302, %v647
      %v1618 = vsel %vm1594, %v303, %v649
      %v1619 = vsel %vm1594, %v304, %v651
      %v1620 = vsel %vm1594, %v305, %v653
      %v1621 = vsel %vm1594, %v306, %v655
      %v1622 = vsel %vm1594, %v307, %v657
      %v1623 = vsel %vm1594, %v308, %v659
      %v1624 = vsel %vm1594, %v309, %v661
      %v1625 = vsel %vm1594, %v310, %v663
      %v1626 = vsel %vm1594, %v311, %v665
      %vm1627 = vcmask 64512
      %v1628 = vsel %vm1627, %v1595, %v731
      %v1629 = vsel %vm1627, %v1596, %v733
      %v1630 = vsel %vm1627, %v1597, %v735
      %v1631 = vsel %vm1627, %v1598, %v737
      %v1632 = vsel %vm1627, %v1599, %v739
      %v1633 = vsel %vm1627, %v1600, %v741
      %v1634 = vsel %vm1627, %v1601, %v743
      %v1635 = vsel %vm1627, %v1602, %v745
      %v1636 = vsel %vm1627, %v1603, %v747
      %v1637 = vsel %vm1627, %v1604, %v749
      %v1638 = vsel %vm1627, %v1605, %v751
      %v1639 = vsel %vm1627, %v1606, %v753
      %v1640 = vsel %vm1627, %v1607, %v755
      %v1641 = vsel %vm1627, %v1608, %v757
      %v1642 = vsel %vm1627, %v1609, %v759
      %v1643 = vsel %vm1627, %v1610, %v761
      %v1644 = vsel %vm1627, %v1611, %v763
      %v1645 = vsel %vm1627, %v1612, %v765
      %v1646 = vsel %vm1627, %v1613, %v767
      %v1647 = vsel %vm1627, %v1614, %v769
      %v1648 = vsel %vm1627, %v1615, %v771
      %v1649 = vsel %vm1627, %v1616, %v773
      %v1650 = vsel %vm1627, %v1617, %v775
      %v1651 = vsel %vm1627, %v1618, %v777
      %v1652 = vsel %vm1627, %v1619, %v779
      %v1653 = vsel %vm1627, %v1620, %v781
      %v1654 = vsel %vm1627, %v1621, %v783
      %v1655 = vsel %vm1627, %v1622, %v785
      %v1656 = vsel %vm1627, %v1623, %v787
      %v1657 = vsel %vm1627, %v1624, %v789
      %v1658 = vsel %vm1627, %v1625, %v791
      %v1659 = vsel %vm1627, %v1626, %v793
      %vm1660 = vcmask 97280
      %v1661 = vsel %vm1660, %v1628, %v859
      %v1662 = vsel %vm1660, %v1629, %v861
      %v1663 = vsel %vm1660, %v1630, %v863
      %v1664 = vsel %vm1660, %v1631, %v865
      %v1665 = vsel %vm1660, %v1632, %v867
      %v1666 = vsel %vm1660, %v1633, %v869
      %v1667 = vsel %vm1660, %v1634, %v871
      %v1668 = vsel %vm1660, %v1635, %v873
      %v1669 = vsel %vm1660, %v1636, %v875
      %v1670 = vsel %vm1660, %v1637, %v877
      %v1671 = vsel %vm1660, %v1638, %v879
      %v1672 = vsel %vm1660, %v1639, %v881
      %v1673 = vsel %vm1660, %v1640, %v883
      %v1674 = vsel %vm1660, %v1641, %v885
      %v1675 = vsel %vm1660, %v1642, %v887
      %v1676 = vsel %vm1660, %v1643, %v889
      %v1677 = vsel %vm1660, %v1644, %v891
      %v1678 = vsel %vm1660, %v1645, %v893
      %v1679 = vsel %vm1660, %v1646, %v895
      %v1680 = vsel %vm1660, %v1647, %v897
      %v1681 = vsel %vm1660, %v1648, %v899
      %v1682 = vsel %vm1660, %v1649, %v901
      %v1683 = vsel %vm1660, %v1650, %v903
      %v1684 = vsel %vm1660, %v1651, %v905
      %v1685 = vsel %vm1660, %v1652, %v907
      %v1686 = vsel %vm1660, %v1653, %v909
      %v1687 = vsel %vm1660, %v1654, %v911
      %v1688 = vsel %vm1660, %v1655, %v913
      %v1689 = vsel %vm1660, %v1656, %v915
      %v1690 = vsel %vm1660, %v1657, %v917
      %v1691 = vsel %vm1660, %v1658, %v919
      %v1692 = vsel %vm1660, %v1659, %v921
      %vm1693 = vcmask 130048
      %v1694 = vsel %vm1693, %v1661, %v987
      %v1695 = vsel %vm1693, %v1662, %v989
      %v1696 = vsel %vm1693, %v1663, %v991
      %v1697 = vsel %vm1693, %v1664, %v993
      %v1698 = vsel %vm1693, %v1665, %v995
      %v1699 = vsel %vm1693, %v1666, %v997
      %v1700 = vsel %vm1693, %v1667, %v999
      %v1701 = vsel %vm1693, %v1668, %v1001
      %v1702 = vsel %vm1693, %v1669, %v1003
      %v1703 = vsel %vm1693, %v1670, %v1005
      %v1704 = vsel %vm1693, %v1671, %v1007
      %v1705 = vsel %vm1693, %v1672, %v1009
      %v1706 = vsel %vm1693, %v1673, %v1011
      %v1707 = vsel %vm1693, %v1674, %v1013
      %v1708 = vsel %vm1693, %v1675, %v1015
      %v1709 = vsel %vm1693, %v1676, %v1017
      %v1710 = vsel %vm1693, %v1677, %v1019
      %v1711 = vsel %vm1693, %v1678, %v1021
      %v1712 = vsel %vm1693, %v1679, %v1023
      %v1713 = vsel %vm1693, %v1680, %v1025
      %v1714 = vsel %vm1693, %v1681, %v1027
      %v1715 = vsel %vm1693, %v1682, %v1029
      %v1716 = vsel %vm1693, %v1683, %v1031
      %v1717 = vsel %vm1693, %v1684, %v1033
      %v1718 = vsel %vm1693, %v1685, %v1035
      %v1719 = vsel %vm1693, %v1686, %v1037
      %v1720 = vsel %vm1693, %v1687, %v1039
      %v1721 = vsel %vm1693, %v1688, %v1041
      %v1722 = vsel %vm1693, %v1689, %v1043
      %v1723 = vsel %vm1693, %v1690, %v1045
      %v1724 = vsel %vm1693, %v1691, %v1047
      %v1725 = vsel %vm1693, %v1692, %v1049
      %vm1726 = vcmask 162816
      %v1727 = vsel %vm1726, %v1694, %v1115
      %v1728 = vsel %vm1726, %v1695, %v1117
      %v1729 = vsel %vm1726, %v1696, %v1119
      %v1730 = vsel %vm1726, %v1697, %v1121
      %v1731 = vsel %vm1726, %v1698, %v1123
      %v1732 = vsel %vm1726, %v1699, %v1125
      %v1733 = vsel %vm1726, %v1700, %v1127
      %v1734 = vsel %vm1726, %v1701, %v1129
      %v1735 = vsel %vm1726, %v1702, %v1131
      %v1736 = vsel %vm1726, %v1703, %v1133
      %v1737 = vsel %vm1726, %v1704, %v1135
      %v1738 = vsel %vm1726, %v1705, %v1137
      %v1739 = vsel %vm1726, %v1706, %v1139
      %v1740 = vsel %vm1726, %v1707, %v1141
      %v1741 = vsel %vm1726, %v1708, %v1143
      %v1742 = vsel %vm1726, %v1709, %v1145
      %v1743 = vsel %vm1726, %v1710, %v1147
      %v1744 = vsel %vm1726, %v1711, %v1149
      %v1745 = vsel %vm1726, %v1712, %v1151
      %v1746 = vsel %vm1726, %v1713, %v1153
      %v1747 = vsel %vm1726, %v1714, %v1155
      %v1748 = vsel %vm1726, %v1715, %v1157
      %v1749 = vsel %vm1726, %v1716, %v1159
      %v1750 = vsel %vm1726, %v1717, %v1161
      %v1751 = vsel %vm1726, %v1718, %v1163
      %v1752 = vsel %vm1726, %v1719, %v1165
      %v1753 = vsel %vm1726, %v1720, %v1167
      %v1754 = vsel %vm1726, %v1721, %v1169
      %v1755 = vsel %vm1726, %v1722, %v1171
      %v1756 = vsel %vm1726, %v1723, %v1173
      %v1757 = vsel %vm1726, %v1724, %v1175
      %v1758 = vsel %vm1726, %v1725, %v1177
      %vm1759 = vcmask 195584
      %v1760 = vsel %vm1759, %v1727, %v1243
      %v1761 = vsel %vm1759, %v1728, %v1245
      %v1762 = vsel %vm1759, %v1729, %v1247
      %v1763 = vsel %vm1759, %v1730, %v1249
      %v1764 = vsel %vm1759, %v1731, %v1251
      %v1765 = vsel %vm1759, %v1732, %v1253
      %v1766 = vsel %vm1759, %v1733, %v1255
      %v1767 = vsel %vm1759, %v1734, %v1257
      %v1768 = vsel %vm1759, %v1735, %v1259
      %v1769 = vsel %vm1759, %v1736, %v1261
      %v1770 = vsel %vm1759, %v1737, %v1263
      %v1771 = vsel %vm1759, %v1738, %v1265
      %v1772 = vsel %vm1759, %v1739, %v1267
      %v1773 = vsel %vm1759, %v1740, %v1269
      %v1774 = vsel %vm1759, %v1741, %v1271
      %v1775 = vsel %vm1759, %v1742, %v1273
      %v1776 = vsel %vm1759, %v1743, %v1275
      %v1777 = vsel %vm1759, %v1744, %v1277
      %v1778 = vsel %vm1759, %v1745, %v1279
      %v1779 = vsel %vm1759, %v1746, %v1281
      %v1780 = vsel %vm1759, %v1747, %v1283
      %v1781 = vsel %vm1759, %v1748, %v1285
      %v1782 = vsel %vm1759, %v1749, %v1287
      %v1783 = vsel %vm1759, %v1750, %v1289
      %v1784 = vsel %vm1759, %v1751, %v1291
      %v1785 = vsel %vm1759, %v1752, %v1293
      %v1786 = vsel %vm1759, %v1753, %v1295
      %v1787 = vsel %vm1759, %v1754, %v1297
      %v1788 = vsel %vm1759, %v1755, %v1299
      %v1789 = vsel %vm1759, %v1756, %v1301
      %v1790 = vsel %vm1759, %v1757, %v1303
      %v1791 = vsel %vm1759, %v1758, %v1305
      %vm1792 = vcmask 228352
      %v1793 = vsel %vm1792, %v1760, %v1371
      %v1794 = vsel %vm1792, %v1761, %v1373
      %v1795 = vsel %vm1792, %v1762, %v1375
      %v1796 = vsel %vm1792, %v1763, %v1377
      %v1797 = vsel %vm1792, %v1764, %v1379
      %v1798 = vsel %vm1792, %v1765, %v1381
      %v1799 = vsel %vm1792, %v1766, %v1383
      %v1800 = vsel %vm1792, %v1767, %v1385
      %v1801 = vsel %vm1792, %v1768, %v1387
      %v1802 = vsel %vm1792, %v1769, %v1389
      %v1803 = vsel %vm1792, %v1770, %v1391
      %v1804 = vsel %vm1792, %v1771, %v1393
      %v1805 = vsel %vm1792, %v1772, %v1395
      %v1806 = vsel %vm1792, %v1773, %v1397
      %v1807 = vsel %vm1792, %v1774, %v1399
      %v1808 = vsel %vm1792, %v1775, %v1401
      %v1809 = vsel %vm1792, %v1776, %v1403
      %v1810 = vsel %vm1792, %v1777, %v1405
      %v1811 = vsel %vm1792, %v1778, %v1407
      %v1812 = vsel %vm1792, %v1779, %v1409
      %v1813 = vsel %vm1792, %v1780, %v1411
      %v1814 = vsel %vm1792, %v1781, %v1413
      %v1815 = vsel %vm1792, %v1782, %v1415
      %v1816 = vsel %vm1792, %v1783, %v1417
      %v1817 = vsel %vm1792, %v1784, %v1419
      %v1818 = vsel %vm1792, %v1785, %v1421
      %v1819 = vsel %vm1792, %v1786, %v1423
      %v1820 = vsel %vm1792, %v1787, %v1425
      %v1821 = vsel %vm1792, %v1788, %v1427
      %v1822 = vsel %vm1792, %v1789, %v1429
      %v1823 = vsel %vm1792, %v1790, %v1431
      %v1824 = vsel %vm1792, %v1791, %v1433
      %vm1825 = vcmask 261120
      %v1826 = vsel %vm1825, %v1793, %v1499
      %v1827 = vsel %vm1825, %v1794, %v1501
      %v1828 = vsel %vm1825, %v1795, %v1503
      %v1829 = vsel %vm1825, %v1796, %v1505
      %v1830 = vsel %vm1825, %v1797, %v1507
      %v1831 = vsel %vm1825, %v1798, %v1509
      %v1832 = vsel %vm1825, %v1799, %v1511
      %v1833 = vsel %vm1825, %v1800, %v1513
      %v1834 = vsel %vm1825, %v1801, %v1515
      %v1835 = vsel %vm1825, %v1802, %v1517
      %v1836 = vsel %vm1825, %v1803, %v1519
      %v1837 = vsel %vm1825, %v1804, %v1521
      %v1838 = vsel %vm1825, %v1805, %v1523
      %v1839 = vsel %vm1825, %v1806, %v1525
      %v1840 = vsel %vm1825, %v1807, %v1527
      %v1841 = vsel %vm1825, %v1808, %v1529
      %v1842 = vsel %vm1825, %v1809, %v1531
      %v1843 = vsel %vm1825, %v1810, %v1533
      %v1844 = vsel %vm1825, %v1811, %v1535
      %v1845 = vsel %vm1825, %v1812, %v1537
      %v1846 = vsel %vm1825, %v1813, %v1539
      %v1847 = vsel %vm1825, %v1814, %v1541
      %v1848 = vsel %vm1825, %v1815, %v1543
      %v1849 = vsel %vm1825, %v1816, %v1545
      %v1850 = vsel %vm1825, %v1817, %v1547
      %v1851 = vsel %vm1825, %v1818, %v1549
      %v1852 = vsel %vm1825, %v1819, %v1551
      %v1853 = vsel %vm1825, %v1820, %v1553
      %v1854 = vsel %vm1825, %v1821, %v1555
      %v1855 = vsel %vm1825, %v1822, %v1557
      %v1856 = vsel %vm1825, %v1823, %v1559
      %v1857 = vsel %vm1825, %v1824, %v1561
      %v1858 = vpack.c.bf16 %v1827, %v1826
      %v1859 = vpack.c.bf16 %v1829, %v1828
      %v1860 = vpack.c.bf16 %v1831, %v1830
      %v1861 = vpack.c.bf16 %v1833, %v1832
      %v1862 = vpack.c.bf16 %v1835, %v1834
      %v1863 = vpack.c.bf16 %v1837, %v1836
      %v1864 = vpack.c.bf16 %v1839, %v1838
      %v1865 = vpack.c.bf16 %v1841, %v1840
      %v1866 = vpack.c.bf16 %v1843, %v1842
      %v1867 = vpack.c.bf16 %v1845, %v1844
      %v1868 = vpack.c.bf16 %v1847, %v1846
      %v1869 = vpack.c.bf16 %v1849, %v1848
      %v1870 = vpack.c.bf16 %v1851, %v1850
      %v1871 = vpack.c.bf16 %v1853, %v1852
      %v1872 = vpack.c.bf16 %v1855, %v1854
      %v1873 = vpack.c.bf16 %v1857, %v1856
      %v1874 = vld [vmem:[%s1] sm:$0xf]
      %v1875 = vld [vmem:[%s1 + $0x4] sm:$0xf]
      %v1876 = vld [vmem:[%s1 + $0x8] sm:$0xf]
      %v1877 = vld [vmem:[%s1 + $0xc] sm:$0xf]
      %v1878 = vld [vmem:[%s1 + $0x10] sm:$0x3]
      %v1879 = vld [vmem:[%s2] sm:$0x1]
      %v1881 = vlaneseq
      %v1882 = vshrl.u32 %v1881, 7
      %v1883 = vsub.s32 0, %v1882
      %v1884 = vrot.slane %v1879, %v1883
      %v1891 = vunpack.c.l.b16 %v1874
      %v1892 = vunpack.c.l.b16 %v1875
      %v1893 = vunpack.c.l.b16 %v1876
      %v1894 = vunpack.c.l.b16 %v1877
      %v1895 = vunpack.c.l.b16 %v1878
      %v1896 = vpack.c.b16 %v1892, %v1891
      %v1897 = vpack.c.b16 %v1894, %v1893
      %v1898 = vpack.c.b16 %v1895, %v1895
      %vm1901 = vcmask 293888
      %v1903 = vsel %vm1901, %v1858, 0
      %v1906 = vsel %vm1901, %v1859, 0
      %v1909 = vsel %vm1901, %v1860, 0
      %v1912 = vsel %vm1901, %v1861, 0
      %v1915 = vsel %vm1901, %v1862, 0
      %v1918 = vsel %vm1901, %v1863, 0
      %v1921 = vsel %vm1901, %v1864, 0
      %v1924 = vsel %vm1901, %v1865, 0
      %v1927 = vsel %vm1901, %v1866, 0
      %v1930 = vsel %vm1901, %v1867, 0
      %v1933 = vsel %vm1901, %v1868, 0
      %v1936 = vsel %vm1901, %v1869, 0
      %v1939 = vsel %vm1901, %v1870, 0
      %v1942 = vsel %vm1901, %v1871, 0
      %v1945 = vsel %vm1901, %v1872, 0
      %v1948 = vsel %vm1901, %v1873, 0
      %vm1950 = vcmask 1041408
      %v1952 = vsel %vm1950, %v1898, 0
      %1954 = vmatprep.subr.bf16.mxu0 0
      %1955 = vmatpush1.bf16.msra.mxu0 0
      %1956 = vmatprep.subr.bf16.mxu0 0
      %1957 = vmatpush1.bf16.msra.mxu0 0
      %1958 = vmatprep.subr.bf16.mxu0 0
      %1959 = vmatpush1.bf16.msra.mxu0 0
      %1960 = vmatprep.subr.bf16.mxu0 0
      %1961 = vmatpush1.bf16.msra.mxu0 0
      %1962 = vmatprep.subr.bf16.mxu0 0
      %1963 = vmatpush1.bf16.msra.mxu0 0
      %1964 = vmatprep.subr.bf16.mxu0 0
      %1965 = vmatpush1.bf16.msra.mxu0 %v1952
      %1966 = vmatprep.subr.bf16.mxu0 0
      %1967 = vmatpush1.bf16.msra.mxu0 %v1897
      %1968 = vmatprep.subr.bf16.mxu0 0
      %1969 = vmatpush1.bf16.msra.mxu0 %v1896
      %1970 = vmatprep.subr.bf16.mxu0 0
      %1971 = vmatpush2.bf16.msra.mxu0 0
      %1972 = vmatprep.subr.bf16.mxu0 0
      %1973 = vmatpush2.bf16.msra.mxu0 0
      %1974 = vmatprep.subr.bf16.mxu0 0
      %1975 = vmatpush2.bf16.msra.mxu0 0
      %1976 = vmatprep.subr.bf16.mxu0 0
      %1977 = vmatpush2.bf16.msra.mxu0 0
      %1978 = vmatprep.subr.bf16.mxu0 0
      %1979 = vmatpush2.bf16.msra.mxu0 0
      %1980 = vmatprep.subr.bf16.mxu0 0
      %1981 = vmatpush2.bf16.msra.mxu0 0
      %1982 = vmatprep.subr.bf16.mxu0 0
      %1983 = vmatpush2.bf16.msra.mxu0 0
      %1984 = vmatprep.subr.bf16.mxu0 0
      %1985 = vmatpush2.bf16.msra.mxu0 0
      %1986 = vmatprep.mubr.bf16.mxu0 0
      %1987 = vmatmul.mubr.bf16.gmra.mxu0 %v1903
      %v1988 = vpop.f32.mrf.mxu0
      %v1989 = vadd.f32 %v1884, %v1988
      %v1990 = vpop.f32.mrf.mxu0
      %v1991 = vpop.f32.mrf.mxu0
      %v1992 = vadd.f32 %v1884, %v1991
      %v1993 = vpop.f32.mrf.mxu0
      %1994 = vmatprep.mubr.bf16.mxu0 0
      %1995 = vmatmul.mubr.bf16.gmra.mxu0 %v1906
      %v1996 = vpop.f32.mrf.mxu0
      %v1997 = vadd.f32 %v1884, %v1996
      %v1998 = vpop.f32.mrf.mxu0
      %v1999 = vpop.f32.mrf.mxu0
      %v2000 = vadd.f32 %v1884, %v1999
      %v2001 = vpop.f32.mrf.mxu0
      %2002 = vmatprep.mubr.bf16.mxu0 0
      %2003 = vmatmul.mubr.bf16.gmra.mxu0 %v1909
      %v2004 = vpop.f32.mrf.mxu0
      %v2005 = vadd.f32 %v1884, %v2004
      %v2006 = vpop.f32.mrf.mxu0
      %v2007 = vpop.f32.mrf.mxu0
      %v2008 = vadd.f32 %v1884, %v2007
      %v2009 = vpop.f32.mrf.mxu0
      %2010 = vmatprep.mubr.bf16.mxu0 0
      %2011 = vmatmul.mubr.bf16.gmra.mxu0 %v1912
      %v2012 = vpop.f32.mrf.mxu0
      %v2013 = vadd.f32 %v1884, %v2012
      %v2014 = vpop.f32.mrf.mxu0
      %v2015 = vpop.f32.mrf.mxu0
      %v2016 = vadd.f32 %v1884, %v2015
      %v2017 = vpop.f32.mrf.mxu0
      %2018 = vmatprep.mubr.bf16.mxu0 0
      %2019 = vmatmul.mubr.bf16.gmra.mxu0 %v1915
      %v2020 = vpop.f32.mrf.mxu0
      %v2021 = vadd.f32 %v1884, %v2020
      %v2022 = vpop.f32.mrf.mxu0
      %v2023 = vpop.f32.mrf.mxu0
      %v2024 = vadd.f32 %v1884, %v2023
      %v2025 = vpop.f32.mrf.mxu0
      %2026 = vmatprep.mubr.bf16.mxu0 0
      %2027 = vmatmul.mubr.bf16.gmra.mxu0 %v1918
      %v2028 = vpop.f32.mrf.mxu0
      %v2029 = vadd.f32 %v1884, %v2028
      %v2030 = vpop.f32.mrf.mxu0
      %v2031 = vpop.f32.mrf.mxu0
      %v2032 = vadd.f32 %v1884, %v2031
      %v2033 = vpop.f32.mrf.mxu0
      %2034 = vmatprep.mubr.bf16.mxu0 0
      %2035 = vmatmul.mubr.bf16.gmra.mxu0 %v1921
      %v2036 = vpop.f32.mrf.mxu0
      %v2037 = vadd.f32 %v1884, %v2036
      %v2038 = vpop.f32.mrf.mxu0
      %v2039 = vpop.f32.mrf.mxu0
      %v2040 = vadd.f32 %v1884, %v2039
      %v2041 = vpop.f32.mrf.mxu0
      %2042 = vmatprep.mubr.bf16.mxu0 0
      %2043 = vmatmul.mubr.bf16.gmra.mxu0 %v1924
      %v2044 = vpop.f32.mrf.mxu0
      %v2045 = vadd.f32 %v1884, %v2044
      %v2046 = vpop.f32.mrf.mxu0
      %v2047 = vpop.f32.mrf.mxu0
      %v2048 = vadd.f32 %v1884, %v2047
      %v2049 = vpop.f32.mrf.mxu0
      %2050 = vmatprep.mubr.bf16.mxu0 0
      %2051 = vmatmul.mubr.bf16.gmra.mxu0 %v1927
      %v2052 = vpop.f32.mrf.mxu0
      %v2053 = vadd.f32 %v1884, %v2052
      %v2054 = vpop.f32.mrf.mxu0
      %v2055 = vpop.f32.mrf.mxu0
      %v2056 = vadd.f32 %v1884, %v2055
      %v2057 = vpop.f32.mrf.mxu0
      %2058 = vmatprep.mubr.bf16.mxu0 0
      %2059 = vmatmul.mubr.bf16.gmra.mxu0 %v1930
      %v2060 = vpop.f32.mrf.mxu0
      %v2061 = vadd.f32 %v1884, %v2060
      %v2062 = vpop.f32.mrf.mxu0
      %v2063 = vpop.f32.mrf.mxu0
      %v2064 = vadd.f32 %v1884, %v2063
      %v2065 = vpop.f32.mrf.mxu0
      %2066 = vmatprep.mubr.bf16.mxu0 0
      %2067 = vmatmul.mubr.bf16.gmra.mxu0 %v1933
      %v2068 = vpop.f32.mrf.mxu0
      %v2069 = vadd.f32 %v1884, %v2068
      %v2070 = vpop.f32.mrf.mxu0
      %v2071 = vpop.f32.mrf.mxu0
      %v2072 = vadd.f32 %v1884, %v2071
      %v2073 = vpop.f32.mrf.mxu0
      %2074 = vmatprep.mubr.bf16.mxu0 0
      %2075 = vmatmul.mubr.bf16.gmra.mxu0 %v1936
      %v2076 = vpop.f32.mrf.mxu0
      %v2077 = vadd.f32 %v1884, %v2076
      %v2078 = vpop.f32.mrf.mxu0
      %v2079 = vpop.f32.mrf.mxu0
      %v2080 = vadd.f32 %v1884, %v2079
      %v2081 = vpop.f32.mrf.mxu0
      %2082 = vmatprep.mubr.bf16.mxu0 0
      %2083 = vmatmul.mubr.bf16.gmra.mxu0 %v1939
      %v2084 = vpop.f32.mrf.mxu0
      %v2085 = vadd.f32 %v1884, %v2084
      %v2086 = vpop.f32.mrf.mxu0
      %v2087 = vpop.f32.mrf.mxu0
      %v2088 = vadd.f32 %v1884, %v2087
      %v2089 = vpop.f32.mrf.mxu0
      %2090 = vmatprep.mubr.bf16.mxu0 0
      %2091 = vmatmul.mubr.bf16.gmra.mxu0 %v1942
      %v2092 = vpop.f32.mrf.mxu0
      %v2093 = vadd.f32 %v1884, %v2092
      %v2094 = vpop.f32.mrf.mxu0
      %v2095 = vpop.f32.mrf.mxu0
      %v2096 = vadd.f32 %v1884, %v2095
      %v2097 = vpop.f32.mrf.mxu0
      %2098 = vmatprep.mubr.bf16.mxu0 0
      %2099 = vmatmul.mubr.bf16.gmra.mxu0 %v1945
      %v2100 = vpop.f32.mrf.mxu0
      %v2101 = vadd.f32 %v1884, %v2100
      %v2102 = vpop.f32.mrf.mxu0
      %v2103 = vpop.f32.mrf.mxu0
      %v2104 = vadd.f32 %v1884, %v2103
      %v2105 = vpop.f32.mrf.mxu0
      %2106 = vmatprep.mubr.bf16.mxu0 0
      %2107 = vmatmul.mubr.bf16.gmra.mxu0 %v1948
      %v2108 = vpop.f32.mrf.mxu0
      %v2109 = vadd.f32 %v1884, %v2108
      %v2110 = vpop.f32.mrf.mxu0
      %v2111 = vpop.f32.mrf.mxu0
      %v2112 = vadd.f32 %v1884, %v2111
      %v2113 = vpop.f32.mrf.mxu0
      %2114 = vdwg.mxu0
      %v2115 = vmax.f32 %v1989, 0.0
      %v2116 = vmax.f32 %v1992, 0.0
      %v2117 = vmax.f32 %v1997, 0.0
      %v2118 = vmax.f32 %v2000, 0.0
      %v2119 = vmax.f32 %v2005, 0.0
      %v2120 = vmax.f32 %v2008, 0.0
      %v2121 = vmax.f32 %v2013, 0.0
      %v2122 = vmax.f32 %v2016, 0.0
      %v2123 = vmax.f32 %v2021, 0.0
      %v2124 = vmax.f32 %v2024, 0.0
      %v2125 = vmax.f32 %v2029, 0.0
      %v2126 = vmax.f32 %v2032, 0.0
      %v2127 = vmax.f32 %v2037, 0.0
      %v2128 = vmax.f32 %v2040, 0.0
      %v2129 = vmax.f32 %v2045, 0.0
      %v2130 = vmax.f32 %v2048, 0.0
      %v2131 = vmax.f32 %v2053, 0.0
      %v2132 = vmax.f32 %v2056, 0.0
      %v2133 = vmax.f32 %v2061, 0.0
      %v2134 = vmax.f32 %v2064, 0.0
      %v2135 = vmax.f32 %v2069, 0.0
      %v2136 = vmax.f32 %v2072, 0.0
      %v2137 = vmax.f32 %v2077, 0.0
      %v2138 = vmax.f32 %v2080, 0.0
      %v2139 = vmax.f32 %v2085, 0.0
      %v2140 = vmax.f32 %v2088, 0.0
      %v2141 = vmax.f32 %v2093, 0.0
      %v2142 = vmax.f32 %v2096, 0.0
      %v2143 = vmax.f32 %v2101, 0.0
      %v2144 = vmax.f32 %v2104, 0.0
      %v2145 = vmax.f32 %v2109, 0.0
      %v2146 = vmax.f32 %v2112, 0.0
      %2147 = vst.msk [vmem:[#allocation2] sm:$0xff] %vm1693, 0.0
      %2148 = vst.msk [vmem:[#allocation2 + $0x8] sm:$0xff] %vm1693, 0.0
      %vm2149 = vcmask 123904
      %2150 = vst.msk [vmem:[#allocation2 + $0x10] sm:$0x3] %vm2149, 0.0
      %2151 = vst.msk [vmem:[#allocation2 + $0x18] sm:$0xff] %vm1693, 0.0
      %2152 = vst.msk [vmem:[#allocation2 + $0x20] sm:$0xff] %vm1693, 0.0
      %2153 = vst.msk [vmem:[#allocation2 + $0x28] sm:$0x3] %vm2149, 0.0
      %2154 = vst.msk [vmem:[#allocation2 + $0x30] sm:$0xff] %vm1693, 0.0
      %2155 = vst.msk [vmem:[#allocation2 + $0x38] sm:$0xff] %vm1693, 0.0
      %2156 = vst.msk [vmem:[#allocation2 + $0x40] sm:$0x3] %vm2149, 0.0
      %2157 = vst.msk [vmem:[#allocation2 + $0x48] sm:$0xff] %vm1693, 0.0
      %2158 = vst.msk [vmem:[#allocation2 + $0x50] sm:$0xff] %vm1693, 0.0
      %2159 = vst.msk [vmem:[#allocation2 + $0x58] sm:$0x3] %vm2149, 0.0
      %2160 = vst.msk [vmem:[#allocation2 + $0x60] sm:$0xff] %vm1693, 0.0
      %2161 = vst.msk [vmem:[#allocation2 + $0x68] sm:$0xff] %vm1693, 0.0
      %2162 = vst.msk [vmem:[#allocation2 + $0x70] sm:$0x3] %vm2149, 0.0
      %2163 = vst.msk [vmem:[#allocation2 + $0x78] sm:$0xff] %vm1693, 0.0
      %2164 = vst.msk [vmem:[#allocation2 + $0x80] sm:$0xff] %vm1693, 0.0
      %2165 = vst.msk [vmem:[#allocation2 + $0x88] sm:$0x3] %vm2149, 0.0
      %2166 = vst.msk [vmem:[#allocation2 + $0x90] sm:$0xff] %vm1693, 0.0
      %2167 = vst.msk [vmem:[#allocation2 + $0x98] sm:$0xff] %vm1693, 0.0
      %2168 = vst.msk [vmem:[#allocation2 + $0xa0] sm:$0x3] %vm2149, 0.0
      %2169 = vst.msk [vmem:[#allocation2 + $0xa8] sm:$0xff] %vm1693, 0.0
      %2170 = vst.msk [vmem:[#allocation2 + $0xb0] sm:$0xff] %vm1693, 0.0
      %2171 = vst.msk [vmem:[#allocation2 + $0xb8] sm:$0x3] %vm2149, 0.0
      %2172 = vst.msk [vmem:[#allocation2 + $0xc0] sm:$0xff] %vm1693, 0.0
      %2173 = vst.msk [vmem:[#allocation2 + $0xc8] sm:$0xff] %vm1693, 0.0
      %2174 = vst.msk [vmem:[#allocation2 + $0xd0] sm:$0x3] %vm2149, 0.0
      %2175 = vst.msk [vmem:[#allocation2 + $0xd8] sm:$0xff] %vm1693, 0.0
      %2176 = vst.msk [vmem:[#allocation2 + $0xe0] sm:$0xff] %vm1693, 0.0
      %2177 = vst.msk [vmem:[#allocation2 + $0xe8] sm:$0x3] %vm2149, 0.0
      %2178 = vst.msk [vmem:[#allocation2 + $0xf0] sm:$0xff] %vm1693, 0.0
      %2179 = vst.msk [vmem:[#allocation2 + $0xf8] sm:$0xff] %vm1693, 0.0
      %2180 = vst.msk [vmem:[#allocation2 + $0x100] sm:$0x3] %vm2149, 0.0
      %2181 = vst.msk [vmem:[#allocation2 + $0x108] sm:$0xff] %vm1693, 0.0
      %2182 = vst.msk [vmem:[#allocation2 + $0x110] sm:$0xff] %vm1693, 0.0
      %2183 = vst.msk [vmem:[#allocation2 + $0x118] sm:$0x3] %vm2149, 0.0
      %2184 = vst.msk [vmem:[#allocation2 + $0x120] sm:$0xff] %vm1693, 0.0
      %2185 = vst.msk [vmem:[#allocation2 + $0x128] sm:$0xff] %vm1693, 0.0
      %2186 = vst.msk [vmem:[#allocation2 + $0x130] sm:$0x3] %vm2149, 0.0
      %2187 = vst.msk [vmem:[#allocation2 + $0x138] sm:$0xff] %vm1693, 0.0
      %2188 = vst.msk [vmem:[#allocation2 + $0x140] sm:$0xff] %vm1693, 0.0
      %2189 = vst.msk [vmem:[#allocation2 + $0x148] sm:$0x3] %vm2149, 0.0
      %2190 = vst.msk [vmem:[#allocation2 + $0x150] sm:$0xff] %vm1693, 0.0
      %2191 = vst.msk [vmem:[#allocation2 + $0x158] sm:$0xff] %vm1693, 0.0
      %2192 = vst.msk [vmem:[#allocation2 + $0x160] sm:$0x3] %vm2149, 0.0
      %2193 = vst.msk [vmem:[#allocation2 + $0x168] sm:$0xff] %vm1693, 0.0
      %2194 = vst.msk [vmem:[#allocation2 + $0x170] sm:$0xff] %vm1693, 0.0
      %2195 = vst.msk [vmem:[#allocation2 + $0x178] sm:$0x3] %vm2149, 0.0
      %2196 = vst.msk [vmem:[#allocation2 + $0x180] sm:$0xff] %vm1693, 0.0
      %2197 = vst.msk [vmem:[#allocation2 + $0x188] sm:$0xff] %vm1693, 0.0
      %2198 = vst.msk [vmem:[#allocation2 + $0x190] sm:$0x3] %vm2149, 0.0
      %2199 = vst.msk [vmem:[#allocation2 + $0x198] sm:$0xff] %vm1693, 0.0
      %2200 = vst.msk [vmem:[#allocation2 + $0x1a0] sm:$0xff] %vm1693, 0.0
      %2201 = vst.msk [vmem:[#allocation2 + $0x1a8] sm:$0x3] %vm2149, 0.0
      %s2202 = scalar_lea.vmem [#allocation2], 24
      %2203 = vst.msk [vmem:[%s2202 + $0x1] sm:$0xff] %vm1693, %v2115
      %2204 = vst.msk [vmem:[%s2202 + $0x9] sm:$0xff] %vm1693, %v2116
      %2205 = vst.msk [vmem:[%s2202 + $0x19] sm:$0xff] %vm1693, %v2117
      %2206 = vst.msk [vmem:[%s2202 + $0x21] sm:$0xff] %vm1693, %v2118
      %2207 = vst.msk [vmem:[%s2202 + $0x31] sm:$0xff] %vm1693, %v2119
      %2208 = vst.msk [vmem:[%s2202 + $0x39] sm:$0xff] %vm1693, %v2120
      %2209 = vst.msk [vmem:[%s2202 + $0x49] sm:$0xff] %vm1693, %v2121
      %2210 = vst.msk [vmem:[%s2202 + $0x51] sm:$0xff] %vm1693, %v2122
      %2211 = vst.msk [vmem:[%s2202 + $0x61] sm:$0xff] %vm1693, %v2123
      %2212 = vst.msk [vmem:[%s2202 + $0x69] sm:$0xff] %vm1693, %v2124
      %2213 = vst.msk [vmem:[%s2202 + $0x79] sm:$0xff] %vm1693, %v2125
      %2214 = vst.msk [vmem:[%s2202 + $0x81] sm:$0xff] %vm1693, %v2126
      %2215 = vst.msk [vmem:[%s2202 + $0x91] sm:$0xff] %vm1693, %v2127
      %2216 = vst.msk [vmem:[%s2202 + $0x99] sm:$0xff] %vm1693, %v2128
      %2217 = vst.msk [vmem:[%s2202 + $0xa9] sm:$0xff] %vm1693, %v2129
      %2218 = vst.msk [vmem:[%s2202 + $0xb1] sm:$0xff] %vm1693, %v2130
      %2219 = vst.msk [vmem:[%s2202 + $0xc1] sm:$0xff] %vm1693, %v2131
      %2220 = vst.msk [vmem:[%s2202 + $0xc9] sm:$0xff] %vm1693, %v2132
      %2221 = vst.msk [vmem:[%s2202 + $0xd9] sm:$0xff] %vm1693, %v2133
      %2222 = vst.msk [vmem:[%s2202 + $0xe1] sm:$0xff] %vm1693, %v2134
      %2223 = vst.msk [vmem:[%s2202 + $0xf1] sm:$0xff] %vm1693, %v2135
      %2224 = vst.msk [vmem:[%s2202 + $0xf9] sm:$0xff] %vm1693, %v2136
      %2225 = vst.msk [vmem:[%s2202 + $0x109] sm:$0xff] %vm1693, %v2137
      %2226 = vst.msk [vmem:[%s2202 + $0x111] sm:$0xff] %vm1693, %v2138
      %2227 = vst.msk [vmem:[%s2202 + $0x121] sm:$0xff] %vm1693, %v2139
      %2228 = vst.msk [vmem:[%s2202 + $0x129] sm:$0xff] %vm1693, %v2140
      %2229 = vst.msk [vmem:[%s2202 + $0x139] sm:$0xff] %vm1693, %v2141
      %2230 = vst.msk [vmem:[%s2202 + $0x141] sm:$0xff] %vm1693, %v2142
      %2231 = vst.msk [vmem:[%s2202 + $0x151] sm:$0xff] %vm1693, %v2143
      %2232 = vst.msk [vmem:[%s2202 + $0x159] sm:$0xff] %vm1693, %v2144
      %2233 = vst.msk [vmem:[%s2202 + $0x169] sm:$0xff] %vm1693, %v2145
      %2234 = vst.msk [vmem:[%s2202 + $0x171] sm:$0xff] %vm1693, %v2146
      %v2235 = vld [vmem:[#allocation2] sm:$0xff]
      %v2236 = vld [vmem:[#allocation2 + $0x8] sm:$0xff]
      %v2237 = vld [vmem:[#allocation2 + $0x18] sm:$0xff]
      %v2238 = vld [vmem:[#allocation2 + $0x20] sm:$0xff]
      %v2239 = vld [vmem:[#allocation2 + $0x30] sm:$0xff]
      %v2240 = vld [vmem:[#allocation2 + $0x38] sm:$0xff]
      %v2241 = vld [vmem:[#allocation2 + $0x48] sm:$0xff]
      %v2242 = vld [vmem:[#allocation2 + $0x50] sm:$0xff]
      %v2243 = vld [vmem:[#allocation2 + $0x60] sm:$0xff]
      %v2244 = vld [vmem:[#allocation2 + $0x68] sm:$0xff]
      %v2245 = vld [vmem:[#allocation2 + $0x78] sm:$0xff]
      %v2246 = vld [vmem:[#allocation2 + $0x80] sm:$0xff]
      %v2247 = vld [vmem:[#allocation2 + $0x90] sm:$0xff]
      %v2248 = vld [vmem:[#allocation2 + $0x98] sm:$0xff]
      %v2249 = vld [vmem:[#allocation2 + $0xa8] sm:$0xff]
      %v2250 = vld [vmem:[#allocation2 + $0xb0] sm:$0xff]
      %v2251 = vld [vmem:[#allocation2 + $0xc0] sm:$0xff]
      %v2252 = vld [vmem:[#allocation2 + $0xc8] sm:$0xff]
      %v2253 = vld [vmem:[#allocation2 + $0xd8] sm:$0xff]
      %v2254 = vld [vmem:[#allocation2 + $0xe0] sm:$0xff]
      %v2255 = vld [vmem:[#allocation2 + $0xf0] sm:$0xff]
      %v2256 = vld [vmem:[#allocation2 + $0xf8] sm:$0xff]
      %v2257 = vld [vmem:[#allocation2 + $0x108] sm:$0xff]
      %v2258 = vld [vmem:[#allocation2 + $0x110] sm:$0xff]
      %v2259 = vld [vmem:[#allocation2 + $0x120] sm:$0xff]
      %v2260 = vld [vmem:[#allocation2 + $0x128] sm:$0xff]
      %v2261 = vld [vmem:[#allocation2 + $0x138] sm:$0xff]
      %v2262 = vld [vmem:[#allocation2 + $0x140] sm:$0xff]
      %v2263 = vld [vmem:[#allocation2 + $0x150] sm:$0xff]
      %v2264 = vld [vmem:[#allocation2 + $0x158] sm:$0xff]
      %v2265 = vld [vmem:[#allocation2 + $0x168] sm:$0xff]
      %v2266 = vld [vmem:[#allocation2 + $0x170] sm:$0xff]
      %v2267 = vld [vmem:[#allocation2 + $0x1] sm:$0xff]
      %v2268 = vld [vmem:[#allocation2 + $0x9] sm:$0xff]
      %v2269 = vld [vmem:[#allocation2 + $0x19] sm:$0xff]
      %v2270 = vld [vmem:[#allocation2 + $0x21] sm:$0xff]
      %v2271 = vld [vmem:[#allocation2 + $0x31] sm:$0xff]
      %v2272 = vld [vmem:[#allocation2 + $0x39] sm:$0xff]
      %v2273 = vld [vmem:[#allocation2 + $0x49] sm:$0xff]
      %v2274 = vld [vmem:[#allocation2 + $0x51] sm:$0xff]
      %v2275 = vld [vmem:[#allocation2 + $0x61] sm:$0xff]
      %v2276 = vld [vmem:[#allocation2 + $0x69] sm:$0xff]
      %v2277 = vld [vmem:[#allocation2 + $0x79] sm:$0xff]
      %v2278 = vld [vmem:[#allocation2 + $0x81] sm:$0xff]
      %v2279 = vld [vmem:[#allocation2 + $0x91] sm:$0xff]
      %v2280 = vld [vmem:[#allocation2 + $0x99] sm:$0xff]
      %v2281 = vld [vmem:[#allocation2 + $0xa9] sm:$0xff]
      %v2282 = vld [vmem:[#allocation2 + $0xb1] sm:$0xff]
      %v2283 = vld [vmem:[#allocation2 + $0xc1] sm:$0xff]
      %v2284 = vld [vmem:[#allocation2 + $0xc9] sm:$0xff]
      %v2285 = vld [vmem:[#allocation2 + $0xd9] sm:$0xff]
      %v2286 = vld [vmem:[#allocation2 + $0xe1] sm:$0xff]
      %v2287 = vld [vmem:[#allocation2 + $0xf1] sm:$0xff]
      %v2288 = vld [vmem:[#allocation2 + $0xf9] sm:$0xff]
      %v2289 = vld [vmem:[#allocation2 + $0x109] sm:$0xff]
      %v2290 = vld [vmem:[#allocation2 + $0x111] sm:$0xff]
      %v2291 = vld [vmem:[#allocation2 + $0x121] sm:$0xff]
      %v2292 = vld [vmem:[#allocation2 + $0x129] sm:$0xff]
      %v2293 = vld [vmem:[#allocation2 + $0x139] sm:$0xff]
      %v2294 = vld [vmem:[#allocation2 + $0x141] sm:$0xff]
      %v2295 = vld [vmem:[#allocation2 + $0x151] sm:$0xff]
      %v2296 = vld [vmem:[#allocation2 + $0x159] sm:$0xff]
      %v2297 = vld [vmem:[#allocation2 + $0x169] sm:$0xff]
      %v2298 = vld [vmem:[#allocation2 + $0x171] sm:$0xff]
      %v2299 = vld [vmem:[#allocation2 + $0x2] sm:$0xff]
      %v2300 = vld [vmem:[#allocation2 + $0xa] sm:$0xff]
      %v2301 = vld [vmem:[#allocation2 + $0x1a] sm:$0xff]
      %v2302 = vld [vmem:[#allocation2 + $0x22] sm:$0xff]
      %v2303 = vld [vmem:[#allocation2 + $0x32] sm:$0xff]
      %v2304 = vld [vmem:[#allocation2 + $0x3a] sm:$0xff]
      %v2305 = vld [vmem:[#allocation2 + $0x4a] sm:$0xff]
      %v2306 = vld [vmem:[#allocation2 + $0x52] sm:$0xff]
      %v2307 = vld [vmem:[#allocation2 + $0x62] sm:$0xff]
      %v2308 = vld [vmem:[#allocation2 + $0x6a] sm:$0xff]
      %v2309 = vld [vmem:[#allocation2 + $0x7a] sm:$0xff]
      %v2310 = vld [vmem:[#allocation2 + $0x82] sm:$0xff]
      %v2311 = vld [vmem:[#allocation2 + $0x92] sm:$0xff]
      %v2312 = vld [vmem:[#allocation2 + $0x9a] sm:$0xff]
      %v2313 = vld [vmem:[#allocation2 + $0xaa] sm:$0xff]
      %v2314 = vld [vmem:[#allocation2 + $0xb2] sm:$0xff]
      %v2315 = vld [vmem:[#allocation2 + $0xc2] sm:$0xff]
      %v2316 = vld [vmem:[#allocation2 + $0xca] sm:$0xff]
      %v2317 = vld [vmem:[#allocation2 + $0xda] sm:$0xff]
      %v2318 = vld [vmem:[#allocation2 + $0xe2] sm:$0xff]
      %v2319 = vld [vmem:[#allocation2 + $0xf2] sm:$0xff]
      %v2320 = vld [vmem:[#allocation2 + $0xfa] sm:$0xff]
      %v2321 = vld [vmem:[#allocation2 + $0x10a] sm:$0xff]
      %v2322 = vld [vmem:[#allocation2 + $0x112] sm:$0xff]
      %v2323 = vld [vmem:[#allocation2 + $0x122] sm:$0xff]
      %v2324 = vld [vmem:[#allocation2 + $0x12a] sm:$0xff]
      %v2325 = vld [vmem:[#allocation2 + $0x13a] sm:$0xff]
      %v2326 = vld [vmem:[#allocation2 + $0x142] sm:$0xff]
      %v2327 = vld [vmem:[#allocation2 + $0x152] sm:$0xff]
      %v2328 = vld [vmem:[#allocation2 + $0x15a] sm:$0xff]
      %v2329 = vld [vmem:[#allocation2 + $0x16a] sm:$0xff]
      %v2330 = vld [vmem:[#allocation2 + $0x172] sm:$0xff]
      %v2331 = vld [vmem:[%s2202] sm:$0xff]
      %v2332 = vld [vmem:[%s2202 + $0x8] sm:$0xff]
      %v2333 = vld [vmem:[%s2202 + $0x18] sm:$0xff]
      %v2334 = vld [vmem:[%s2202 + $0x20] sm:$0xff]
      %v2335 = vld [vmem:[%s2202 + $0x30] sm:$0xff]
      %v2336 = vld [vmem:[%s2202 + $0x38] sm:$0xff]
      %v2337 = vld [vmem:[%s2202 + $0x48] sm:$0xff]
      %v2338 = vld [vmem:[%s2202 + $0x50] sm:$0xff]
      %v2339 = vld [vmem:[%s2202 + $0x60] sm:$0xff]
      %v2340 = vld [vmem:[%s2202 + $0x68] sm:$0xff]
      %v2341 = vld [vmem:[%s2202 + $0x78] sm:$0xff]
      %v2342 = vld [vmem:[%s2202 + $0x80] sm:$0xff]
      %v2343 = vld [vmem:[%s2202 + $0x90] sm:$0xff]
      %v2344 = vld [vmem:[%s2202 + $0x98] sm:$0xff]
      %v2345 = vld [vmem:[%s2202 + $0xa8] sm:$0xff]
      %v2346 = vld [vmem:[%s2202 + $0xb0] sm:$0xff]
      %v2347 = vld [vmem:[%s2202 + $0xc0] sm:$0xff]
      %v2348 = vld [vmem:[%s2202 + $0xc8] sm:$0xff]
      %v2349 = vld [vmem:[%s2202 + $0xd8] sm:$0xff]
      %v2350 = vld [vmem:[%s2202 + $0xe0] sm:$0xff]
      %v2351 = vld [vmem:[%s2202 + $0xf0] sm:$0xff]
      %v2352 = vld [vmem:[%s2202 + $0xf8] sm:$0xff]
      %v2353 = vld [vmem:[%s2202 + $0x108] sm:$0xff]
      %v2354 = vld [vmem:[%s2202 + $0x110] sm:$0xff]
      %v2355 = vld [vmem:[%s2202 + $0x120] sm:$0xff]
      %v2356 = vld [vmem:[%s2202 + $0x128] sm:$0xff]
      %v2357 = vld [vmem:[%s2202 + $0x138] sm:$0xff]
      %v2358 = vld [vmem:[%s2202 + $0x140] sm:$0xff]
      %v2359 = vld [vmem:[%s2202 + $0x150] sm:$0xff]
      %v2360 = vld [vmem:[%s2202 + $0x158] sm:$0xff]
      %v2361 = vld [vmem:[%s2202 + $0x168] sm:$0xff]
      %v2362 = vld [vmem:[%s2202 + $0x170] sm:$0xff]
      %v2363 = vld [vmem:[%s2202 + $0x1] sm:$0xff]
      %v2364 = vld [vmem:[%s2202 + $0x9] sm:$0xff]
      %v2365 = vld [vmem:[%s2202 + $0x19] sm:$0xff]
      %v2366 = vld [vmem:[%s2202 + $0x21] sm:$0xff]
      %v2367 = vld [vmem:[%s2202 + $0x31] sm:$0xff]
      %v2368 = vld [vmem:[%s2202 + $0x39] sm:$0xff]
      %v2369 = vld [vmem:[%s2202 + $0x49] sm:$0xff]
      %v2370 = vld [vmem:[%s2202 + $0x51] sm:$0xff]
      %v2371 = vld [vmem:[%s2202 + $0x61] sm:$0xff]
      %v2372 = vld [vmem:[%s2202 + $0x69] sm:$0xff]
      %v2373 = vld [vmem:[%s2202 + $0x79] sm:$0xff]
      %v2374 = vld [vmem:[%s2202 + $0x81] sm:$0xff]
      %v2375 = vld [vmem:[%s2202 + $0x91] sm:$0xff]
      %v2376 = vld [vmem:[%s2202 + $0x99] sm:$0xff]
      %v2377 = vld [vmem:[%s2202 + $0xa9] sm:$0xff]
      %v2378 = vld [vmem:[%s2202 + $0xb1] sm:$0xff]
      %v2379 = vld [vmem:[%s2202 + $0xc1] sm:$0xff]
      %v2380 = vld [vmem:[%s2202 + $0xc9] sm:$0xff]
      %v2381 = vld [vmem:[%s2202 + $0xd9] sm:$0xff]
      %v2382 = vld [vmem:[%s2202 + $0xe1] sm:$0xff]
      %v2383 = vld [vmem:[%s2202 + $0xf1] sm:$0xff]
      %v2384 = vld [vmem:[%s2202 + $0xf9] sm:$0xff]
      %v2385 = vld [vmem:[%s2202 + $0x109] sm:$0xff]
      %v2386 = vld [vmem:[%s2202 + $0x111] sm:$0xff]
      %v2387 = vld [vmem:[%s2202 + $0x121] sm:$0xff]
      %v2388 = vld [vmem:[%s2202 + $0x129] sm:$0xff]
      %v2389 = vld [vmem:[%s2202 + $0x139] sm:$0xff]
      %v2390 = vld [vmem:[%s2202 + $0x141] sm:$0xff]
      %v2391 = vld [vmem:[%s2202 + $0x151] sm:$0xff]
      %v2392 = vld [vmem:[%s2202 + $0x159] sm:$0xff]
      %v2393 = vld [vmem:[%s2202 + $0x169] sm:$0xff]
      %v2394 = vld [vmem:[%s2202 + $0x171] sm:$0xff]
      %v2395 = vld [vmem:[%s2202 + $0x2] sm:$0xff]
      %v2396 = vld [vmem:[%s2202 + $0xa] sm:$0xff]
      %v2397 = vld [vmem:[%s2202 + $0x1a] sm:$0xff]
      %v2398 = vld [vmem:[%s2202 + $0x22] sm:$0xff]
      %v2399 = vld [vmem:[%s2202 + $0x32] sm:$0xff]
      %v2400 = vld [vmem:[%s2202 + $0x3a] sm:$0xff]
      %v2401 = vld [vmem:[%s2202 + $0x4a] sm:$0xff]
      %v2402 = vld [vmem:[%s2202 + $0x52] sm:$0xff]
      %v2403 = vld [vmem:[%s2202 + $0x62] sm:$0xff]
      %v2404 = vld [vmem:[%s2202 + $0x6a] sm:$0xff]
      %v2405 = vld [vmem:[%s2202 + $0x7a] sm:$0xff]
      %v2406 = vld [vmem:[%s2202 + $0x82] sm:$0xff]
      %v2407 = vld [vmem:[%s2202 + $0x92] sm:$0xff]
      %v2408 = vld [vmem:[%s2202 + $0x9a] sm:$0xff]
      %v2409 = vld [vmem:[%s2202 + $0xaa] sm:$0xff]
      %v2410 = vld [vmem:[%s2202 + $0xb2] sm:$0xff]
      %v2411 = vld [vmem:[%s2202 + $0xc2] sm:$0xff]
      %v2412 = vld [vmem:[%s2202 + $0xca] sm:$0xff]
      %v2413 = vld [vmem:[%s2202 + $0xda] sm:$0xff]
      %v2414 = vld [vmem:[%s2202 + $0xe2] sm:$0xff]
      %v2415 = vld [vmem:[%s2202 + $0xf2] sm:$0xff]
      %v2416 = vld [vmem:[%s2202 + $0xfa] sm:$0xff]
      %v2417 = vld [vmem:[%s2202 + $0x10a] sm:$0xff]
      %v2418 = vld [vmem:[%s2202 + $0x112] sm:$0xff]
      %v2419 = vld [vmem:[%s2202 + $0x122] sm:$0xff]
      %v2420 = vld [vmem:[%s2202 + $0x12a] sm:$0xff]
      %v2421 = vld [vmem:[%s2202 + $0x13a] sm:$0xff]
      %v2422 = vld [vmem:[%s2202 + $0x142] sm:$0xff]
      %v2423 = vld [vmem:[%s2202 + $0x152] sm:$0xff]
      %v2424 = vld [vmem:[%s2202 + $0x15a] sm:$0xff]
      %v2425 = vld [vmem:[%s2202 + $0x16a] sm:$0xff]
      %v2426 = vld [vmem:[%s2202 + $0x172] sm:$0xff]
      %s2427 = scalar_lea.vmem [#allocation2], 48
      %v2428 = vld [vmem:[%s2427] sm:$0xff]
      %v2429 = vld [vmem:[%s2427 + $0x8] sm:$0xff]
      %v2430 = vld [vmem:[%s2427 + $0x18] sm:$0xff]
      %v2431 = vld [vmem:[%s2427 + $0x20] sm:$0xff]
      %v2432 = vld [vmem:[%s2427 + $0x30] sm:$0xff]
      %v2433 = vld [vmem:[%s2427 + $0x38] sm:$0xff]
      %v2434 = vld [vmem:[%s2427 + $0x48] sm:$0xff]
      %v2435 = vld [vmem:[%s2427 + $0x50] sm:$0xff]
      %v2436 = vld [vmem:[%s2427 + $0x60] sm:$0xff]
      %v2437 = vld [vmem:[%s2427 + $0x68] sm:$0xff]
      %v2438 = vld [vmem:[%s2427 + $0x78] sm:$0xff]
      %v2439 = vld [vmem:[%s2427 + $0x80] sm:$0xff]
      %v2440 = vld [vmem:[%s2427 + $0x90] sm:$0xff]
      %v2441 = vld [vmem:[%s2427 + $0x98] sm:$0xff]
      %v2442 = vld [vmem:[%s2427 + $0xa8] sm:$0xff]
      %v2443 = vld [vmem:[%s2427 + $0xb0] sm:$0xff]
      %v2444 = vld [vmem:[%s2427 + $0xc0] sm:$0xff]
      %v2445 = vld [vmem:[%s2427 + $0xc8] sm:$0xff]
      %v2446 = vld [vmem:[%s2427 + $0xd8] sm:$0xff]
      %v2447 = vld [vmem:[%s2427 + $0xe0] sm:$0xff]
      %v2448 = vld [vmem:[%s2427 + $0xf0] sm:$0xff]
      %v2449 = vld [vmem:[%s2427 + $0xf8] sm:$0xff]
      %v2450 = vld [vmem:[%s2427 + $0x108] sm:$0xff]
      %v2451 = vld [vmem:[%s2427 + $0x110] sm:$0xff]
      %v2452 = vld [vmem:[%s2427 + $0x120] sm:$0xff]
      %v2453 = vld [vmem:[%s2427 + $0x128] sm:$0xff]
      %v2454 = vld [vmem:[%s2427 + $0x138] sm:$0xff]
      %v2455 = vld [vmem:[%s2427 + $0x140] sm:$0xff]
      %v2456 = vld [vmem:[%s2427 + $0x150] sm:$0xff]
      %v2457 = vld [vmem:[%s2427 + $0x158] sm:$0xff]
      %v2458 = vld [vmem:[%s2427 + $0x168] sm:$0xff]
      %v2459 = vld [vmem:[%s2427 + $0x170] sm:$0xff]
      %v2460 = vld [vmem:[%s2427 + $0x1] sm:$0xff]
      %v2461 = vld [vmem:[%s2427 + $0x9] sm:$0xff]
      %v2462 = vld [vmem:[%s2427 + $0x19] sm:$0xff]
      %v2463 = vld [vmem:[%s2427 + $0x21] sm:$0xff]
      %v2464 = vld [vmem:[%s2427 + $0x31] sm:$0xff]
      %v2465 = vld [vmem:[%s2427 + $0x39] sm:$0xff]
      %v2466 = vld [vmem:[%s2427 + $0x49] sm:$0xff]
      %v2467 = vld [vmem:[%s2427 + $0x51] sm:$0xff]
      %v2468 = vld [vmem:[%s2427 + $0x61] sm:$0xff]
      %v2469 = vld [vmem:[%s2427 + $0x69] sm:$0xff]
      %v2470 = vld [vmem:[%s2427 + $0x79] sm:$0xff]
      %v2471 = vld [vmem:[%s2427 + $0x81] sm:$0xff]
      %v2472 = vld [vmem:[%s2427 + $0x91] sm:$0xff]
      %v2473 = vld [vmem:[%s2427 + $0x99] sm:$0xff]
      %v2474 = vld [vmem:[%s2427 + $0xa9] sm:$0xff]
      %v2475 = vld [vmem:[%s2427 + $0xb1] sm:$0xff]
      %v2476 = vld [vmem:[%s2427 + $0xc1] sm:$0xff]
      %v2477 = vld [vmem:[%s2427 + $0xc9] sm:$0xff]
      %v2478 = vld [vmem:[%s2427 + $0xd9] sm:$0xff]
      %v2479 = vld [vmem:[%s2427 + $0xe1] sm:$0xff]
      %v2480 = vld [vmem:[%s2427 + $0xf1] sm:$0xff]
      %v2481 = vld [vmem:[%s2427 + $0xf9] sm:$0xff]
      %v2482 = vld [vmem:[%s2427 + $0x109] sm:$0xff]
      %v2483 = vld [vmem:[%s2427 + $0x111] sm:$0xff]
      %v2484 = vld [vmem:[%s2427 + $0x121] sm:$0xff]
      %v2485 = vld [vmem:[%s2427 + $0x129] sm:$0xff]
      %v2486 = vld [vmem:[%s2427 + $0x139] sm:$0xff]
      %v2487 = vld [vmem:[%s2427 + $0x141] sm:$0xff]
      %v2488 = vld [vmem:[%s2427 + $0x151] sm:$0xff]
      %v2489 = vld [vmem:[%s2427 + $0x159] sm:$0xff]
      %v2490 = vld [vmem:[%s2427 + $0x169] sm:$0xff]
      %v2491 = vld [vmem:[%s2427 + $0x171] sm:$0xff]
      %v2492 = vld [vmem:[%s2427 + $0x2] sm:$0xff]
      %v2493 = vld [vmem:[%s2427 + $0xa] sm:$0xff]
      %v2494 = vld [vmem:[%s2427 + $0x1a] sm:$0xff]
      %v2495 = vld [vmem:[%s2427 + $0x22] sm:$0xff]
      %v2496 = vld [vmem:[%s2427 + $0x32] sm:$0xff]
      %v2497 = vld [vmem:[%s2427 + $0x3a] sm:$0xff]
      %v2498 = vld [vmem:[%s2427 + $0x4a] sm:$0xff]
      %v2499 = vld [vmem:[%s2427 + $0x52] sm:$0xff]
      %v2500 = vld [vmem:[%s2427 + $0x62] sm:$0xff]
      %v2501 = vld [vmem:[%s2427 + $0x6a] sm:$0xff]
      %v2502 = vld [vmem:[%s2427 + $0x7a] sm:$0xff]
      %v2503 = vld [vmem:[%s2427 + $0x82] sm:$0xff]
      %v2504 = vld [vmem:[%s2427 + $0x92] sm:$0xff]
      %v2505 = vld [vmem:[%s2427 + $0x9a] sm:$0xff]
      %v2506 = vld [vmem:[%s2427 + $0xaa] sm:$0xff]
      %v2507 = vld [vmem:[%s2427 + $0xb2] sm:$0xff]
      %v2508 = vld [vmem:[%s2427 + $0xc2] sm:$0xff]
      %v2509 = vld [vmem:[%s2427 + $0xca] sm:$0xff]
      %v2510 = vld [vmem:[%s2427 + $0xda] sm:$0xff]
      %v2511 = vld [vmem:[%s2427 + $0xe2] sm:$0xff]
      %v2512 = vld [vmem:[%s2427 + $0xf2] sm:$0xff]
      %v2513 = vld [vmem:[%s2427 + $0xfa] sm:$0xff]
      %v2514 = vld [vmem:[%s2427 + $0x10a] sm:$0xff]
      %v2515 = vld [vmem:[%s2427 + $0x112] sm:$0xff]
      %v2516 = vld [vmem:[%s2427 + $0x122] sm:$0xff]
      %v2517 = vld [vmem:[%s2427 + $0x12a] sm:$0xff]
      %v2518 = vld [vmem:[%s2427 + $0x13a] sm:$0xff]
      %v2519 = vld [vmem:[%s2427 + $0x142] sm:$0xff]
      %v2520 = vld [vmem:[%s2427 + $0x152] sm:$0xff]
      %v2521 = vld [vmem:[%s2427 + $0x15a] sm:$0xff]
      %v2522 = vld [vmem:[%s2427 + $0x16a] sm:$0xff]
      %v2523 = vld [vmem:[%s2427 + $0x172] sm:$0xff]
      %2556 = vrot.lane.b32.xlu0 %v2267, 16
      %v2557 = vpop.permute.xlu0 %2556
      %2558 = vrot.lane.b32.xlu0 %v2268, 16
      %v2559 = vpop.permute.xlu0 %2558
      %2560 = vrot.lane.b32.xlu0 %v2269, 16
      %v2561 = vpop.permute.xlu0 %2560
      %2562 = vrot.lane.b32.xlu0 %v2270, 16
      %v2563 = vpop.permute.xlu0 %2562
      %2564 = vrot.lane.b32.xlu0 %v2271, 16
      %v2565 = vpop.permute.xlu0 %2564
      %2566 = vrot.lane.b32.xlu0 %v2272, 16
      %v2567 = vpop.permute.xlu0 %2566
      %2568 = vrot.lane.b32.xlu0 %v2273, 16
      %v2569 = vpop.permute.xlu0 %2568
      %2570 = vrot.lane.b32.xlu0 %v2274, 16
      %v2571 = vpop.permute.xlu0 %2570
      %2572 = vrot.lane.b32.xlu0 %v2275, 16
      %v2573 = vpop.permute.xlu0 %2572
      %2574 = vrot.lane.b32.xlu0 %v2276, 16
      %v2575 = vpop.permute.xlu0 %2574
      %2576 = vrot.lane.b32.xlu0 %v2277, 16
      %v2577 = vpop.permute.xlu0 %2576
      %2578 = vrot.lane.b32.xlu0 %v2278, 16
      %v2579 = vpop.permute.xlu0 %2578
      %2580 = vrot.lane.b32.xlu0 %v2279, 16
      %v2581 = vpop.permute.xlu0 %2580
      %2582 = vrot.lane.b32.xlu0 %v2280, 16
      %v2583 = vpop.permute.xlu0 %2582
      %2584 = vrot.lane.b32.xlu0 %v2281, 16
      %v2585 = vpop.permute.xlu0 %2584
      %2586 = vrot.lane.b32.xlu0 %v2282, 16
      %v2587 = vpop.permute.xlu0 %2586
      %2588 = vrot.lane.b32.xlu0 %v2283, 16
      %v2589 = vpop.permute.xlu0 %2588
      %2590 = vrot.lane.b32.xlu0 %v2284, 16
      %v2591 = vpop.permute.xlu0 %2590
      %2592 = vrot.lane.b32.xlu0 %v2285, 16
      %v2593 = vpop.permute.xlu0 %2592
      %2594 = vrot.lane.b32.xlu0 %v2286, 16
      %v2595 = vpop.permute.xlu0 %2594
      %2596 = vrot.lane.b32.xlu0 %v2287, 16
      %v2597 = vpop.permute.xlu0 %2596
      %2598 = vrot.lane.b32.xlu0 %v2288, 16
      %v2599 = vpop.permute.xlu0 %2598
      %2600 = vrot.lane.b32.xlu0 %v2289, 16
      %v2601 = vpop.permute.xlu0 %2600
      %2602 = vrot.lane.b32.xlu0 %v2290, 16
      %v2603 = vpop.permute.xlu0 %2602
      %2604 = vrot.lane.b32.xlu0 %v2291, 16
      %v2605 = vpop.permute.xlu0 %2604
      %2606 = vrot.lane.b32.xlu0 %v2292, 16
      %v2607 = vpop.permute.xlu0 %2606
      %2608 = vrot.lane.b32.xlu0 %v2293, 16
      %v2609 = vpop.permute.xlu0 %2608
      %2610 = vrot.lane.b32.xlu0 %v2294, 16
      %v2611 = vpop.permute.xlu0 %2610
      %2612 = vrot.lane.b32.xlu0 %v2295, 16
      %v2613 = vpop.permute.xlu0 %2612
      %2614 = vrot.lane.b32.xlu0 %v2296, 16
      %v2615 = vpop.permute.xlu0 %2614
      %2616 = vrot.lane.b32.xlu0 %v2297, 16
      %v2617 = vpop.permute.xlu0 %2616
      %2618 = vrot.lane.b32.xlu0 %v2298, 16
      %v2619 = vpop.permute.xlu0 %2618
      %2684 = vrot.lane.b32.xlu0 %v2299, 32
      %v2685 = vpop.permute.xlu0 %2684
      %2686 = vrot.lane.b32.xlu0 %v2300, 32
      %v2687 = vpop.permute.xlu0 %2686
      %2688 = vrot.lane.b32.xlu0 %v2301, 32
      %v2689 = vpop.permute.xlu0 %2688
      %2690 = vrot.lane.b32.xlu0 %v2302, 32
      %v2691 = vpop.permute.xlu0 %2690
      %2692 = vrot.lane.b32.xlu0 %v2303, 32
      %v2693 = vpop.permute.xlu0 %2692
      %2694 = vrot.lane.b32.xlu0 %v2304, 32
      %v2695 = vpop.permute.xlu0 %2694
      %2696 = vrot.lane.b32.xlu0 %v2305, 32
      %v2697 = vpop.permute.xlu0 %2696
      %2698 = vrot.lane.b32.xlu0 %v2306, 32
      %v2699 = vpop.permute.xlu0 %2698
      %2700 = vrot.lane.b32.xlu0 %v2307, 32
      %v2701 = vpop.permute.xlu0 %2700
      %2702 = vrot.lane.b32.xlu0 %v2308, 32
      %v2703 = vpop.permute.xlu0 %2702
      %2704 = vrot.lane.b32.xlu0 %v2309, 32
      %v2705 = vpop.permute.xlu0 %2704
      %2706 = vrot.lane.b32.xlu0 %v2310, 32
      %v2707 = vpop.permute.xlu0 %2706
      %2708 = vrot.lane.b32.xlu0 %v2311, 32
      %v2709 = vpop.permute.xlu0 %2708
      %2710 = vrot.lane.b32.xlu0 %v2312, 32
      %v2711 = vpop.permute.xlu0 %2710
      %2712 = vrot.lane.b32.xlu0 %v2313, 32
      %v2713 = vpop.permute.xlu0 %2712
      %2714 = vrot.lane.b32.xlu0 %v2314, 32
      %v2715 = vpop.permute.xlu0 %2714
      %2716 = vrot.lane.b32.xlu0 %v2315, 32
      %v2717 = vpop.permute.xlu0 %2716
      %2718 = vrot.lane.b32.xlu0 %v2316, 32
      %v2719 = vpop.permute.xlu0 %2718
      %2720 = vrot.lane.b32.xlu0 %v2317, 32
      %v2721 = vpop.permute.xlu0 %2720
      %2722 = vrot.lane.b32.xlu0 %v2318, 32
      %v2723 = vpop.permute.xlu0 %2722
      %2724 = vrot.lane.b32.xlu0 %v2319, 32
      %v2725 = vpop.permute.xlu0 %2724
      %2726 = vrot.lane.b32.xlu0 %v2320, 32
      %v2727 = vpop.permute.xlu0 %2726
      %2728 = vrot.lane.b32.xlu0 %v2321, 32
      %v2729 = vpop.permute.xlu0 %2728
      %2730 = vrot.lane.b32.xlu0 %v2322, 32
      %v2731 = vpop.permute.xlu0 %2730
      %2732 = vrot.lane.b32.xlu0 %v2323, 32
      %v2733 = vpop.permute.xlu0 %2732
      %2734 = vrot.lane.b32.xlu0 %v2324, 32
      %v2735 = vpop.permute.xlu0 %2734
      %2736 = vrot.lane.b32.xlu0 %v2325, 32
      %v2737 = vpop.permute.xlu0 %2736
      %2738 = vrot.lane.b32.xlu0 %v2326, 32
      %v2739 = vpop.permute.xlu0 %2738
      %2740 = vrot.lane.b32.xlu0 %v2327, 32
      %v2741 = vpop.permute.xlu0 %2740
      %2742 = vrot.lane.b32.xlu0 %v2328, 32
      %v2743 = vpop.permute.xlu0 %2742
      %2744 = vrot.lane.b32.xlu0 %v2329, 32
      %v2745 = vpop.permute.xlu0 %2744
      %2746 = vrot.lane.b32.xlu0 %v2330, 32
      %v2747 = vpop.permute.xlu0 %2746
      %2812 = vrot.lane.b32.xlu0 %v2331, 48
      %v2813 = vpop.permute.xlu0 %2812
      %2814 = vrot.lane.b32.xlu0 %v2332, 48
      %v2815 = vpop.permute.xlu0 %2814
      %2816 = vrot.lane.b32.xlu0 %v2333, 48
      %v2817 = vpop.permute.xlu0 %2816
      %2818 = vrot.lane.b32.xlu0 %v2334, 48
      %v2819 = vpop.permute.xlu0 %2818
      %2820 = vrot.lane.b32.xlu0 %v2335, 48
      %v2821 = vpop.permute.xlu0 %2820
      %2822 = vrot.lane.b32.xlu0 %v2336, 48
      %v2823 = vpop.permute.xlu0 %2822
      %2824 = vrot.lane.b32.xlu0 %v2337, 48
      %v2825 = vpop.permute.xlu0 %2824
      %2826 = vrot.lane.b32.xlu0 %v2338, 48
      %v2827 = vpop.permute.xlu0 %2826
      %2828 = vrot.lane.b32.xlu0 %v2339, 48
      %v2829 = vpop.permute.xlu0 %2828
      %2830 = vrot.lane.b32.xlu0 %v2340, 48
      %v2831 = vpop.permute.xlu0 %2830
      %2832 = vrot.lane.b32.xlu0 %v2341, 48
      %v2833 = vpop.permute.xlu0 %2832
      %2834 = vrot.lane.b32.xlu0 %v2342, 48
      %v2835 = vpop.permute.xlu0 %2834
      %2836 = vrot.lane.b32.xlu0 %v2343, 48
      %v2837 = vpop.permute.xlu0 %2836
      %2838 = vrot.lane.b32.xlu0 %v2344, 48
      %v2839 = vpop.permute.xlu0 %2838
      %2840 = vrot.lane.b32.xlu0 %v2345, 48
      %v2841 = vpop.permute.xlu0 %2840
      %2842 = vrot.lane.b32.xlu0 %v2346, 48
      %v2843 = vpop.permute.xlu0 %2842
      %2844 = vrot.lane.b32.xlu0 %v2347, 48
      %v2845 = vpop.permute.xlu0 %2844
      %2846 = vrot.lane.b32.xlu0 %v2348, 48
      %v2847 = vpop.permute.xlu0 %2846
      %2848 = vrot.lane.b32.xlu0 %v2349, 48
      %v2849 = vpop.permute.xlu0 %2848
      %2850 = vrot.lane.b32.xlu0 %v2350, 48
      %v2851 = vpop.permute.xlu0 %2850
      %2852 = vrot.lane.b32.xlu0 %v2351, 48
      %v2853 = vpop.permute.xlu0 %2852
      %2854 = vrot.lane.b32.xlu0 %v2352, 48
      %v2855 = vpop.permute.xlu0 %2854
      %2856 = vrot.lane.b32.xlu0 %v2353, 48
      %v2857 = vpop.permute.xlu0 %2856
      %2858 = vrot.lane.b32.xlu0 %v2354, 48
      %v2859 = vpop.permute.xlu0 %2858
      %2860 = vrot.lane.b32.xlu0 %v2355, 48
      %v2861 = vpop.permute.xlu0 %2860
      %2862 = vrot.lane.b32.xlu0 %v2356, 48
      %v2863 = vpop.permute.xlu0 %2862
      %2864 = vrot.lane.b32.xlu0 %v2357, 48
      %v2865 = vpop.permute.xlu0 %2864
      %2866 = vrot.lane.b32.xlu0 %v2358, 48
      %v2867 = vpop.permute.xlu0 %2866
      %2868 = vrot.lane.b32.xlu0 %v2359, 48
      %v2869 = vpop.permute.xlu0 %2868
      %2870 = vrot.lane.b32.xlu0 %v2360, 48
      %v2871 = vpop.permute.xlu0 %2870
      %2872 = vrot.lane.b32.xlu0 %v2361, 48
      %v2873 = vpop.permute.xlu0 %2872
      %2874 = vrot.lane.b32.xlu0 %v2362, 48
      %v2875 = vpop.permute.xlu0 %2874
      %2940 = vrot.lane.b32.xlu0 %v2363, 64
      %v2941 = vpop.permute.xlu0 %2940
      %2942 = vrot.lane.b32.xlu0 %v2364, 64
      %v2943 = vpop.permute.xlu0 %2942
      %2944 = vrot.lane.b32.xlu0 %v2365, 64
      %v2945 = vpop.permute.xlu0 %2944
      %2946 = vrot.lane.b32.xlu0 %v2366, 64
      %v2947 = vpop.permute.xlu0 %2946
      %2948 = vrot.lane.b32.xlu0 %v2367, 64
      %v2949 = vpop.permute.xlu0 %2948
      %2950 = vrot.lane.b32.xlu0 %v2368, 64
      %v2951 = vpop.permute.xlu0 %2950
      %2952 = vrot.lane.b32.xlu0 %v2369, 64
      %v2953 = vpop.permute.xlu0 %2952
      %2954 = vrot.lane.b32.xlu0 %v2370, 64
      %v2955 = vpop.permute.xlu0 %2954
      %2956 = vrot.lane.b32.xlu0 %v2371, 64
      %v2957 = vpop.permute.xlu0 %2956
      %2958 = vrot.lane.b32.xlu0 %v2372, 64
      %v2959 = vpop.permute.xlu0 %2958
      %2960 = vrot.lane.b32.xlu0 %v2373, 64
      %v2961 = vpop.permute.xlu0 %2960
      %2962 = vrot.lane.b32.xlu0 %v2374, 64
      %v2963 = vpop.permute.xlu0 %2962
      %2964 = vrot.lane.b32.xlu0 %v2375, 64
      %v2965 = vpop.permute.xlu0 %2964
      %2966 = vrot.lane.b32.xlu0 %v2376, 64
      %v2967 = vpop.permute.xlu0 %2966
      %2968 = vrot.lane.b32.xlu0 %v2377, 64
      %v2969 = vpop.permute.xlu0 %2968
      %2970 = vrot.lane.b32.xlu0 %v2378, 64
      %v2971 = vpop.permute.xlu0 %2970
      %2972 = vrot.lane.b32.xlu0 %v2379, 64
      %v2973 = vpop.permute.xlu0 %2972
      %2974 = vrot.lane.b32.xlu0 %v2380, 64
      %v2975 = vpop.permute.xlu0 %2974
      %2976 = vrot.lane.b32.xlu0 %v2381, 64
      %v2977 = vpop.permute.xlu0 %2976
      %2978 = vrot.lane.b32.xlu0 %v2382, 64
      %v2979 = vpop.permute.xlu0 %2978
      %2980 = vrot.lane.b32.xlu0 %v2383, 64
      %v2981 = vpop.permute.xlu0 %2980
      %2982 = vrot.lane.b32.xlu0 %v2384, 64
      %v2983 = vpop.permute.xlu0 %2982
      %2984 = vrot.lane.b32.xlu0 %v2385, 64
      %v2985 = vpop.permute.xlu0 %2984
      %2986 = vrot.lane.b32.xlu0 %v2386, 64
      %v2987 = vpop.permute.xlu0 %2986
      %2988 = vrot.lane.b32.xlu0 %v2387, 64
      %v2989 = vpop.permute.xlu0 %2988
      %2990 = vrot.lane.b32.xlu0 %v2388, 64
      %v2991 = vpop.permute.xlu0 %2990
      %2992 = vrot.lane.b32.xlu0 %v2389, 64
      %v2993 = vpop.permute.xlu0 %2992
      %2994 = vrot.lane.b32.xlu0 %v2390, 64
      %v2995 = vpop.permute.xlu0 %2994
      %2996 = vrot.lane.b32.xlu0 %v2391, 64
      %v2997 = vpop.permute.xlu0 %2996
      %2998 = vrot.lane.b32.xlu0 %v2392, 64
      %v2999 = vpop.permute.xlu0 %2998
      %3000 = vrot.lane.b32.xlu0 %v2393, 64
      %v3001 = vpop.permute.xlu0 %3000
      %3002 = vrot.lane.b32.xlu0 %v2394, 64
      %v3003 = vpop.permute.xlu0 %3002
      %3068 = vrot.lane.b32.xlu0 %v2395, 80
      %v3069 = vpop.permute.xlu0 %3068
      %3070 = vrot.lane.b32.xlu0 %v2396, 80
      %v3071 = vpop.permute.xlu0 %3070
      %3072 = vrot.lane.b32.xlu0 %v2397, 80
      %v3073 = vpop.permute.xlu0 %3072
      %3074 = vrot.lane.b32.xlu0 %v2398, 80
      %v3075 = vpop.permute.xlu0 %3074
      %3076 = vrot.lane.b32.xlu0 %v2399, 80
      %v3077 = vpop.permute.xlu0 %3076
      %3078 = vrot.lane.b32.xlu0 %v2400, 80
      %v3079 = vpop.permute.xlu0 %3078
      %3080 = vrot.lane.b32.xlu0 %v2401, 80
      %v3081 = vpop.permute.xlu0 %3080
      %3082 = vrot.lane.b32.xlu0 %v2402, 80
      %v3083 = vpop.permute.xlu0 %3082
      %3084 = vrot.lane.b32.xlu0 %v2403, 80
      %v3085 = vpop.permute.xlu0 %3084
      %3086 = vrot.lane.b32.xlu0 %v2404, 80
      %v3087 = vpop.permute.xlu0 %3086
      %3088 = vrot.lane.b32.xlu0 %v2405, 80
      %v3089 = vpop.permute.xlu0 %3088
      %3090 = vrot.lane.b32.xlu0 %v2406, 80
      %v3091 = vpop.permute.xlu0 %3090
      %3092 = vrot.lane.b32.xlu0 %v2407, 80
      %v3093 = vpop.permute.xlu0 %3092
      %3094 = vrot.lane.b32.xlu0 %v2408, 80
      %v3095 = vpop.permute.xlu0 %3094
      %3096 = vrot.lane.b32.xlu0 %v2409, 80
      %v3097 = vpop.permute.xlu0 %3096
      %3098 = vrot.lane.b32.xlu0 %v2410, 80
      %v3099 = vpop.permute.xlu0 %3098
      %3100 = vrot.lane.b32.xlu0 %v2411, 80
      %v3101 = vpop.permute.xlu0 %3100
      %3102 = vrot.lane.b32.xlu0 %v2412, 80
      %v3103 = vpop.permute.xlu0 %3102
      %3104 = vrot.lane.b32.xlu0 %v2413, 80
      %v3105 = vpop.permute.xlu0 %3104
      %3106 = vrot.lane.b32.xlu0 %v2414, 80
      %v3107 = vpop.permute.xlu0 %3106
      %3108 = vrot.lane.b32.xlu0 %v2415, 80
      %v3109 = vpop.permute.xlu0 %3108
      %3110 = vrot.lane.b32.xlu0 %v2416, 80
      %v3111 = vpop.permute.xlu0 %3110
      %3112 = vrot.lane.b32.xlu0 %v2417, 80
      %v3113 = vpop.permute.xlu0 %3112
      %3114 = vrot.lane.b32.xlu0 %v2418, 80
      %v3115 = vpop.permute.xlu0 %3114
      %3116 = vrot.lane.b32.xlu0 %v2419, 80
      %v3117 = vpop.permute.xlu0 %3116
      %3118 = vrot.lane.b32.xlu0 %v2420, 80
      %v3119 = vpop.permute.xlu0 %3118
      %3120 = vrot.lane.b32.xlu0 %v2421, 80
      %v3121 = vpop.permute.xlu0 %3120
      %3122 = vrot.lane.b32.xlu0 %v2422, 80
      %v3123 = vpop.permute.xlu0 %3122
      %3124 = vrot.lane.b32.xlu0 %v2423, 80
      %v3125 = vpop.permute.xlu0 %3124
      %3126 = vrot.lane.b32.xlu0 %v2424, 80
      %v3127 = vpop.permute.xlu0 %3126
      %3128 = vrot.lane.b32.xlu0 %v2425, 80
      %v3129 = vpop.permute.xlu0 %3128
      %3130 = vrot.lane.b32.xlu0 %v2426, 80
      %v3131 = vpop.permute.xlu0 %3130
      %3196 = vrot.lane.b32.xlu0 %v2428, 96
      %v3197 = vpop.permute.xlu0 %3196
      %3198 = vrot.lane.b32.xlu0 %v2429, 96
      %v3199 = vpop.permute.xlu0 %3198
      %3200 = vrot.lane.b32.xlu0 %v2430, 96
      %v3201 = vpop.permute.xlu0 %3200
      %3202 = vrot.lane.b32.xlu0 %v2431, 96
      %v3203 = vpop.permute.xlu0 %3202
      %3204 = vrot.lane.b32.xlu0 %v2432, 96
      %v3205 = vpop.permute.xlu0 %3204
      %3206 = vrot.lane.b32.xlu0 %v2433, 96
      %v3207 = vpop.permute.xlu0 %3206
      %3208 = vrot.lane.b32.xlu0 %v2434, 96
      %v3209 = vpop.permute.xlu0 %3208
      %3210 = vrot.lane.b32.xlu0 %v2435, 96
      %v3211 = vpop.permute.xlu0 %3210
      %3212 = vrot.lane.b32.xlu0 %v2436, 96
      %v3213 = vpop.permute.xlu0 %3212
      %3214 = vrot.lane.b32.xlu0 %v2437, 96
      %v3215 = vpop.permute.xlu0 %3214
      %3216 = vrot.lane.b32.xlu0 %v2438, 96
      %v3217 = vpop.permute.xlu0 %3216
      %3218 = vrot.lane.b32.xlu0 %v2439, 96
      %v3219 = vpop.permute.xlu0 %3218
      %3220 = vrot.lane.b32.xlu0 %v2440, 96
      %v3221 = vpop.permute.xlu0 %3220
      %3222 = vrot.lane.b32.xlu0 %v2441, 96
      %v3223 = vpop.permute.xlu0 %3222
      %3224 = vrot.lane.b32.xlu0 %v2442, 96
      %v3225 = vpop.permute.xlu0 %3224
      %3226 = vrot.lane.b32.xlu0 %v2443, 96
      %v3227 = vpop.permute.xlu0 %3226
      %3228 = vrot.lane.b32.xlu0 %v2444, 96
      %v3229 = vpop.permute.xlu0 %3228
      %3230 = vrot.lane.b32.xlu0 %v2445, 96
      %v3231 = vpop.permute.xlu0 %3230
      %3232 = vrot.lane.b32.xlu0 %v2446, 96
      %v3233 = vpop.permute.xlu0 %3232
      %3234 = vrot.lane.b32.xlu0 %v2447, 96
      %v3235 = vpop.permute.xlu0 %3234
      %3236 = vrot.lane.b32.xlu0 %v2448, 96
      %v3237 = vpop.permute.xlu0 %3236
      %3238 = vrot.lane.b32.xlu0 %v2449, 96
      %v3239 = vpop.permute.xlu0 %3238
      %3240 = vrot.lane.b32.xlu0 %v2450, 96
      %v3241 = vpop.permute.xlu0 %3240
      %3242 = vrot.lane.b32.xlu0 %v2451, 96
      %v3243 = vpop.permute.xlu0 %3242
      %3244 = vrot.lane.b32.xlu0 %v2452, 96
      %v3245 = vpop.permute.xlu0 %3244
      %3246 = vrot.lane.b32.xlu0 %v2453, 96
      %v3247 = vpop.permute.xlu0 %3246
      %3248 = vrot.lane.b32.xlu0 %v2454, 96
      %v3249 = vpop.permute.xlu0 %3248
      %3250 = vrot.lane.b32.xlu0 %v2455, 96
      %v3251 = vpop.permute.xlu0 %3250
      %3252 = vrot.lane.b32.xlu0 %v2456, 96
      %v3253 = vpop.permute.xlu0 %3252
      %3254 = vrot.lane.b32.xlu0 %v2457, 96
      %v3255 = vpop.permute.xlu0 %3254
      %3256 = vrot.lane.b32.xlu0 %v2458, 96
      %v3257 = vpop.permute.xlu0 %3256
      %3258 = vrot.lane.b32.xlu0 %v2459, 96
      %v3259 = vpop.permute.xlu0 %3258
      %3324 = vrot.lane.b32.xlu0 %v2460, 112
      %v3325 = vpop.permute.xlu0 %3324
      %3326 = vrot.lane.b32.xlu0 %v2461, 112
      %v3327 = vpop.permute.xlu0 %3326
      %3328 = vrot.lane.b32.xlu0 %v2462, 112
      %v3329 = vpop.permute.xlu0 %3328
      %3330 = vrot.lane.b32.xlu0 %v2463, 112
      %v3331 = vpop.permute.xlu0 %3330
      %3332 = vrot.lane.b32.xlu0 %v2464, 112
      %v3333 = vpop.permute.xlu0 %3332
      %3334 = vrot.lane.b32.xlu0 %v2465, 112
      %v3335 = vpop.permute.xlu0 %3334
      %3336 = vrot.lane.b32.xlu0 %v2466, 112
      %v3337 = vpop.permute.xlu0 %3336
      %3338 = vrot.lane.b32.xlu0 %v2467, 112
      %v3339 = vpop.permute.xlu0 %3338
      %3340 = vrot.lane.b32.xlu0 %v2468, 112
      %v3341 = vpop.permute.xlu0 %3340
      %3342 = vrot.lane.b32.xlu0 %v2469, 112
      %v3343 = vpop.permute.xlu0 %3342
      %3344 = vrot.lane.b32.xlu0 %v2470, 112
      %v3345 = vpop.permute.xlu0 %3344
      %3346 = vrot.lane.b32.xlu0 %v2471, 112
      %v3347 = vpop.permute.xlu0 %3346
      %3348 = vrot.lane.b32.xlu0 %v2472, 112
      %v3349 = vpop.permute.xlu0 %3348
      %3350 = vrot.lane.b32.xlu0 %v2473, 112
      %v3351 = vpop.permute.xlu0 %3350
      %3352 = vrot.lane.b32.xlu0 %v2474, 112
      %v3353 = vpop.permute.xlu0 %3352
      %3354 = vrot.lane.b32.xlu0 %v2475, 112
      %v3355 = vpop.permute.xlu0 %3354
      %3356 = vrot.lane.b32.xlu0 %v2476, 112
      %v3357 = vpop.permute.xlu0 %3356
      %3358 = vrot.lane.b32.xlu0 %v2477, 112
      %v3359 = vpop.permute.xlu0 %3358
      %3360 = vrot.lane.b32.xlu0 %v2478, 112
      %v3361 = vpop.permute.xlu0 %3360
      %3362 = vrot.lane.b32.xlu0 %v2479, 112
      %v3363 = vpop.permute.xlu0 %3362
      %3364 = vrot.lane.b32.xlu0 %v2480, 112
      %v3365 = vpop.permute.xlu0 %3364
      %3366 = vrot.lane.b32.xlu0 %v2481, 112
      %v3367 = vpop.permute.xlu0 %3366
      %3368 = vrot.lane.b32.xlu0 %v2482, 112
      %v3369 = vpop.permute.xlu0 %3368
      %3370 = vrot.lane.b32.xlu0 %v2483, 112
      %v3371 = vpop.permute.xlu0 %3370
      %3372 = vrot.lane.b32.xlu0 %v2484, 112
      %v3373 = vpop.permute.xlu0 %3372
      %3374 = vrot.lane.b32.xlu0 %v2485, 112
      %v3375 = vpop.permute.xlu0 %3374
      %3376 = vrot.lane.b32.xlu0 %v2486, 112
      %v3377 = vpop.permute.xlu0 %3376
      %3378 = vrot.lane.b32.xlu0 %v2487, 112
      %v3379 = vpop.permute.xlu0 %3378
      %3380 = vrot.lane.b32.xlu0 %v2488, 112
      %v3381 = vpop.permute.xlu0 %3380
      %3382 = vrot.lane.b32.xlu0 %v2489, 112
      %v3383 = vpop.permute.xlu0 %3382
      %3384 = vrot.lane.b32.xlu0 %v2490, 112
      %v3385 = vpop.permute.xlu0 %3384
      %3386 = vrot.lane.b32.xlu0 %v2491, 112
      %v3387 = vpop.permute.xlu0 %3386
      %v3420 = vsel %vm1693, %v2235, %v2557
      %v3421 = vsel %vm1693, %v2236, %v2559
      %v3422 = vsel %vm1693, %v2237, %v2561
      %v3423 = vsel %vm1693, %v2238, %v2563
      %v3424 = vsel %vm1693, %v2239, %v2565
      %v3425 = vsel %vm1693, %v2240, %v2567
      %v3426 = vsel %vm1693, %v2241, %v2569
      %v3427 = vsel %vm1693, %v2242, %v2571
      %v3428 = vsel %vm1693, %v2243, %v2573
      %v3429 = vsel %vm1693, %v2244, %v2575
      %v3430 = vsel %vm1693, %v2245, %v2577
      %v3431 = vsel %vm1693, %v2246, %v2579
      %v3432 = vsel %vm1693, %v2247, %v2581
      %v3433 = vsel %vm1693, %v2248, %v2583
      %v3434 = vsel %vm1693, %v2249, %v2585
      %v3435 = vsel %vm1693, %v2250, %v2587
      %v3436 = vsel %vm1693, %v2251, %v2589
      %v3437 = vsel %vm1693, %v2252, %v2591
      %v3438 = vsel %vm1693, %v2253, %v2593
      %v3439 = vsel %vm1693, %v2254, %v2595
      %v3440 = vsel %vm1693, %v2255, %v2597
      %v3441 = vsel %vm1693, %v2256, %v2599
      %v3442 = vsel %vm1693, %v2257, %v2601
      %v3443 = vsel %vm1693, %v2258, %v2603
      %v3444 = vsel %vm1693, %v2259, %v2605
      %v3445 = vsel %vm1693, %v2260, %v2607
      %v3446 = vsel %vm1693, %v2261, %v2609
      %v3447 = vsel %vm1693, %v2262, %v2611
      %v3448 = vsel %vm1693, %v2263, %v2613
      %v3449 = vsel %vm1693, %v2264, %v2615
      %v3450 = vsel %vm1693, %v2265, %v2617
      %v3451 = vsel %vm1693, %v2266, %v2619
      %v3452 = vsel %vm1825, %v3420, %v2685
      %v3453 = vsel %vm1825, %v3421, %v2687
      %v3454 = vsel %vm1825, %v3422, %v2689
      %v3455 = vsel %vm1825, %v3423, %v2691
      %v3456 = vsel %vm1825, %v3424, %v2693
      %v3457 = vsel %vm1825, %v3425, %v2695
      %v3458 = vsel %vm1825, %v3426, %v2697
      %v3459 = vsel %vm1825, %v3427, %v2699
      %v3460 = vsel %vm1825, %v3428, %v2701
      %v3461 = vsel %vm1825, %v3429, %v2703
      %v3462 = vsel %vm1825, %v3430, %v2705
      %v3463 = vsel %vm1825, %v3431, %v2707
      %v3464 = vsel %vm1825, %v3432, %v2709
      %v3465 = vsel %vm1825, %v3433, %v2711
      %v3466 = vsel %vm1825, %v3434, %v2713
      %v3467 = vsel %vm1825, %v3435, %v2715
      %v3468 = vsel %vm1825, %v3436, %v2717
      %v3469 = vsel %vm1825, %v3437, %v2719
      %v3470 = vsel %vm1825, %v3438, %v2721
      %v3471 = vsel %vm1825, %v3439, %v2723
      %v3472 = vsel %vm1825, %v3440, %v2725
      %v3473 = vsel %vm1825, %v3441, %v2727
      %v3474 = vsel %vm1825, %v3442, %v2729
      %v3475 = vsel %vm1825, %v3443, %v2731
      %v3476 = vsel %vm1825, %v3444, %v2733
      %v3477 = vsel %vm1825, %v3445, %v2735
      %v3478 = vsel %vm1825, %v3446, %v2737
      %v3479 = vsel %vm1825, %v3447, %v2739
      %v3480 = vsel %vm1825, %v3448, %v2741
      %v3481 = vsel %vm1825, %v3449, %v2743
      %v3482 = vsel %vm1825, %v3450, %v2745
      %v3483 = vsel %vm1825, %v3451, %v2747
      %vm3484 = vcmask 392192
      %v3485 = vsel %vm3484, %v3452, %v2813
      %v3486 = vsel %vm3484, %v3453, %v2815
      %v3487 = vsel %vm3484, %v3454, %v2817
      %v3488 = vsel %vm3484, %v3455, %v2819
      %v3489 = vsel %vm3484, %v3456, %v2821
      %v3490 = vsel %vm3484, %v3457, %v2823
      %v3491 = vsel %vm3484, %v3458, %v2825
      %v3492 = vsel %vm3484, %v3459, %v2827
      %v3493 = vsel %vm3484, %v3460, %v2829
      %v3494 = vsel %vm3484, %v3461, %v2831
      %v3495 = vsel %vm3484, %v3462, %v2833
      %v3496 = vsel %vm3484, %v3463, %v2835
      %v3497 = vsel %vm3484, %v3464, %v2837
      %v3498 = vsel %vm3484, %v3465, %v2839
      %v3499 = vsel %vm3484, %v3466, %v2841
      %v3500 = vsel %vm3484, %v3467, %v2843
      %v3501 = vsel %vm3484, %v3468, %v2845
      %v3502 = vsel %vm3484, %v3469, %v2847
      %v3503 = vsel %vm3484, %v3470, %v2849
      %v3504 = vsel %vm3484, %v3471, %v2851
      %v3505 = vsel %vm3484, %v3472, %v2853
      %v3506 = vsel %vm3484, %v3473, %v2855
      %v3507 = vsel %vm3484, %v3474, %v2857
      %v3508 = vsel %vm3484, %v3475, %v2859
      %v3509 = vsel %vm3484, %v3476, %v2861
      %v3510 = vsel %vm3484, %v3477, %v2863
      %v3511 = vsel %vm3484, %v3478, %v2865
      %v3512 = vsel %vm3484, %v3479, %v2867
      %v3513 = vsel %vm3484, %v3480, %v2869
      %v3514 = vsel %vm3484, %v3481, %v2871
      %v3515 = vsel %vm3484, %v3482, %v2873
      %v3516 = vsel %vm3484, %v3483, %v2875
      %vm3517 = vcmask 523264
      %v3518 = vsel %vm3517, %v3485, %v2941
      %v3519 = vsel %vm3517, %v3486, %v2943
      %v3520 = vsel %vm3517, %v3487, %v2945
      %v3521 = vsel %vm3517, %v3488, %v2947
      %v3522 = vsel %vm3517, %v3489, %v2949
      %v3523 = vsel %vm3517, %v3490, %v2951
      %v3524 = vsel %vm3517, %v3491, %v2953
      %v3525 = vsel %vm3517, %v3492, %v2955
      %v3526 = vsel %vm3517, %v3493, %v2957
      %v3527 = vsel %vm3517, %v3494, %v2959
      %v3528 = vsel %vm3517, %v3495, %v2961
      %v3529 = vsel %vm3517, %v3496, %v2963
      %v3530 = vsel %vm3517, %v3497, %v2965
      %v3531 = vsel %vm3517, %v3498, %v2967
      %v3532 = vsel %vm3517, %v3499, %v2969
      %v3533 = vsel %vm3517, %v3500, %v2971
      %v3534 = vsel %vm3517, %v3501, %v2973
      %v3535 = vsel %vm3517, %v3502, %v2975
      %v3536 = vsel %vm3517, %v3503, %v2977
      %v3537 = vsel %vm3517, %v3504, %v2979
      %v3538 = vsel %vm3517, %v3505, %v2981
      %v3539 = vsel %vm3517, %v3506, %v2983
      %v3540 = vsel %vm3517, %v3507, %v2985
      %v3541 = vsel %vm3517, %v3508, %v2987
      %v3542 = vsel %vm3517, %v3509, %v2989
      %v3543 = vsel %vm3517, %v3510, %v2991
      %v3544 = vsel %vm3517, %v3511, %v2993
      %v3545 = vsel %vm3517, %v3512, %v2995
      %v3546 = vsel %vm3517, %v3513, %v2997
      %v3547 = vsel %vm3517, %v3514, %v2999
      %v3548 = vsel %vm3517, %v3515, %v3001
      %v3549 = vsel %vm3517, %v3516, %v3003
      %vm3550 = vcmask 654336
      %v3551 = vsel %vm3550, %v3518, %v3069
      %v3552 = vsel %vm3550, %v3519, %v3071
      %v3553 = vsel %vm3550, %v3520, %v3073
      %v3554 = vsel %vm3550, %v3521, %v3075
      %v3555 = vsel %vm3550, %v3522, %v3077
      %v3556 = vsel %vm3550, %v3523, %v3079
      %v3557 = vsel %vm3550, %v3524, %v3081
      %v3558 = vsel %vm3550, %v3525, %v3083
      %v3559 = vsel %vm3550, %v3526, %v3085
      %v3560 = vsel %vm3550, %v3527, %v3087
      %v3561 = vsel %vm3550, %v3528, %v3089
      %v3562 = vsel %vm3550, %v3529, %v3091
      %v3563 = vsel %vm3550, %v3530, %v3093
      %v3564 = vsel %vm3550, %v3531, %v3095
      %v3565 = vsel %vm3550, %v3532, %v3097
      %v3566 = vsel %vm3550, %v3533, %v3099
      %v3567 = vsel %vm3550, %v3534, %v3101
      %v3568 = vsel %vm3550, %v3535, %v3103
      %v3569 = vsel %vm3550, %v3536, %v3105
      %v3570 = vsel %vm3550, %v3537, %v3107
      %v3571 = vsel %vm3550, %v3538, %v3109
      %v3572 = vsel %vm3550, %v3539, %v3111
      %v3573 = vsel %vm3550, %v3540, %v3113
      %v3574 = vsel %vm3550, %v3541, %v3115
      %v3575 = vsel %vm3550, %v3542, %v3117
      %v3576 = vsel %vm3550, %v3543, %v3119
      %v3577 = vsel %vm3550, %v3544, %v3121
      %v3578 = vsel %vm3550, %v3545, %v3123
      %v3579 = vsel %vm3550, %v3546, %v3125
      %v3580 = vsel %vm3550, %v3547, %v3127
      %v3581 = vsel %vm3550, %v3548, %v3129
      %v3582 = vsel %vm3550, %v3549, %v3131
      %vm3583 = vcmask 785408
      %v3584 = vsel %vm3583, %v3551, %v3197
      %v3585 = vsel %vm3583, %v3552, %v3199
      %v3586 = vsel %vm3583, %v3553, %v3201
      %v3587 = vsel %vm3583, %v3554, %v3203
      %v3588 = vsel %vm3583, %v3555, %v3205
      %v3589 = vsel %vm3583, %v3556, %v3207
      %v3590 = vsel %vm3583, %v3557, %v3209
      %v3591 = vsel %vm3583, %v3558, %v3211
      %v3592 = vsel %vm3583, %v3559, %v3213
      %v3593 = vsel %vm3583, %v3560, %v3215
      %v3594 = vsel %vm3583, %v3561, %v3217
      %v3595 = vsel %vm3583, %v3562, %v3219
      %v3596 = vsel %vm3583, %v3563, %v3221
      %v3597 = vsel %vm3583, %v3564, %v3223
      %v3598 = vsel %vm3583, %v3565, %v3225
      %v3599 = vsel %vm3583, %v3566, %v3227
      %v3600 = vsel %vm3583, %v3567, %v3229
      %v3601 = vsel %vm3583, %v3568, %v3231
      %v3602 = vsel %vm3583, %v3569, %v3233
      %v3603 = vsel %vm3583, %v3570, %v3235
      %v3604 = vsel %vm3583, %v3571, %v3237
      %v3605 = vsel %vm3583, %v3572, %v3239
      %v3606 = vsel %vm3583, %v3573, %v3241
      %v3607 = vsel %vm3583, %v3574, %v3243
      %v3608 = vsel %vm3583, %v3575, %v3245
      %v3609 = vsel %vm3583, %v3576, %v3247
      %v3610 = vsel %vm3583, %v3577, %v3249
      %v3611 = vsel %vm3583, %v3578, %v3251
      %v3612 = vsel %vm3583, %v3579, %v3253
      %v3613 = vsel %vm3583, %v3580, %v3255
      %v3614 = vsel %vm3583, %v3581, %v3257
      %v3615 = vsel %vm3583, %v3582, %v3259
      %vm3616 = vcmask 916480
      %v3617 = vsel %vm3616, %v3584, %v3325
      %v3618 = vsel %vm3616, %v3585, %v3327
      %v3619 = vsel %vm3616, %v3586, %v3329
      %v3620 = vsel %vm3616, %v3587, %v3331
      %v3621 = vsel %vm3616, %v3588, %v3333
      %v3622 = vsel %vm3616, %v3589, %v3335
      %v3623 = vsel %vm3616, %v3590, %v3337
      %v3624 = vsel %vm3616, %v3591, %v3339
      %v3625 = vsel %vm3616, %v3592, %v3341
      %v3626 = vsel %vm3616, %v3593, %v3343
      %v3627 = vsel %vm3616, %v3594, %v3345
      %v3628 = vsel %vm3616, %v3595, %v3347
      %v3629 = vsel %vm3616, %v3596, %v3349
      %v3630 = vsel %vm3616, %v3597, %v3351
      %v3631 = vsel %vm3616, %v3598, %v3353
      %v3632 = vsel %vm3616, %v3599, %v3355
      %v3633 = vsel %vm3616, %v3600, %v3357
      %v3634 = vsel %vm3616, %v3601, %v3359
      %v3635 = vsel %vm3616, %v3602, %v3361
      %v3636 = vsel %vm3616, %v3603, %v3363
      %v3637 = vsel %vm3616, %v3604, %v3365
      %v3638 = vsel %vm3616, %v3605, %v3367
      %v3639 = vsel %vm3616, %v3606, %v3369
      %v3640 = vsel %vm3616, %v3607, %v3371
      %v3641 = vsel %vm3616, %v3608, %v3373
      %v3642 = vsel %vm3616, %v3609, %v3375
      %v3643 = vsel %vm3616, %v3610, %v3377
      %v3644 = vsel %vm3616, %v3611, %v3379
      %v3645 = vsel %vm3616, %v3612, %v3381
      %v3646 = vsel %vm3616, %v3613, %v3383
      %v3647 = vsel %vm3616, %v3614, %v3385
      %v3648 = vsel %vm3616, %v3615, %v3387
      %v3649 = vpack.c.bf16 %v3618, %v3617
      %v3650 = vpack.c.bf16 %v2493, %v2492
      %v3651 = vpack.c.bf16 %v3620, %v3619
      %v3652 = vpack.c.bf16 %v2495, %v2494
      %v3653 = vpack.c.bf16 %v3622, %v3621
      %v3654 = vpack.c.bf16 %v2497, %v2496
      %v3655 = vpack.c.bf16 %v3624, %v3623
      %v3656 = vpack.c.bf16 %v2499, %v2498
      %v3657 = vpack.c.bf16 %v3626, %v3625
      %v3658 = vpack.c.bf16 %v2501, %v2500
      %v3659 = vpack.c.bf16 %v3628, %v3627
      %v3660 = vpack.c.bf16 %v2503, %v2502
      %v3661 = vpack.c.bf16 %v3630, %v3629
      %v3662 = vpack.c.bf16 %v2505, %v2504
      %v3663 = vpack.c.bf16 %v3632, %v3631
      %v3664 = vpack.c.bf16 %v2507, %v2506
      %v3665 = vpack.c.bf16 %v3634, %v3633
      %v3666 = vpack.c.bf16 %v2509, %v2508
      %v3667 = vpack.c.bf16 %v3636, %v3635
      %v3668 = vpack.c.bf16 %v2511, %v2510
      %v3669 = vpack.c.bf16 %v3638, %v3637
      %v3670 = vpack.c.bf16 %v2513, %v2512
      %v3671 = vpack.c.bf16 %v3640, %v3639
      %v3672 = vpack.c.bf16 %v2515, %v2514
      %v3673 = vpack.c.bf16 %v3642, %v3641
      %v3674 = vpack.c.bf16 %v2517, %v2516
      %v3675 = vpack.c.bf16 %v3644, %v3643
      %v3676 = vpack.c.bf16 %v2519, %v2518
      %v3677 = vpack.c.bf16 %v3646, %v3645
      %v3678 = vpack.c.bf16 %v2521, %v2520
      %v3679 = vpack.c.bf16 %v3648, %v3647
      %v3680 = vpack.c.bf16 %v2523, %v2522
      %v3681 = vld [vmem:[%s3] sm:$0xf]
      %v3682 = vld [vmem:[%s3 + $0x4] sm:$0xf]
      %v3683 = vld [vmem:[%s3 + $0x8] sm:$0xf]
      %v3684 = vld [vmem:[%s3 + $0xc] sm:$0xf]
      %v3685 = vld [vmem:[%s3 + $0x10] sm:$0xf]
      %v3686 = vld [vmem:[%s3 + $0x14] sm:$0xf]
      %v3687 = vld [vmem:[%s3 + $0x18] sm:$0xf]
      %v3688 = vld [vmem:[%s3 + $0x1c] sm:$0xf]
      %v3689 = vld [vmem:[%s3 + $0x20] sm:$0xf]
      %v3690 = vld [vmem:[%s3 + $0x24] sm:$0xf]
      %v3691 = vld [vmem:[%s3 + $0x28] sm:$0xf]
      %v3692 = vld [vmem:[%s3 + $0x2c] sm:$0xf]
      %v3693 = vld [vmem:[%s3 + $0x30] sm:$0xf]
      %v3694 = vld [vmem:[%s3 + $0x34] sm:$0xf]
      %v3695 = vld [vmem:[%s3 + $0x38] sm:$0xf]
      %v3696 = vld [vmem:[%s3 + $0x3c] sm:$0xf]
      %v3697 = vld [vmem:[%s3 + $0x40] sm:$0xf]
      %v3698 = vld [vmem:[%s3 + $0x44] sm:$0xf]
      %v3699 = vld [vmem:[%s4] sm:$0x1]
      %v3701 = vlaneseq
      %v3702 = vshrl.u32 %v3701, 7
      %v3703 = vsub.s32 0, %v3702
      %v3704 = vrot.slane %v3699, %v3703
      %v3724 = vunpack.c.l.b16 %v3681
      %v3725 = vunpack.c.l.b16 %v3682
      %v3726 = vunpack.c.l.b16 %v3683
      %v3727 = vunpack.c.l.b16 %v3684
      %v3728 = vunpack.c.l.b16 %v3685
      %v3729 = vunpack.c.l.b16 %v3686
      %v3730 = vunpack.c.l.b16 %v3687
      %v3731 = vunpack.c.l.b16 %v3688
      %v3732 = vunpack.c.l.b16 %v3689
      %v3733 = vunpack.c.l.b16 %v3690
      %v3734 = vunpack.c.l.b16 %v3691
      %v3735 = vunpack.c.l.b16 %v3692
      %v3736 = vunpack.c.l.b16 %v3693
      %v3737 = vunpack.c.l.b16 %v3694
      %v3738 = vunpack.c.l.b16 %v3695
      %v3739 = vunpack.c.l.b16 %v3696
      %v3740 = vunpack.c.l.b16 %v3697
      %v3741 = vunpack.c.l.b16 %v3698
      %v3742 = vpack.c.b16 %v3725, %v3724
      %v3743 = vpack.c.b16 %v3727, %v3726
      %v3744 = vpack.c.b16 %v3729, %v3728
      %v3745 = vpack.c.b16 %v3731, %v3730
      %v3746 = vpack.c.b16 %v3733, %v3732
      %v3747 = vpack.c.b16 %v3735, %v3734
      %v3748 = vpack.c.b16 %v3737, %v3736
      %v3749 = vpack.c.b16 %v3739, %v3738
      %v3750 = vpack.c.b16 %v3741, %v3740
      %v3761 = vsel %vm1693, %v3650, 0
      %v3764 = vsel %vm1693, %v3652, 0
      %v3767 = vsel %vm1693, %v3654, 0
      %v3770 = vsel %vm1693, %v3656, 0
      %v3773 = vsel %vm1693, %v3658, 0
      %v3776 = vsel %vm1693, %v3660, 0
      %v3779 = vsel %vm1693, %v3662, 0
      %v3782 = vsel %vm1693, %v3664, 0
      %v3785 = vsel %vm1693, %v3666, 0
      %v3788 = vsel %vm1693, %v3668, 0
      %v3791 = vsel %vm1693, %v3670, 0
      %v3794 = vsel %vm1693, %v3672, 0
      %v3797 = vsel %vm1693, %v3674, 0
      %v3800 = vsel %vm1693, %v3676, 0
      %v3803 = vsel %vm1693, %v3678, 0
      %v3806 = vsel %vm1693, %v3680, 0
      %3808 = vmatprep.subr.bf16.mxu0 0
      %3809 = vmatpush1.bf16.msra.mxu0 %v3749
      %3810 = vmatprep.subr.bf16.mxu0 0
      %3811 = vmatpush1.bf16.msra.mxu0 %v3748
      %3812 = vmatprep.subr.bf16.mxu0 0
      %3813 = vmatpush1.bf16.msra.mxu0 %v3747
      %3814 = vmatprep.subr.bf16.mxu0 0
      %3815 = vmatpush1.bf16.msra.mxu0 %v3746
      %3816 = vmatprep.subr.bf16.mxu0 0
      %3817 = vmatpush1.bf16.msra.mxu0 %v3745
      %3818 = vmatprep.subr.bf16.mxu0 0
      %3819 = vmatpush1.bf16.msra.mxu0 %v3744
      %3820 = vmatprep.subr.bf16.mxu0 0
      %3821 = vmatpush1.bf16.msra.mxu0 %v3743
      %3822 = vmatprep.subr.bf16.mxu0 0
      %3823 = vmatpush1.bf16.msra.mxu0 %v3742
      %3824 = vmatprep.subr.bf16.mxu0 0
      %3825 = vmatpush2.bf16.msra.mxu0 0
      %3826 = vmatprep.subr.bf16.mxu0 0
      %3827 = vmatpush2.bf16.msra.mxu0 0
      %3828 = vmatprep.subr.bf16.mxu0 0
      %3829 = vmatpush2.bf16.msra.mxu0 0
      %3830 = vmatprep.subr.bf16.mxu0 0
      %3831 = vmatpush2.bf16.msra.mxu0 0
      %3832 = vmatprep.subr.bf16.mxu0 0
      %3833 = vmatpush2.bf16.msra.mxu0 0
      %3834 = vmatprep.subr.bf16.mxu0 0
      %3835 = vmatpush2.bf16.msra.mxu0 0
      %3836 = vmatprep.subr.bf16.mxu0 0
      %3837 = vmatpush2.bf16.msra.mxu0 0
      %3838 = vmatprep.subr.bf16.mxu0 0
      %3839 = vmatpush2.bf16.msra.mxu0 %v3750
      %3840 = vmatprep.mubr.bf16.mxu0 %v3761
      %3841 = vmatmul.mubr.bf16.gmra.mxu0 %v3649
      %v3842 = vpop.f32.mrf.mxu0
      %v3843 = vadd.f32 %v3704, %v3842
      %v3844 = vpop.f32.mrf.mxu0
      %v3845 = vpop.f32.mrf.mxu0
      %v3846 = vadd.f32 %v3704, %v3845
      %v3847 = vpop.f32.mrf.mxu0
      %3848 = vmatprep.mubr.bf16.mxu0 %v3764
      %3849 = vmatmul.mubr.bf16.gmra.mxu0 %v3651
      %v3850 = vpop.f32.mrf.mxu0
      %v3851 = vadd.f32 %v3704, %v3850
      %v3852 = vpop.f32.mrf.mxu0
      %v3853 = vpop.f32.mrf.mxu0
      %v3854 = vadd.f32 %v3704, %v3853
      %v3855 = vpop.f32.mrf.mxu0
      %3856 = vmatprep.mubr.bf16.mxu0 %v3767
      %3857 = vmatmul.mubr.bf16.gmra.mxu0 %v3653
      %v3858 = vpop.f32.mrf.mxu0
      %v3859 = vadd.f32 %v3704, %v3858
      %v3860 = vpop.f32.mrf.mxu0
      %v3861 = vpop.f32.mrf.mxu0
      %v3862 = vadd.f32 %v3704, %v3861
      %v3863 = vpop.f32.mrf.mxu0
      %3864 = vmatprep.mubr.bf16.mxu0 %v3770
      %3865 = vmatmul.mubr.bf16.gmra.mxu0 %v3655
      %v3866 = vpop.f32.mrf.mxu0
      %v3867 = vadd.f32 %v3704, %v3866
      %v3868 = vpop.f32.mrf.mxu0
      %v3869 = vpop.f32.mrf.mxu0
      %v3870 = vadd.f32 %v3704, %v3869
      %v3871 = vpop.f32.mrf.mxu0
      %3872 = vmatprep.mubr.bf16.mxu0 %v3773
      %3873 = vmatmul.mubr.bf16.gmra.mxu0 %v3657
      %v3874 = vpop.f32.mrf.mxu0
      %v3875 = vadd.f32 %v3704, %v3874
      %v3876 = vpop.f32.mrf.mxu0
      %v3877 = vpop.f32.mrf.mxu0
      %v3878 = vadd.f32 %v3704, %v3877
      %v3879 = vpop.f32.mrf.mxu0
      %3880 = vmatprep.mubr.bf16.mxu0 %v3776
      %3881 = vmatmul.mubr.bf16.gmra.mxu0 %v3659
      %v3882 = vpop.f32.mrf.mxu0
      %v3883 = vadd.f32 %v3704, %v3882
      %v3884 = vpop.f32.mrf.mxu0
      %v3885 = vpop.f32.mrf.mxu0
      %v3886 = vadd.f32 %v3704, %v3885
      %v3887 = vpop.f32.mrf.mxu0
      %3888 = vmatprep.mubr.bf16.mxu0 %v3779
      %3889 = vmatmul.mubr.bf16.gmra.mxu0 %v3661
      %v3890 = vpop.f32.mrf.mxu0
      %v3891 = vadd.f32 %v3704, %v3890
      %v3892 = vpop.f32.mrf.mxu0
      %v3893 = vpop.f32.mrf.mxu0
      %v3894 = vadd.f32 %v3704, %v3893
      %v3895 = vpop.f32.mrf.mxu0
      %3896 = vmatprep.mubr.bf16.mxu0 %v3782
      %3897 = vmatmul.mubr.bf16.gmra.mxu0 %v3663
      %v3898 = vpop.f32.mrf.mxu0
      %v3899 = vadd.f32 %v3704, %v3898
      %v3900 = vpop.f32.mrf.mxu0
      %v3901 = vpop.f32.mrf.mxu0
      %v3902 = vadd.f32 %v3704, %v3901
      %v3903 = vpop.f32.mrf.mxu0
      %3904 = vmatprep.mubr.bf16.mxu0 %v3785
      %3905 = vmatmul.mubr.bf16.gmra.mxu0 %v3665
      %v3906 = vpop.f32.mrf.mxu0
      %v3907 = vadd.f32 %v3704, %v3906
      %v3908 = vpop.f32.mrf.mxu0
      %v3909 = vpop.f32.mrf.mxu0
      %v3910 = vadd.f32 %v3704, %v3909
      %v3911 = vpop.f32.mrf.mxu0
      %3912 = vmatprep.mubr.bf16.mxu0 %v3788
      %3913 = vmatmul.mubr.bf16.gmra.mxu0 %v3667
      %v3914 = vpop.f32.mrf.mxu0
      %v3915 = vadd.f32 %v3704, %v3914
      %v3916 = vpop.f32.mrf.mxu0
      %v3917 = vpop.f32.mrf.mxu0
      %v3918 = vadd.f32 %v3704, %v3917
      %v3919 = vpop.f32.mrf.mxu0
      %3920 = vmatprep.mubr.bf16.mxu0 %v3791
      %3921 = vmatmul.mubr.bf16.gmra.mxu0 %v3669
      %v3922 = vpop.f32.mrf.mxu0
      %v3923 = vadd.f32 %v3704, %v3922
      %v3924 = vpop.f32.mrf.mxu0
      %v3925 = vpop.f32.mrf.mxu0
      %v3926 = vadd.f32 %v3704, %v3925
      %v3927 = vpop.f32.mrf.mxu0
      %3928 = vmatprep.mubr.bf16.mxu0 %v3794
      %3929 = vmatmul.mubr.bf16.gmra.mxu0 %v3671
      %v3930 = vpop.f32.mrf.mxu0
      %v3931 = vadd.f32 %v3704, %v3930
      %v3932 = vpop.f32.mrf.mxu0
      %v3933 = vpop.f32.mrf.mxu0
      %v3934 = vadd.f32 %v3704, %v3933
      %v3935 = vpop.f32.mrf.mxu0
      %3936 = vmatprep.mubr.bf16.mxu0 %v3797
      %3937 = vmatmul.mubr.bf16.gmra.mxu0 %v3673
      %v3938 = vpop.f32.mrf.mxu0
      %v3939 = vadd.f32 %v3704, %v3938
      %v3940 = vpop.f32.mrf.mxu0
      %v3941 = vpop.f32.mrf.mxu0
      %v3942 = vadd.f32 %v3704, %v3941
      %v3943 = vpop.f32.mrf.mxu0
      %3944 = vmatprep.mubr.bf16.mxu0 %v3800
      %3945 = vmatmul.mubr.bf16.gmra.mxu0 %v3675
      %v3946 = vpop.f32.mrf.mxu0
      %v3947 = vadd.f32 %v3704, %v3946
      %v3948 = vpop.f32.mrf.mxu0
      %v3949 = vpop.f32.mrf.mxu0
      %v3950 = vadd.f32 %v3704, %v3949
      %v3951 = vpop.f32.mrf.mxu0
      %3952 = vmatprep.mubr.bf16.mxu0 %v3803
      %3953 = vmatmul.mubr.bf16.gmra.mxu0 %v3677
      %v3954 = vpop.f32.mrf.mxu0
      %v3955 = vadd.f32 %v3704, %v3954
      %v3956 = vpop.f32.mrf.mxu0
      %v3957 = vpop.f32.mrf.mxu0
      %v3958 = vadd.f32 %v3704, %v3957
      %v3959 = vpop.f32.mrf.mxu0
      %3960 = vmatprep.mubr.bf16.mxu0 %v3806
      %3961 = vmatmul.mubr.bf16.gmra.mxu0 %v3679
      %v3962 = vpop.f32.mrf.mxu0
      %v3963 = vadd.f32 %v3704, %v3962
      %v3964 = vpop.f32.mrf.mxu0
      %v3965 = vpop.f32.mrf.mxu0
      %v3966 = vadd.f32 %v3704, %v3965
      %v3967 = vpop.f32.mrf.mxu0
      %3968 = vdwg.mxu0
      %v3969 = vld [vmem:[%s376 + $0x1] sm:$0xff]
      %v3970 = vld [vmem:[%s376 + $0x9] sm:$0xff]
      %v3971 = vld [vmem:[%s376 + $0x19] sm:$0xff]
      %v3972 = vld [vmem:[%s376 + $0x21] sm:$0xff]
      %v3973 = vld [vmem:[%s376 + $0x31] sm:$0xff]
      %v3974 = vld [vmem:[%s376 + $0x39] sm:$0xff]
      %v3975 = vld [vmem:[%s376 + $0x49] sm:$0xff]
      %v3976 = vld [vmem:[%s376 + $0x51] sm:$0xff]
      %v3977 = vld [vmem:[%s376 + $0x61] sm:$0xff]
      %v3978 = vld [vmem:[%s376 + $0x69] sm:$0xff]
      %v3979 = vld [vmem:[%s376 + $0x79] sm:$0xff]
      %v3980 = vld [vmem:[%s376 + $0x81] sm:$0xff]
      %v3981 = vld [vmem:[%s376 + $0x91] sm:$0xff]
      %v3982 = vld [vmem:[%s376 + $0x99] sm:$0xff]
      %v3983 = vld [vmem:[%s376 + $0xa9] sm:$0xff]
      %v3984 = vld [vmem:[%s376 + $0xb1] sm:$0xff]
      %v3985 = vld [vmem:[%s376 + $0xc1] sm:$0xff]
      %v3986 = vld [vmem:[%s376 + $0xc9] sm:$0xff]
      %v3987 = vld [vmem:[%s376 + $0xd9] sm:$0xff]
      %v3988 = vld [vmem:[%s376 + $0xe1] sm:$0xff]
      %v3989 = vld [vmem:[%s376 + $0xf1] sm:$0xff]
      %v3990 = vld [vmem:[%s376 + $0xf9] sm:$0xff]
      %v3991 = vld [vmem:[%s376 + $0x109] sm:$0xff]
      %v3992 = vld [vmem:[%s376 + $0x111] sm:$0xff]
      %v3993 = vld [vmem:[%s376 + $0x121] sm:$0xff]
      %v3994 = vld [vmem:[%s376 + $0x129] sm:$0xff]
      %v3995 = vld [vmem:[%s376 + $0x139] sm:$0xff]
      %v3996 = vld [vmem:[%s376 + $0x141] sm:$0xff]
      %v3997 = vld [vmem:[%s376 + $0x151] sm:$0xff]
      %v3998 = vld [vmem:[%s376 + $0x159] sm:$0xff]
      %v3999 = vld [vmem:[%s376 + $0x169] sm:$0xff]
      %v4000 = vld [vmem:[%s376 + $0x171] sm:$0xff]
      %v4001 = vpack.c.bf16 %v3970, %v3969
      %v4002 = vpack.c.bf16 %v3972, %v3971
      %v4003 = vpack.c.bf16 %v3974, %v3973
      %v4004 = vpack.c.bf16 %v3976, %v3975
      %v4005 = vpack.c.bf16 %v3978, %v3977
      %v4006 = vpack.c.bf16 %v3980, %v3979
      %v4007 = vpack.c.bf16 %v3982, %v3981
      %v4008 = vpack.c.bf16 %v3984, %v3983
      %v4009 = vpack.c.bf16 %v3986, %v3985
      %v4010 = vpack.c.bf16 %v3988, %v3987
      %v4011 = vpack.c.bf16 %v3990, %v3989
      %v4012 = vpack.c.bf16 %v3992, %v3991
      %v4013 = vpack.c.bf16 %v3994, %v3993
      %v4014 = vpack.c.bf16 %v3996, %v3995
      %v4015 = vpack.c.bf16 %v3998, %v3997
      %v4016 = vpack.c.bf16 %v4000, %v3999
      %v4017 = vld [vmem:[%s5] sm:$0x3]
      %v4018 = vld [vmem:[%s6] sm:$0x1]
      %v4020 = vlaneseq
      %v4021 = vshrl.u32 %v4020, 7
      %v4022 = vsub.s32 0, %v4021
      %v4023 = vrot.slane %v4018, %v4022
      %v4026 = vsel %vm1594, %v4001, 0
      %v4029 = vsel %vm1594, %v4002, 0
      %v4032 = vsel %vm1594, %v4003, 0
      %v4035 = vsel %vm1594, %v4004, 0
      %v4038 = vsel %vm1594, %v4005, 0
      %v4041 = vsel %vm1594, %v4006, 0
      %v4044 = vsel %vm1594, %v4007, 0
      %v4047 = vsel %vm1594, %v4008, 0
      %v4050 = vsel %vm1594, %v4009, 0
      %v4053 = vsel %vm1594, %v4010, 0
      %v4056 = vsel %vm1594, %v4011, 0
      %v4059 = vsel %vm1594, %v4012, 0
      %v4062 = vsel %vm1594, %v4013, 0
      %v4065 = vsel %vm1594, %v4014, 0
      %v4068 = vsel %vm1594, %v4015, 0
      %v4071 = vsel %vm1594, %v4016, 0
      %v4074 = vsel %vm1950, %v4017, 0
      %4076 = vmatprep.subr.bf16.mxu0 0
      %4077 = vmatpush1.bf16.msra.mxu0 0
      %4078 = vmatprep.subr.bf16.mxu0 0
      %4079 = vmatpush1.bf16.msra.mxu0 0
      %4080 = vmatprep.subr.bf16.mxu0 0
      %4081 = vmatpush1.bf16.msra.mxu0 0
      %4082 = vmatprep.subr.bf16.mxu0 0
      %4083 = vmatpush1.bf16.msra.mxu0 0
      %4084 = vmatprep.subr.bf16.mxu0 0
      %4085 = vmatpush1.bf16.msra.mxu0 0
      %4086 = vmatprep.subr.bf16.mxu0 0
      %4087 = vmatpush1.bf16.msra.mxu0 0
      %4088 = vmatprep.subr.bf16.mxu0 0
      %4089 = vmatpush1.bf16.msra.mxu0 0
      %4090 = vmatprep.subr.bf16.mxu0 0
      %4091 = vmatpush1.bf16.msra.mxu0 %v4074
      %4092 = vmatprep.subr.bf16.mxu0 0
      %4093 = vmatpush2.bf16.msra.mxu0 0
      %4094 = vmatprep.subr.bf16.mxu0 0
      %4095 = vmatpush2.bf16.msra.mxu0 0
      %4096 = vmatprep.subr.bf16.mxu0 0
      %4097 = vmatpush2.bf16.msra.mxu0 0
      %4098 = vmatprep.subr.bf16.mxu0 0
      %4099 = vmatpush2.bf16.msra.mxu0 0
      %4100 = vmatprep.subr.bf16.mxu0 0
      %4101 = vmatpush2.bf16.msra.mxu0 0
      %4102 = vmatprep.subr.bf16.mxu0 0
      %4103 = vmatpush2.bf16.msra.mxu0 0
      %4104 = vmatprep.subr.bf16.mxu0 0
      %4105 = vmatpush2.bf16.msra.mxu0 0
      %4106 = vmatprep.subr.bf16.mxu0 0
      %4107 = vmatpush2.bf16.msra.mxu0 0
      %4108 = vmatprep.mubr.bf16.mxu0 0
      %4109 = vmatmul.mubr.bf16.gmra.mxu0 %v4026
      %v4110 = vpop.f32.mrf.mxu0
      %v4111 = vadd.f32 %v4023, %v4110
      %v4112 = vpop.f32.mrf.mxu0
      %v4113 = vpop.f32.mrf.mxu0
      %v4114 = vadd.f32 %v4023, %v4113
      %v4115 = vpop.f32.mrf.mxu0
      %4116 = vmatprep.mubr.bf16.mxu0 0
      %4117 = vmatmul.mubr.bf16.gmra.mxu0 %v4029
      %v4118 = vpop.f32.mrf.mxu0
      %v4119 = vadd.f32 %v4023, %v4118
      %v4120 = vpop.f32.mrf.mxu0
      %v4121 = vpop.f32.mrf.mxu0
      %v4122 = vadd.f32 %v4023, %v4121
      %v4123 = vpop.f32.mrf.mxu0
      %4124 = vmatprep.mubr.bf16.mxu0 0
      %4125 = vmatmul.mubr.bf16.gmra.mxu0 %v4032
      %v4126 = vpop.f32.mrf.mxu0
      %v4127 = vadd.f32 %v4023, %v4126
      %v4128 = vpop.f32.mrf.mxu0
      %v4129 = vpop.f32.mrf.mxu0
      %v4130 = vadd.f32 %v4023, %v4129
      %v4131 = vpop.f32.mrf.mxu0
      %4132 = vmatprep.mubr.bf16.mxu0 0
      %4133 = vmatmul.mubr.bf16.gmra.mxu0 %v4035
      %v4134 = vpop.f32.mrf.mxu0
      %v4135 = vadd.f32 %v4023, %v4134
      %v4136 = vpop.f32.mrf.mxu0
      %v4137 = vpop.f32.mrf.mxu0
      %v4138 = vadd.f32 %v4023, %v4137
      %v4139 = vpop.f32.mrf.mxu0
      %4140 = vmatprep.mubr.bf16.mxu0 0
      %4141 = vmatmul.mubr.bf16.gmra.mxu0 %v4038
      %v4142 = vpop.f32.mrf.mxu0
      %v4143 = vadd.f32 %v4023, %v4142
      %v4144 = vpop.f32.mrf.mxu0
      %v4145 = vpop.f32.mrf.mxu0
      %v4146 = vadd.f32 %v4023, %v4145
      %v4147 = vpop.f32.mrf.mxu0
      %4148 = vmatprep.mubr.bf16.mxu0 0
      %4149 = vmatmul.mubr.bf16.gmra.mxu0 %v4041
      %v4150 = vpop.f32.mrf.mxu0
      %v4151 = vadd.f32 %v4023, %v4150
      %v4152 = vpop.f32.mrf.mxu0
      %v4153 = vpop.f32.mrf.mxu0
      %v4154 = vadd.f32 %v4023, %v4153
      %v4155 = vpop.f32.mrf.mxu0
      %4156 = vmatprep.mubr.bf16.mxu0 0
      %4157 = vmatmul.mubr.bf16.gmra.mxu0 %v4044
      %v4158 = vpop.f32.mrf.mxu0
      %v4159 = vadd.f32 %v4023, %v4158
      %v4160 = vpop.f32.mrf.mxu0
      %v4161 = vpop.f32.mrf.mxu0
      %v4162 = vadd.f32 %v4023, %v4161
      %v4163 = vpop.f32.mrf.mxu0
      %4164 = vmatprep.mubr.bf16.mxu0 0
      %4165 = vmatmul.mubr.bf16.gmra.mxu0 %v4047
      %v4166 = vpop.f32.mrf.mxu0
      %v4167 = vadd.f32 %v4023, %v4166
      %v4168 = vpop.f32.mrf.mxu0
      %v4169 = vpop.f32.mrf.mxu0
      %v4170 = vadd.f32 %v4023, %v4169
      %v4171 = vpop.f32.mrf.mxu0
      %4172 = vmatprep.mubr.bf16.mxu0 0
      %4173 = vmatmul.mubr.bf16.gmra.mxu0 %v4050
      %v4174 = vpop.f32.mrf.mxu0
      %v4175 = vadd.f32 %v4023, %v4174
      %v4176 = vpop.f32.mrf.mxu0
      %v4177 = vpop.f32.mrf.mxu0
      %v4178 = vadd.f32 %v4023, %v4177
      %v4179 = vpop.f32.mrf.mxu0
      %4180 = vmatprep.mubr.bf16.mxu0 0
      %4181 = vmatmul.mubr.bf16.gmra.mxu0 %v4053
      %v4182 = vpop.f32.mrf.mxu0
      %v4183 = vadd.f32 %v4023, %v4182
      %v4184 = vpop.f32.mrf.mxu0
      %v4185 = vpop.f32.mrf.mxu0
      %v4186 = vadd.f32 %v4023, %v4185
      %v4187 = vpop.f32.mrf.mxu0
      %4188 = vmatprep.mubr.bf16.mxu0 0
      %4189 = vmatmul.mubr.bf16.gmra.mxu0 %v4056
      %v4190 = vpop.f32.mrf.mxu0
      %v4191 = vadd.f32 %v4023, %v4190
      %v4192 = vpop.f32.mrf.mxu0
      %v4193 = vpop.f32.mrf.mxu0
      %v4194 = vadd.f32 %v4023, %v4193
      %v4195 = vpop.f32.mrf.mxu0
      %4196 = vmatprep.mubr.bf16.mxu0 0
      %4197 = vmatmul.mubr.bf16.gmra.mxu0 %v4059
      %v4198 = vpop.f32.mrf.mxu0
      %v4199 = vadd.f32 %v4023, %v4198
      %v4200 = vpop.f32.mrf.mxu0
      %v4201 = vpop.f32.mrf.mxu0
      %v4202 = vadd.f32 %v4023, %v4201
      %v4203 = vpop.f32.mrf.mxu0
      %4204 = vmatprep.mubr.bf16.mxu0 0
      %4205 = vmatmul.mubr.bf16.gmra.mxu0 %v4062
      %v4206 = vpop.f32.mrf.mxu0
      %v4207 = vadd.f32 %v4023, %v4206
      %v4208 = vpop.f32.mrf.mxu0
      %v4209 = vpop.f32.mrf.mxu0
      %v4210 = vadd.f32 %v4023, %v4209
      %v4211 = vpop.f32.mrf.mxu0
      %4212 = vmatprep.mubr.bf16.mxu0 0
      %4213 = vmatmul.mubr.bf16.gmra.mxu0 %v4065
      %v4214 = vpop.f32.mrf.mxu0
      %v4215 = vadd.f32 %v4023, %v4214
      %v4216 = vpop.f32.mrf.mxu0
      %v4217 = vpop.f32.mrf.mxu0
      %v4218 = vadd.f32 %v4023, %v4217
      %v4219 = vpop.f32.mrf.mxu0
      %4220 = vmatprep.mubr.bf16.mxu0 0
      %4221 = vmatmul.mubr.bf16.gmra.mxu0 %v4068
      %v4222 = vpop.f32.mrf.mxu0
      %v4223 = vadd.f32 %v4023, %v4222
      %v4224 = vpop.f32.mrf.mxu0
      %v4225 = vpop.f32.mrf.mxu0
      %v4226 = vadd.f32 %v4023, %v4225
      %v4227 = vpop.f32.mrf.mxu0
      %4228 = vmatprep.mubr.bf16.mxu0 0
      %4229 = vmatmul.mubr.bf16.gmra.mxu0 %v4071
      %v4230 = vpop.f32.mrf.mxu0
      %v4231 = vadd.f32 %v4023, %v4230
      %v4232 = vpop.f32.mrf.mxu0
      %v4233 = vpop.f32.mrf.mxu0
      %v4234 = vadd.f32 %v4023, %v4233
      %v4235 = vpop.f32.mrf.mxu0
      %4236 = vdwg.mxu0
      %v4237 = vadd.f32 %v3843, %v4111
      %v4238 = vadd.f32 %v3846, %v4114
      %v4239 = vadd.f32 %v3851, %v4119
      %v4240 = vadd.f32 %v3854, %v4122
      %v4241 = vadd.f32 %v3859, %v4127
      %v4242 = vadd.f32 %v3862, %v4130
      %v4243 = vadd.f32 %v3867, %v4135
      %v4244 = vadd.f32 %v3870, %v4138
      %v4245 = vadd.f32 %v3875, %v4143
      %v4246 = vadd.f32 %v3878, %v4146
      %v4247 = vadd.f32 %v3883, %v4151
      %v4248 = vadd.f32 %v3886, %v4154
      %v4249 = vadd.f32 %v3891, %v4159
      %v4250 = vadd.f32 %v3894, %v4162
      %v4251 = vadd.f32 %v3899, %v4167
      %v4252 = vadd.f32 %v3902, %v4170
      %v4253 = vadd.f32 %v3907, %v4175
      %v4254 = vadd.f32 %v3910, %v4178
      %v4255 = vadd.f32 %v3915, %v4183
      %v4256 = vadd.f32 %v3918, %v4186
      %v4257 = vadd.f32 %v3923, %v4191
      %v4258 = vadd.f32 %v3926, %v4194
      %v4259 = vadd.f32 %v3931, %v4199
      %v4260 = vadd.f32 %v3934, %v4202
      %v4261 = vadd.f32 %v3939, %v4207
      %v4262 = vadd.f32 %v3942, %v4210
      %v4263 = vadd.f32 %v3947, %v4215
      %v4264 = vadd.f32 %v3950, %v4218
      %v4265 = vadd.f32 %v3955, %v4223
      %v4266 = vadd.f32 %v3958, %v4226
      %v4267 = vadd.f32 %v3963, %v4231
      %v4268 = vadd.f32 %v3966, %v4234
      %v4269 = vmax.f32 %v4237, 0.0
      %v4270 = vmax.f32 %v4238, 0.0
      %v4271 = vmax.f32 %v4239, 0.0
      %v4272 = vmax.f32 %v4240, 0.0
      %v4273 = vmax.f32 %v4241, 0.0
      %v4274 = vmax.f32 %v4242, 0.0
      %v4275 = vmax.f32 %v4243, 0.0
      %v4276 = vmax.f32 %v4244, 0.0
      %v4277 = vmax.f32 %v4245, 0.0
      %v4278 = vmax.f32 %v4246, 0.0
      %v4279 = vmax.f32 %v4247, 0.0
      %v4280 = vmax.f32 %v4248, 0.0
      %v4281 = vmax.f32 %v4249, 0.0
      %v4282 = vmax.f32 %v4250, 0.0
      %v4283 = vmax.f32 %v4251, 0.0
      %v4284 = vmax.f32 %v4252, 0.0
      %v4285 = vmax.f32 %v4253, 0.0
      %v4286 = vmax.f32 %v4254, 0.0
      %v4287 = vmax.f32 %v4255, 0.0
      %v4288 = vmax.f32 %v4256, 0.0
      %v4289 = vmax.f32 %v4257, 0.0
      %v4290 = vmax.f32 %v4258, 0.0
      %v4291 = vmax.f32 %v4259, 0.0
      %v4292 = vmax.f32 %v4260, 0.0
      %v4293 = vmax.f32 %v4261, 0.0
      %v4294 = vmax.f32 %v4262, 0.0
      %v4295 = vmax.f32 %v4263, 0.0
      %v4296 = vmax.f32 %v4264, 0.0
      %v4297 = vmax.f32 %v4265, 0.0
      %v4298 = vmax.f32 %v4266, 0.0
      %v4299 = vmax.f32 %v4267, 0.0
      %v4300 = vmax.f32 %v4268, 0.0
      %4301 = vxpose.xlu0.b32.start [1/16] %v4269, 128
      %4302 = vxpose.xlu0.b32.cont [2/16] %v4270, 128
      %4303 = vxpose.xlu0.b32.cont [3/16] %v4271, 128
      %4304 = vxpose.xlu0.b32.cont [4/16] %v4272, 128
      %4305 = vxpose.xlu0.b32.cont [5/16] %v4273, 128
      %4306 = vxpose.xlu0.b32.cont [6/16] %v4274, 128
      %4307 = vxpose.xlu0.b32.cont [7/16] %v4275, 128
      %4308 = vxpose.xlu0.b32.cont [8/16] %v4276, 128
      %4309 = vxpose.xlu0.b32.cont [9/16] %v4277, 128
      %4310 = vxpose.xlu0.b32.cont [10/16] %v4278, 128
      %4311 = vxpose.xlu0.b32.cont [11/16] %v4279, 128
      %4312 = vxpose.xlu0.b32.cont [12/16] %v4280, 128
      %4313 = vxpose.xlu0.b32.cont [13/16] %v4281, 128
      %4314 = vxpose.xlu0.b32.cont [14/16] %v4282, 128
      %4315 = vxpose.xlu0.b32.cont [15/16] %v4283, 128
      %4316 = vxpose.xlu0.b32.end [16/16] %v4284, 128
      %v4317 = vpop.trf.xlu0
      %v4318 = vpop.trf.xlu0
      %v4319 = vpop.trf.xlu0
      %v4320 = vpop.trf.xlu0
      %v4321 = vpop.trf.xlu0
      %v4322 = vpop.trf.xlu0
      %v4323 = vpop.trf.xlu0
      %v4324 = vpop.trf.xlu0
      %v4325 = vpop.trf.xlu0
      %v4326 = vpop.trf.xlu0
      %v4327 = vpop.trf.xlu0
      %v4328 = vpop.trf.xlu0
      %v4329 = vpop.trf.xlu0
      %v4330 = vpop.trf.xlu0
      %v4331 = vpop.trf.xlu0
      %v4332 = vpop.trf.xlu0
      %4333 = vxpose.xlu0.b32.start [1/16] %v4285, 128
      %4334 = vxpose.xlu0.b32.cont [2/16] %v4286, 128
      %4335 = vxpose.xlu0.b32.cont [3/16] %v4287, 128
      %4336 = vxpose.xlu0.b32.cont [4/16] %v4288, 128
      %4337 = vxpose.xlu0.b32.cont [5/16] %v4289, 128
      %4338 = vxpose.xlu0.b32.cont [6/16] %v4290, 128
      %4339 = vxpose.xlu0.b32.cont [7/16] %v4291, 128
      %4340 = vxpose.xlu0.b32.cont [8/16] %v4292, 128
      %4341 = vxpose.xlu0.b32.cont [9/16] %v4293, 128
      %4342 = vxpose.xlu0.b32.cont [10/16] %v4294, 128
      %4343 = vxpose.xlu0.b32.cont [11/16] %v4295, 128
      %4344 = vxpose.xlu0.b32.cont [12/16] %v4296, 128
      %4345 = vxpose.xlu0.b32.cont [13/16] %v4297, 128
      %4346 = vxpose.xlu0.b32.cont [14/16] %v4298, 128
      %4347 = vxpose.xlu0.b32.cont [15/16] %v4299, 128
      %4348 = vxpose.xlu0.b32.end [16/16] %v4300, 128
      %v4349 = vpop.trf.xlu0
      %v4350 = vpop.trf.xlu0
      %v4351 = vpop.trf.xlu0
      %v4352 = vpop.trf.xlu0
      %v4353 = vpop.trf.xlu0
      %v4354 = vpop.trf.xlu0
      %v4355 = vpop.trf.xlu0
      %v4356 = vpop.trf.xlu0
      %v4357 = vpop.trf.xlu0
      %v4358 = vpop.trf.xlu0
      %v4359 = vpop.trf.xlu0
      %v4360 = vpop.trf.xlu0
      %v4361 = vpop.trf.xlu0
      %v4362 = vpop.trf.xlu0
      %v4363 = vpop.trf.xlu0
      %v4364 = vpop.trf.xlu0
      %4365 = vst [vmem:[%s278] sm:$0xff] %v4317
      %4366 = vst [vmem:[%s278 + $0x8] sm:$0xff] %v4349
      %4367 = vst [vmem:[%s278 + $0x10] sm:$0xff] %v4318
      %4368 = vst [vmem:[%s278 + $0x18] sm:$0xff] %v4350
      %p4369 = scmp.lt.s32.totalorder %s18, 1
      %s4370 = scalar_select %p4369, %s18, 1
      %s4371 = smul.addr %s4370, 4
      %s4372 = smul.addr %s4371, 8
      %s4373 = scalar_lea.vmem %s7, %s4372
      // Predicated region
      $region49: #{residual_block_2d.1} parent=47 // pred_check
        %p4374 = pneg %p188
      $region50: #{residual_block_2d.1} parent=47 // pred_check_branch
        %4376 = sbr.rel (%p4374) target = $region52
      $region51: #{residual_block_2d.1} parent=47 // pred_region
        _
      $region52: #{residual_block_2d.1} parent=47 // pred_fallthru
        _
    $region48: #{residual_block_2d.1} parent=5 // pred_fallthru
      _
    %p4377 = scmp.le.s32.totalorder 2, %s13
    // Predicated region
    $region53: #{residual_block_2d.1} parent=5 // pred_check
      %p4378 = pneg %p4377
    $region54: #{residual_block_2d.1} parent=5 // pred_check_branch
      %4380 = sbr.rel (%p4378) target = $region56
    $region55: #{residual_block_2d.1} parent=5 // pred_region
      %s4381 = ssub.s32 %s13, 2
      // Predicated region
      $region57: #{residual_block_2d.1} parent=55 // pred_check
        %p4382 = pneg %p194
      $region58: #{residual_block_2d.1} parent=55 // pred_check_branch
        %4384 = sbr.rel (%p4382) target = $region60
      $region59: #{residual_block_2d.1} parent=55 // pred_region
        %p4385 = scmp.lt.s32.totalorder %s19, 1
        %s4386 = scalar_select %p4385, %s19, 1
        %s4387 = smul.addr %s4386, 4
        %s4388 = smul.addr %s4387, 8
        %s4389 = scalar_lea.vmem %s7, %s4388
      $region60: #{residual_block_2d.1} parent=55 // pred_fallthru
        _
    $region56: #{residual_block_2d.1} parent=5 // pred_fallthru
      _
  $region6: #{residual_block_2d.1} parent=0 // loop_footer
    %s17 = sadd.s32 1, %s13
  $region7: #{residual_block_2d.1} parent=0 // loop_footer_branch
    %12 = sbr.rel target = $region3
  $region8: #{residual_block_2d.1} parent=0 // loop_exit
    _

</llo_original>
